<compile_context>
chip_gen: v5e
topology: v5e:2x2
jax: 0.10.0
libtpu: 0.0.40
codegen_flags: <defaults>
</compile_context>

<pallas_src>
import functools
import math

import jax
import jax.numpy as jnp
from jax.experimental import pallas as pl
from jax.experimental.pallas import tpu as pltpu

# Set True on v7x (64 MiB VMEM) to single-buffer the (per-batch-element) grid-
# invariant resident image block and reclaim its second pipeline copy. The
# weight/bias blocks could get the same treatment when C_out fits one tile.
SINGLE_BUFFER_INVARIANT_INPUTS = False


def _round_up(x, m):
    return ((x + m - 1) // m) * m


def _tile_config():
    """Generation-aware tile / VMEM defaults (v5e: 128-wide MXU; v6e/v7x: 256)."""
    try:
        kind = jax.devices()[0].device_kind.lower()
    except Exception:
        kind = ""
    if any(t in kind for t in ("v2", "v3", "v4", "v5")):
        return dict(m_target=128, n_tile=128, vmem_limit=64 * 1024 * 1024)
    if "7" in kind:  # v7x: 64 MiB physical VMEM per TensorCore -> cap at 48 MiB
        return dict(m_target=256, n_tile=256, vmem_limit=48 * 1024 * 1024)
    return dict(m_target=256, n_tile=256, vmem_limit=64 * 1024 * 1024)  # v6e / default


def _conv_bn_relu_kernel(x_ref, w_ref, bias_ref, o_ref, *scratch, kh_size, kw_size,
                         stride, dilation, th, w_out, c_in, k_total, k_pad, relu,
                         use_im2col):
    """One grid step = (TH output rows) x (TN output channels) of one image.

    x_ref:    (1, H_pad, W_pad, C_in)   whole padded image (compute dtype, resident)
    w_ref:    (K_pad, TN)               im2col weight tile, BN scale pre-folded
    bias_ref: (1, TN) f32               folded BN bias
    o_ref:    (1, TH*W_out, TN)         lane-dense output block
    scratch:  (TH, W_out, K_pad)        im2col patch (small-C_in path only)
    """
    m = th * w_out
    base = pl.program_id(1) * (th * stride)  # first input row of this row block
    if (th * stride) % 8 == 0:
        base = pl.multiple_of(base, 8)

    def tap_slice(kh, kw):
        row0 = base + kh * dilation
        col0 = kw * dilation
        if stride == 1:
            return x_ref[0, pl.ds(row0, th), pl.ds(col0, w_out), :]
        # TODO(synk): stride>1 path uses strided ref slices; less exercised.
        return x_ref[0, pl.ds(row0, th, stride=stride),
                     pl.ds(col0, w_out, stride=stride), :]

    if use_im2col:
        patch_ref = scratch[0]

        # Gather only once per (batch, row-block); reused by every C_out tile
        # (the C_out grid axis is innermost and sequential/"arbitrary").
        @pl.when(pl.program_id(2) == 0)
        def _gather():
            if k_pad > k_total:
                # Keep the zero-padded K columns deterministic: the matching
                # weight rows are zero, but NaN garbage * 0 would still be NaN.
                patch_ref[:, :, k_total:] = jnp.zeros(
                    (th, w_out, k_pad - k_total), patch_ref.dtype)
            for kh in range(kh_size):
                for kw in range(kw_size):
                    k0 = (kh * kw_size + kw) * c_in
                    # Direct (TH, W_out, C_in) slab store: no per-tap relayout.
                    patch_ref[:, :, k0:k0 + c_in] = tap_slice(kh, kw)

        # Single MXU contraction over K_pad (multiple of 128 -> the merge
        # reshape below is a free sublane merge), f32 accumulation.
        acc = jnp.dot(patch_ref[...].reshape(m, k_pad), w_ref[...],
                      preferred_element_type=jnp.float32)
    else:
        # Large C_in (>=128): K = C_in already fills the MXU; accumulate per-tap
        # dots and skip the patch scratch (no extra VMEM write+read traffic).
        acc = jnp.zeros((m, w_ref.shape[1]), jnp.float32)
        for kh in range(kh_size):
            for kw in range(kw_size):
                k0 = (kh * kw_size + kw) * c_in
                piece = tap_slice(kh, kw).reshape(m, c_in)
                acc = acc + jnp.dot(piece, w_ref[k0:k0 + c_in, :],
                                    preferred_element_type=jnp.float32)

    # Fused BatchNorm (eval mode; scale already folded into w) + optional ReLU.
    y = acc + bias_ref[...]
    if relu:
        y = jnp.maximum(y, 0.0)
    o_ref[0, :, :] = y.astype(o_ref.dtype)


def basic_conv2d(x_nchw, weight_oihw, bn_scale, bn_bias, *, stride=1, padding=0,
                 dilation=1, relu=False, compute_dtype=jnp.bfloat16,
                 out_dtype=jnp.bfloat16):
    """Forward pass of BasicConv2d. Inputs/outputs follow PyTorch NCHW layout."""
    n, c_in, h, w = x_nchw.shape
    c_out, c_in_w, kh, kw = weight_oihw.shape
    assert c_in_w == c_in
    h_out = (h + 2 * padding - dilation * (kh - 1) - 1) // stride + 1
    w_out = (w + 2 * padding - dilation * (kw - 1) - 1) // stride + 1

    cfg = _tile_config()

    # Row-block tile: m = TH*W_out must be a multiple of 8 (output BlockSpec
    # sublane rule) and should sit near m_target to fill the MXU M dimension.
    th_step = 8 // math.gcd(w_out, 8)
    th = max(th_step, (cfg["m_target"] // w_out) // th_step * th_step)
    th = min(th, _round_up(h_out, th_step))
    m = th * w_out
    n_rb = pl.cdiv(h_out, th)
    hop = n_rb * th                                   # H_out padded to TH multiple

    c_out_p = _round_up(c_out, 128)                   # lane-dense padded C_out
    tn = min(c_out_p, cfg["n_tile"])
    n_cb = c_out_p // tn

    use_im2col = c_in < 128                           # stem layers -> im2col path
    k_total = kh * kw * c_in
    k_pad = _round_up(k_total, 128) if use_im2col else _round_up(k_total, 8)

    # ---- plain-JAX glue: layout, padding, BN folding, dtype casts ----
    # NOTE: in a chain of BasicConv2d layers keep activations NHWC / bf16 /
    # C_out-padded end-to-end and drop the transposes + slice below.
    x = jnp.transpose(x_nchw, (0, 2, 3, 1))                             # NHWC
    h_need = (hop - 1) * stride + (kh - 1) * dilation + 1               # rows read
    pad_h_extra = max(0, h_need - (h + 2 * padding))
    x = jnp.pad(x, ((0, 0), (padding, padding + pad_h_extra),
                    (padding, padding), (0, 0))).astype(compute_dtype)
    h_pad, w_pad = int(x.shape[1]), int(x.shape[2])

    # im2col weight (row index = (kh*KW + kw)*C_in + ci) with the eval-mode BN
    # scale folded in (f32) before the compute-dtype cast.
    w_mat = jnp.transpose(weight_oihw.astype(jnp.float32), (2, 3, 1, 0))
    w_mat = w_mat * bn_scale.astype(jnp.float32).reshape(1, 1, 1, c_out)
    w_mat = w_mat.reshape(k_total, c_out)
    w_mat = jnp.pad(w_mat, ((0, k_pad - k_total), (0, c_out_p - c_out)))
    w_mat = w_mat.astype(compute_dtype)
    bias = jnp.pad(bn_bias.astype(jnp.float32),
                   (0, c_out_p - c_out)).reshape(1, c_out_p)

    kernel = functools.partial(
        _conv_bn_relu_kernel, kh_size=kh, kw_size=kw, stride=stride,
        dilation=dilation, th=th, w_out=w_out, c_in=c_in, k_total=k_total,
        k_pad=k_pad, relu=relu, use_im2col=use_im2col)

    scratch_shapes = []
    if use_im2col:
        scratch_shapes.append(pltpu.VMEM((th, w_out, k_pad), compute_dtype))

    def _image_spec():
        shape = (1, h_pad, w_pad, c_in)
        index_map = lambda b, r, c: (b, 0, 0, 0)
        if SINGLE_BUFFER_INVARIANT_INPUTS:
            return pl.BlockSpec(shape, index_map, pipeline_mode=pl.Buffered(1))
        return pl.BlockSpec(shape, index_map)

    out = pl.pallas_call(
        kernel,
        out_shape=jax.ShapeDtypeStruct((n, hop * w_out, c_out_p), out_dtype),
        grid_spec=pltpu.PrefetchScalarGridSpec(
            num_scalar_prefetch=0,
            grid=(n, n_rb, n_cb),
            in_specs=[
                _image_spec(),                                       # resident image
                pl.BlockSpec((k_pad, tn), lambda b, r, c: (0, c)),   # weight tile
                pl.BlockSpec((1, tn), lambda b, r, c: (0, c)),       # folded BN bias
            ],
            # lane-dense output block: (TH*W_out, TN) with TN a multiple of 128
            out_specs=pl.BlockSpec((1, m, tn), lambda b, r, c: (b, r, c)),
            scratch_shapes=scratch_shapes,
        ),
        compiler_params=pltpu.CompilerParams(
            dimension_semantics=("parallel", "parallel", "arbitrary"),
            vmem_limit_bytes=cfg["vmem_limit"]),
    )(x, w_mat, bias)

    out = out.reshape(n, hop, w_out, c_out_p)[:, :h_out, :, :c_out]
    return jnp.transpose(out, (0, 3, 1, 2))                           # NCHW


def make_params(key, in_planes, out_planes, kernel_size, bn=True):
    """Deterministic parameter init (synthetic; no checkpoint loading)."""
    k_w, k_g, k_b, k_m, k_v = jax.random.split(key, 5)
    fan_in = in_planes * kernel_size * kernel_size
    weight = jax.random.normal(
        k_w, (out_planes, in_planes, kernel_size, kernel_size),
        jnp.float32) * (2.0 / fan_in) ** 0.5                           # OIHW
    if bn:
        eps = 1e-5
        gamma = jax.random.uniform(k_g, (out_planes,), jnp.float32, 0.5, 1.5)
        beta = jax.random.normal(k_b, (out_planes,), jnp.float32) * 0.1
        r_mean = jax.random.normal(k_m, (out_planes,), jnp.float32) * 0.1
        r_var = jax.random.uniform(k_v, (out_planes,), jnp.float32, 0.5, 1.5)
        bn_scale = gamma * jax.lax.rsqrt(r_var + eps)
        bn_bias = beta - r_mean * bn_scale
    else:
        bn_scale = jnp.ones((out_planes,), jnp.float32)
        bn_bias = jnp.zeros((out_planes,), jnp.float32)
    return weight, bn_scale, bn_bias


if __name__ == "__main__":
    # BasicConv2d(in_planes=4, out_planes=8, kernel_size=3, padding=1,
    #             relu=False, bn=True), eval mode.
    key = jax.random.PRNGKey(0)
    k_x, k_p = jax.random.split(key)

    N, C_IN, H, W = 2, 4, 16, 16
    C_OUT, K, STRIDE, PAD, DIL, RELU = 8, 3, 1, 1, 1, False

    x = jax.random.normal(k_x, (N, C_IN, H, W), jnp.float32)
    weight, bn_scale, bn_bias = make_params(k_p, C_IN, C_OUT, K, bn=True)

    y = basic_conv2d(x, weight, bn_scale, bn_bias,
                     stride=STRIDE, padding=PAD, dilation=DIL, relu=RELU)
    y = jax.block_until_ready(y).astype(jnp.float32)

    # Reference: XLA conv with the SAME folded bf16 weight + f32 accumulation
    # and the same eval-mode BN bias, so only sum-order differences and the
    # kernel's final bf16 output rounding remain.
    w_folded = (weight * bn_scale.reshape(C_OUT, 1, 1, 1)).astype(jnp.bfloat16)
    y_ref = jax.lax.conv_general_dilated(
        x.astype(jnp.bfloat16), w_folded,
        window_strides=(STRIDE, STRIDE), padding=[(PAD, PAD), (PAD, PAD)],
        rhs_dilation=(DIL, DIL), dimension_numbers=("NCHW", "OIHW", "NCHW"),
        preferred_element_type=jnp.float32)
    y_ref = y_ref + bn_bias.reshape(1, C_OUT, 1, 1)
    if RELU:
        y_ref = jnp.maximum(y_ref, 0.0)

    assert y.shape == (N, C_OUT, H, W)
    max_err = float(jnp.max(jnp.abs(y - y_ref)))
    # Kernel output is bf16 (per perf review) -> allow ~1 bf16 ulp at |y|~O(5).
    assert max_err < 5e-2, max_err

    print("KERNEL_OK")
</pallas_src>

<mosaic_0001>
module attributes {stable_mosaic.version = 11 : i64} {
  func.func @_conv_bn_relu_kernel(%arg0: i32, %arg1: i32, %arg2: i32, %arg3: memref<1x18x18x4xbf16, #tpu.memory_space<vmem>>, %arg4: memref<128x128xbf16, #tpu.memory_space<vmem>>, %arg5: memref<1x128xf32, #tpu.memory_space<vmem>>, %arg6: memref<1x256x128xbf16, #tpu.memory_space<vmem>>, %arg7: memref<16x16x128xbf16, #tpu.memory_space<vmem>>) attributes {dimension_semantics = [#tpu.dimension_semantics<parallel>, #tpu.dimension_semantics<parallel>, #tpu.dimension_semantics<arbitrary>], iteration_bounds = array<i64: 2, 1, 1>, scalar_prefetch = 0 : i64, scratch_operands = 1 : i64, tpu.core_type = #tpu.core_type<tc>, window_params = [{transform_indices = @transform_0, window_bounds = array<i64: 1, 18, 18, 4>}, {transform_indices = @transform_1, window_bounds = array<i64: 128, 128>}, {transform_indices = @transform_2, window_bounds = array<i64: 1, 128>}, {transform_indices = @transform_3, window_bounds = array<i64: 1, 256, 128>}]} {
    %c16_i32 = arith.constant 16 : i32
    %0 = arith.muli %arg1, %c16_i32 : i32
    %1 = tpu.assume_multiple %0, 8 : i32
    %c0_i32 = arith.constant 0 : i32
    %2 = arith.cmpi eq, %arg2, %c0_i32 : i32
    %3 = arith.extui %2 : i1 to i32
    %c0_i32_0 = arith.constant 0 : i32
    %4 = arith.cmpi ne, %3, %c0_i32_0 : i32
    scf.if %4 {
      %cst_10 = arith.constant 0.000000e+00 : bf16
      %16 = vector.broadcast %cst_10 : bf16 to vector<16x16x92xbf16>
      %c0_11 = arith.constant 0 : index
      %c0_12 = arith.constant 0 : index
      %c36 = arith.constant 36 : index
      %17 = vector.load %arg7[%c0_11, %c0_12, %c36] : memref<16x16x128xbf16, #tpu.memory_space<vmem>>, vector<16x16x92xbf16>
      tpu.vector_store %arg7[%c0_11, %c0_12, %c36], %16 {strides = array<i32>} : memref<16x16x128xbf16, #tpu.memory_space<vmem>>, vector<16x16x92xbf16>,
      %c0_i32_13 = arith.constant 0 : i32
      %18 = arith.addi %1, %c0_i32_13 : i32
      %c0_14 = arith.constant 0 : index
      %19 = arith.index_cast %18 : i32 to index
      %c0_15 = arith.constant 0 : index
      %c0_16 = arith.constant 0 : index
      %20 = vector.load %arg3[%c0_14, %19, %c0_15, %c0_16] : memref<1x18x18x4xbf16, #tpu.memory_space<vmem>>, vector<1x16x16x4xbf16>
      %21 = vector.shape_cast %20 : vector<1x16x16x4xbf16> to vector<16x16x4xbf16>
      %c0_17 = arith.constant 0 : index
      %c0_18 = arith.constant 0 : index
      %c0_19 = arith.constant 0 : index
      %22 = vector.load %arg7[%c0_17, %c0_18, %c0_19] : memref<16x16x128xbf16, #tpu.memory_space<vmem>>, vector<16x16x4xbf16>
      tpu.vector_store %arg7[%c0_17, %c0_18, %c0_19], %21 {strides = array<i32>} : memref<16x16x128xbf16, #tpu.memory_space<vmem>>, vector<16x16x4xbf16>,
      %c0_i32_20 = arith.constant 0 : i32
      %23 = arith.addi %1, %c0_i32_20 : i32
      %c0_21 = arith.constant 0 : index
      %24 = arith.index_cast %23 : i32 to index
      %c1 = arith.constant 1 : index
      %c0_22 = arith.constant 0 : index
      %25 = vector.load %arg3[%c0_21, %24, %c1, %c0_22] : memref<1x18x18x4xbf16, #tpu.memory_space<vmem>>, vector<1x16x16x4xbf16>
      %26 = vector.shape_cast %25 : vector<1x16x16x4xbf16> to vector<16x16x4xbf16>
      %c0_23 = arith.constant 0 : index
      %c0_24 = arith.constant 0 : index
      %c4 = arith.constant 4 : index
      %27 = vector.load %arg7[%c0_23, %c0_24, %c4] : memref<16x16x128xbf16, #tpu.memory_space<vmem>>, vector<16x16x4xbf16>
      tpu.vector_store %arg7[%c0_23, %c0_24, %c4], %26 {strides = array<i32>} : memref<16x16x128xbf16, #tpu.memory_space<vmem>>, vector<16x16x4xbf16>,
      %c0_i32_25 = arith.constant 0 : i32
      %28 = arith.addi %1, %c0_i32_25 : i32
      %c0_26 = arith.constant 0 : index
      %29 = arith.index_cast %28 : i32 to index
      %c2 = arith.constant 2 : index
      %c0_27 = arith.constant 0 : index
      %30 = vector.load %arg3[%c0_26, %29, %c2, %c0_27] : memref<1x18x18x4xbf16, #tpu.memory_space<vmem>>, vector<1x16x16x4xbf16>
      %31 = vector.shape_cast %30 : vector<1x16x16x4xbf16> to vector<16x16x4xbf16>
      %c0_28 = arith.constant 0 : index
      %c0_29 = arith.constant 0 : index
      %c8 = arith.constant 8 : index
      %32 = vector.load %arg7[%c0_28, %c0_29, %c8] : memref<16x16x128xbf16, #tpu.memory_space<vmem>>, vector<16x16x4xbf16>
      tpu.vector_store %arg7[%c0_28, %c0_29, %c8], %31 {strides = array<i32>} : memref<16x16x128xbf16, #tpu.memory_space<vmem>>, vector<16x16x4xbf16>,
      %c1_i32 = arith.constant 1 : i32
      %33 = arith.addi %1, %c1_i32 : i32
      %c0_30 = arith.constant 0 : index
      %34 = arith.index_cast %33 : i32 to index
      %c0_31 = arith.constant 0 : index
      %c0_32 = arith.constant 0 : index
      %35 = vector.load %arg3[%c0_30, %34, %c0_31, %c0_32] : memref<1x18x18x4xbf16, #tpu.memory_space<vmem>>, vector<1x16x16x4xbf16>
      %36 = vector.shape_cast %35 : vector<1x16x16x4xbf16> to vector<16x16x4xbf16>
      %c0_33 = arith.constant 0 : index
      %c0_34 = arith.constant 0 : index
      %c12 = arith.constant 12 : index
      %37 = vector.load %arg7[%c0_33, %c0_34, %c12] : memref<16x16x128xbf16, #tpu.memory_space<vmem>>, vector<16x16x4xbf16>
      tpu.vector_store %arg7[%c0_33, %c0_34, %c12], %36 {strides = array<i32>} : memref<16x16x128xbf16, #tpu.memory_space<vmem>>, vector<16x16x4xbf16>,
      %c1_i32_35 = arith.constant 1 : i32
      %38 = arith.addi %1, %c1_i32_35 : i32
      %c0_36 = arith.constant 0 : index
      %39 = arith.index_cast %38 : i32 to index
      %c1_37 = arith.constant 1 : index
      %c0_38 = arith.constant 0 : index
      %40 = vector.load %arg3[%c0_36, %39, %c1_37, %c0_38] : memref<1x18x18x4xbf16, #tpu.memory_space<vmem>>, vector<1x16x16x4xbf16>
      %41 = vector.shape_cast %40 : vector<1x16x16x4xbf16> to vector<16x16x4xbf16>
      %c0_39 = arith.constant 0 : index
      %c0_40 = arith.constant 0 : index
      %c16 = arith.constant 16 : index
      %42 = vector.load %arg7[%c0_39, %c0_40, %c16] : memref<16x16x128xbf16, #tpu.memory_space<vmem>>, vector<16x16x4xbf16>
      tpu.vector_store %arg7[%c0_39, %c0_40, %c16], %41 {strides = array<i32>} : memref<16x16x128xbf16, #tpu.memory_space<vmem>>, vector<16x16x4xbf16>,
      %c1_i32_41 = arith.constant 1 : i32
      %43 = arith.addi %1, %c1_i32_41 : i32
      %c0_42 = arith.constant 0 : index
      %44 = arith.index_cast %43 : i32 to index
      %c2_43 = arith.constant 2 : index
      %c0_44 = arith.constant 0 : index
      %45 = vector.load %arg3[%c0_42, %44, %c2_43, %c0_44] : memref<1x18x18x4xbf16, #tpu.memory_space<vmem>>, vector<1x16x16x4xbf16>
      %46 = vector.shape_cast %45 : vector<1x16x16x4xbf16> to vector<16x16x4xbf16>
      %c0_45 = arith.constant 0 : index
      %c0_46 = arith.constant 0 : index
      %c20 = arith.constant 20 : index
      %47 = vector.load %arg7[%c0_45, %c0_46, %c20] : memref<16x16x128xbf16, #tpu.memory_space<vmem>>, vector<16x16x4xbf16>
      tpu.vector_store %arg7[%c0_45, %c0_46, %c20], %46 {strides = array<i32>} : memref<16x16x128xbf16, #tpu.memory_space<vmem>>, vector<16x16x4xbf16>,
      %c2_i32 = arith.constant 2 : i32
      %48 = arith.addi %1, %c2_i32 : i32
      %c0_47 = arith.constant 0 : index
      %49 = arith.index_cast %48 : i32 to index
      %c0_48 = arith.constant 0 : index
      %c0_49 = arith.constant 0 : index
      %50 = vector.load %arg3[%c0_47, %49, %c0_48, %c0_49] : memref<1x18x18x4xbf16, #tpu.memory_space<vmem>>, vector<1x16x16x4xbf16>
      %51 = vector.shape_cast %50 : vector<1x16x16x4xbf16> to vector<16x16x4xbf16>
      %c0_50 = arith.constant 0 : index
      %c0_51 = arith.constant 0 : index
      %c24 = arith.constant 24 : index
      %52 = vector.load %arg7[%c0_50, %c0_51, %c24] : memref<16x16x128xbf16, #tpu.memory_space<vmem>>, vector<16x16x4xbf16>
      tpu.vector_store %arg7[%c0_50, %c0_51, %c24], %51 {strides = array<i32>} : memref<16x16x128xbf16, #tpu.memory_space<vmem>>, vector<16x16x4xbf16>,
      %c2_i32_52 = arith.constant 2 : i32
      %53 = arith.addi %1, %c2_i32_52 : i32
      %c0_53 = arith.constant 0 : index
      %54 = arith.index_cast %53 : i32 to index
      %c1_54 = arith.constant 1 : index
      %c0_55 = arith.constant 0 : index
      %55 = vector.load %arg3[%c0_53, %54, %c1_54, %c0_55] : memref<1x18x18x4xbf16, #tpu.memory_space<vmem>>, vector<1x16x16x4xbf16>
      %56 = vector.shape_cast %55 : vector<1x16x16x4xbf16> to vector<16x16x4xbf16>
      %c0_56 = arith.constant 0 : index
      %c0_57 = arith.constant 0 : index
      %c28 = arith.constant 28 : index
      %57 = vector.load %arg7[%c0_56, %c0_57, %c28] : memref<16x16x128xbf16, #tpu.memory_space<vmem>>, vector<16x16x4xbf16>
      tpu.vector_store %arg7[%c0_56, %c0_57, %c28], %56 {strides = array<i32>} : memref<16x16x128xbf16, #tpu.memory_space<vmem>>, vector<16x16x4xbf16>,
      %c2_i32_58 = arith.constant 2 : i32
      %58 = arith.addi %1, %c2_i32_58 : i32
      %c0_59 = arith.constant 0 : index
      %59 = arith.index_cast %58 : i32 to index
      %c2_60 = arith.constant 2 : index
      %c0_61 = arith.constant 0 : index
      %60 = vector.load %arg3[%c0_59, %59, %c2_60, %c0_61] : memref<1x18x18x4xbf16, #tpu.memory_space<vmem>>, vector<1x16x16x4xbf16>
      %61 = vector.shape_cast %60 : vector<1x16x16x4xbf16> to vector<16x16x4xbf16>
      %c0_62 = arith.constant 0 : index
      %c0_63 = arith.constant 0 : index
      %c32 = arith.constant 32 : index
      %62 = vector.load %arg7[%c0_62, %c0_63, %c32] : memref<16x16x128xbf16, #tpu.memory_space<vmem>>, vector<16x16x4xbf16>
      tpu.vector_store %arg7[%c0_62, %c0_63, %c32], %61 {strides = array<i32>} : memref<16x16x128xbf16, #tpu.memory_space<vmem>>, vector<16x16x4xbf16>,
    } else {
    }
    %c0 = arith.constant 0 : index
    %c0_1 = arith.constant 0 : index
    %c0_2 = arith.constant 0 : index
    %5 = vector.load %arg7[%c0, %c0_1, %c0_2] : memref<16x16x128xbf16, #tpu.memory_space<vmem>>, vector<16x16x128xbf16>
    %6 = vector.shape_cast %5 : vector<16x16x128xbf16> to vector<256x128xbf16>
    %c0_3 = arith.constant 0 : index
    %c0_4 = arith.constant 0 : index
    %7 = vector.load %arg4[%c0_3, %c0_4] : memref<128x128xbf16, #tpu.memory_space<vmem>>, vector<128x128xbf16>
    %cst = arith.constant dense<0.000000e+00> : vector<256x128xf32>
    %8 = tpu.matmul %6, %7, %cst {dimension_numbers = #tpu.dot_dimension_numbers<[1], [0], [0], [1], [0, 0, 1, 1], [], []>} : vector<256x128xbf16>, vector<128x128xbf16>, vector<256x128xf32> -> vector<256x128xf32>
    %c0_5 = arith.constant 0 : index
    %c0_6 = arith.constant 0 : index
    %9 = vector.load %arg5[%c0_5, %c0_6] : memref<1x128xf32, #tpu.memory_space<vmem>>, vector<1x128xf32>
    %10 = vector.broadcast %9 : vector<1x128xf32> to vector<256x128xf32>
    %11 = arith.addf %8, %10 : vector<256x128xf32>
    %12 = arith.truncf %11 : vector<256x128xf32> to vector<256x128xbf16>
    %c0_7 = arith.constant 0 : index
    %c0_8 = arith.constant 0 : index
    %c0_9 = arith.constant 0 : index
    %13 = vector.load %arg6[%c0_7, %c0_8, %c0_9] : memref<1x256x128xbf16, #tpu.memory_space<vmem>>, vector<1x256x128xbf16>
    %14 = vector.shape_cast %13 : vector<1x256x128xbf16> to vector<256x128xbf16>
    %15 = vector.shape_cast %12 : vector<256x128xbf16> to vector<1x256x128xbf16>
    tpu.vector_store %arg6[%c0_7, %c0_8, %c0_9], %15 {strides = array<i32>} : memref<1x256x128xbf16, #tpu.memory_space<vmem>>, vector<1x256x128xbf16>,
    return
  }
  func.func @transform_0(%arg0: i32, %arg1: i32, %arg2: i32) -> (i32, i32, i32, i32) {
    %c0_i32 = arith.constant 0 : i32
    %c0_i32_0 = arith.constant 0 : i32
    %c0_i32_1 = arith.constant 0 : i32
    %c0_i32_2 = arith.constant 0 : i32
    return %arg0, %c0_i32, %c0_i32_0, %c0_i32_1 : i32, i32, i32, i32
  }
  func.func @transform_1(%arg0: i32, %arg1: i32, %arg2: i32) -> (i32, i32) {
    %c0_i32 = arith.constant 0 : i32
    %c0_i32_0 = arith.constant 0 : i32
    return %c0_i32, %arg2 : i32, i32
  }
  func.func @transform_2(%arg0: i32, %arg1: i32, %arg2: i32) -> (i32, i32) {
    %c0_i32 = arith.constant 0 : i32
    %c0_i32_0 = arith.constant 0 : i32
    return %c0_i32, %arg2 : i32, i32
  }
  func.func @transform_3(%arg0: i32, %arg1: i32, %arg2: i32) -> (i32, i32, i32) {
    %c0_i32 = arith.constant 0 : i32
    return %arg0, %arg1, %arg2 : i32, i32, i32
  }
}

</mosaic_0001>

<llo_original>
// kernel: tpu_custom_call.1
$region0: #{tpu_custom_call.1}
  #allocation0 [shape = 'u32[]', space=smem, size = 0x4, offset = 0x4, fixed_abs, tag = 'smem constant byte address 0x4 - core index']
  #allocation1 [shape = 'u32[72,128]{1,0:T(1,128)}', space=vmem, size = 0x9000, scoped, tag = 'internal scratch']
  #allocation2 [shape = 'bf16[16,16,128]{2,1,0:T(8,128)(2,1)}', space=vmem, size = 0x10000, scoped, tag = 'scratch operand']
  %s0 = inlined_call_operand.vmem [shape: bf16[2,18,18,4], index: 0, kind: input, shape index: {}]
  %s1 = inlined_call_operand.vmem [shape: bf16[128,128], index: 1, kind: input, shape index: {}]
  %s2 = inlined_call_operand.vmem [shape: f32[1,128], index: 2, kind: input, shape index: {}]
  %s3 = inlined_call_operand.hbm [shape: bf16[2,256,128], index: 3, kind: output, shape index: {}]
  %s4 = sld [smem:[#allocation0]]
  $region49: #{tpu_custom_call.1} parent=0
    _
  %s6 = ssub.s32 1, %s4
  %s7 = scalar_select 0, %s6, %s4
  $region1: #{tpu_custom_call.1} parent=0
    #allocation3 [shape = 'u8[131072]{0}', space=vmem, size = 0x20000, scoped, tag = 'output window, operand 0']
    #allocation4 [shape = 's32[2]{0}', space=sflag, size = 0x8, scoped, tag = 'scoped memory for tpu_custom_call.1']
    %8 = vsyncpa [#allocation4], 0
    %s9 = scalar_lea.sflag [#allocation4], 1
    %10 = vsyncpa %s9, 0
    loop: start=0, step=1, limit=4
    $region2: #{tpu_custom_call.1} parent=1 // loop_pre_header
      _
    $region3: #{tpu_custom_call.1} parent=1 // loop_header
      %s12 = sphi 0, %s16
      %p13 = scmp.ge.s32.totalorder %s12, 4
      %s19 = sphi 0, %s38
      %s20 = sphi 0, %s34
      %s21 = sphi 0, %s30
      %s22 = sphi 0, %s19
      %s23 = sphi 0, %s20
      %s24 = sphi 0, %s21
      %s25 = sphi 0, %s22
      %s26 = sphi 0, %s23
      %s27 = sphi 0, %s24
      %s41 = sphi 0, %s43
      %s44 = sphi 0, %s41
      %s45 = sphi 0, %s44
      %s61 = sphi 0, %s45
      %s67 = sphi 0, %s69
      %s70 = sphi 0, %s67
      %s71 = sphi 0, %s70
      %s87 = sphi 0, %s71
      %s93 = sphi 0, %s95
      %s96 = sphi 0, %s93
      %s97 = sphi 0, %s96
      %s113 = sphi 0, %s97
      %s123 = sphi 0, %s125
      %s126 = sphi 0, %s123
      %s127 = sphi 0, %s126
      %s143 = sphi 0, %s127
    $region4: #{tpu_custom_call.1} parent=1 // loop_header_branch
      %15 = sbr.rel (%p13) target = $region8
    $region5: #{tpu_custom_call.1} parent=1 // loop_body
      %s17 = ssub.s32 %s12, 1
      %s18 = ssub.s32 %s12, 2
      %s28 = sadd.s32 1, %s21
      %p29 = scmp.ge.s32.totalorder %s28, 1
      %s30 = scalar_select %p29, 0, %s28
      %s31 = sadd.s32 1, %s20
      %s32 = scalar_select %p29, %s31, %s20
      %p33 = scmp.ge.s32.totalorder %s32, 1
      %s34 = scalar_select %p33, 0, %s32
      %s35 = sadd.s32 1, %s19
      %s36 = scalar_select %p33, %s35, %s19
      %p37 = scmp.ge.s32.totalorder %s36, 2
      %s38 = scalar_select %p37, 0, %s36
      %s39 = ssub.s32 %s19, %s38
      %p40 = scmp.eq.s32.totalorder %s39, 0
      %s42 = sadd.s32 %s41, 1
      %s43 = scalar_select %p40, %s41, %s42
      %p46 = pneg %p40
      %p47 = scmp.eq.s32.totalorder %s12, 1
      %p48 = por %p46, %p47
      %p49 = scmp.ne.s32.totalorder %s41, %s44
      %p50 = scmp.eq.s32.totalorder %s12, 0
      %p51 = por %p49, %p50
      %p52 = scmp.ne.s32.totalorder %s41, %s44
      %p53 = scmp.eq.s32.totalorder %s17, 1
      %p54 = por %p52, %p53
      %p55 = scmp.ne.s32.totalorder %s44, %s45
      %p56 = scmp.eq.s32.totalorder %s17, 0
      %p57 = por %p55, %p56
      %p58 = scmp.ne.s32.totalorder %s44, %s45
      %p59 = scmp.eq.s32.totalorder %s18, 1
      %p60 = por %p58, %p59
      %p62 = scmp.ne.s32.totalorder %s45, %s61
      %p63 = scmp.eq.s32.totalorder %s18, 0
      %p64 = por %p62, %p63
      %s65 = ssub.s32 %s21, %s30
      %p66 = scmp.eq.s32.totalorder %s65, 0
      %s68 = sadd.s32 %s67, 1
      %s69 = scalar_select %p66, %s67, %s68
      %p72 = pneg %p66
      %p73 = scmp.eq.s32.totalorder %s12, 1
      %p74 = por %p72, %p73
      %p75 = scmp.ne.s32.totalorder %s67, %s70
      %p76 = scmp.eq.s32.totalorder %s12, 0
      %p77 = por %p75, %p76
      %p78 = scmp.ne.s32.totalorder %s67, %s70
      %p79 = scmp.eq.s32.totalorder %s17, 1
      %p80 = por %p78, %p79
      %p81 = scmp.ne.s32.totalorder %s70, %s71
      %p82 = scmp.eq.s32.totalorder %s17, 0
      %p83 = por %p81, %p82
      %p84 = scmp.ne.s32.totalorder %s70, %s71
      %p85 = scmp.eq.s32.totalorder %s18, 1
      %p86 = por %p84, %p85
      %p88 = scmp.ne.s32.totalorder %s71, %s87
      %p89 = scmp.eq.s32.totalorder %s18, 0
      %p90 = por %p88, %p89
      %s91 = ssub.s32 %s21, %s30
      %p92 = scmp.eq.s32.totalorder %s91, 0
      %s94 = sadd.s32 %s93, 1
      %s95 = scalar_select %p92, %s93, %s94
      %p98 = pneg %p92
      %p99 = scmp.eq.s32.totalorder %s12, 1
      %p100 = por %p98, %p99
      %p101 = scmp.ne.s32.totalorder %s93, %s96
      %p102 = scmp.eq.s32.totalorder %s12, 0
      %p103 = por %p101, %p102
      %p104 = scmp.ne.s32.totalorder %s93, %s96
      %p105 = scmp.eq.s32.totalorder %s17, 1
      %p106 = por %p104, %p105
      %p107 = scmp.ne.s32.totalorder %s96, %s97
      %p108 = scmp.eq.s32.totalorder %s17, 0
      %p109 = por %p107, %p108
      %p110 = scmp.ne.s32.totalorder %s96, %s97
      %p111 = scmp.eq.s32.totalorder %s18, 1
      %p112 = por %p110, %p111
      %p114 = scmp.ne.s32.totalorder %s97, %s113
      %p115 = scmp.eq.s32.totalorder %s18, 0
      %p116 = por %p114, %p115
      %s117 = ssub.s32 %s19, %s38
      %s118 = ssub.s32 %s20, %s34
      %s119 = sor.u32 %s117, %s118
      %s120 = ssub.s32 %s21, %s30
      %s121 = sor.u32 %s119, %s120
      %p122 = scmp.eq.s32.totalorder %s121, 0
      %s124 = sadd.s32 %s123, 1
      %s125 = scalar_select %p122, %s123, %s124
      %p128 = pneg %p122
      %p129 = scmp.eq.s32.totalorder %s12, 1
      %p130 = por %p128, %p129
      %p131 = scmp.ne.s32.totalorder %s123, %s126
      %p132 = scmp.eq.s32.totalorder %s12, 0
      %p133 = por %p131, %p132
      %p134 = scmp.ne.s32.totalorder %s123, %s126
      %p135 = scmp.eq.s32.totalorder %s17, 1
      %p136 = por %p134, %p135
      %p137 = scmp.ne.s32.totalorder %s126, %s127
      %p138 = scmp.eq.s32.totalorder %s17, 0
      %p139 = por %p137, %p138
      %p140 = scmp.ne.s32.totalorder %s126, %s127
      %p141 = scmp.eq.s32.totalorder %s18, 1
      %p142 = por %p140, %p141
      %p144 = scmp.ne.s32.totalorder %s127, %s143
      %p145 = scmp.eq.s32.totalorder %s18, 0
      %p146 = por %p144, %p145
      %p147 = scmp.le.s32.totalorder 1, %s12
      %p148 = scmp.lt.s32.totalorder %s12, 3
      %p149 = pnand %p147, %p148
      %p150 = pneg %p149
      // Predicated region
      $region9: #{tpu_custom_call.1} parent=5 // pred_check
        _
      $region10: #{tpu_custom_call.1} parent=5 // pred_check_branch
        %152 = sbr.rel (%p149) target = $region12
      $region11: #{tpu_custom_call.1} parent=5 // pred_region
        %s153 = ssub.s32 %s12, 1
        // Predicated region
        $region13: #{tpu_custom_call.1} parent=11 // pred_check
          %p154 = pneg %p83
        $region14: #{tpu_custom_call.1} parent=11 // pred_check_branch
          %156 = sbr.rel (%p154) target = $region16
        $region15: #{tpu_custom_call.1} parent=11 // pred_region
          %p157 = scmp.lt.s32.totalorder %s24, 0
          %s158 = scalar_select %p157, %s24, 0
          %s159 = smul.addr %s158, 4
          %s160 = scalar_lea.vmem %s1, %s159
        $region16: #{tpu_custom_call.1} parent=11 // pred_fallthru
          _
        // Predicated region
        $region17: #{tpu_custom_call.1} parent=11 // pred_check
          %p161 = pneg %p109
        $region18: #{tpu_custom_call.1} parent=11 // pred_check_branch
          %163 = sbr.rel (%p161) target = $region20
        $region19: #{tpu_custom_call.1} parent=11 // pred_region
          %p164 = scmp.lt.s32.totalorder %s24, 0
          %s165 = scalar_select %p164, %s24, 0
          %s166 = scalar_lea.vmem %s2, %s165
        $region20: #{tpu_custom_call.1} parent=11 // pred_fallthru
          _
      $region12: #{tpu_custom_call.1} parent=5 // pred_fallthru
        _
      %p167 = scmp.lt.s32.totalorder %s12, 2
      // Predicated region
      $region21: #{tpu_custom_call.1} parent=5 // pred_check
        %p168 = pneg %p167
      $region22: #{tpu_custom_call.1} parent=5 // pred_check_branch
        %170 = sbr.rel (%p168) target = $region24
      $region23: #{tpu_custom_call.1} parent=5 // pred_region
        // Predicated region
        $region25: #{tpu_custom_call.1} parent=23 // pred_check
          %p171 = pneg %p51
        $region26: #{tpu_custom_call.1} parent=23 // pred_check_branch
          %173 = sbr.rel (%p171) target = $region28
        $region27: #{tpu_custom_call.1} parent=23 // pred_region
          %p174 = scmp.lt.s32.totalorder %s19, 1
          %s175 = scalar_select %p174, %s19, 1
          %s176 = smul.addr %s175, 54
          %s177 = smul.addr %s176, 4
          %s178 = scalar_lea.vmem %s0, %s177
        $region28: #{tpu_custom_call.1} parent=23 // pred_fallthru
          _
      $region24: #{tpu_custom_call.1} parent=5 // pred_fallthru
        _
      %p179 = scmp.le.s32.totalorder 1, %s12
      %p180 = scmp.lt.s32.totalorder %s12, 3
      %p181 = pnand %p179, %p180
      %p182 = pneg %p181
      // Predicated region
      $region29: #{tpu_custom_call.1} parent=5 // pred_check
        _
      $region30: #{tpu_custom_call.1} parent=5 // pred_check_branch
        %184 = sbr.rel (%p181) target = $region32
      $region31: #{tpu_custom_call.1} parent=5 // pred_region
        %s185 = ssub.s32 %s12, 1
        %p186 = scmp.lt.s32.totalorder %s22, 1
        %s187 = scalar_select %p186, %s22, 1
        %s188 = smul.addr %s187, 54
        %s189 = smul.addr %s188, 4
        %s190 = scalar_lea.vmem %s0, %s189
        %p191 = pneg %p57
        %p192 = pneg %p54
        %p193 = scmp.lt.s32.totalorder %s24, 0
        %s194 = scalar_select %p193, %s24, 0
        %s195 = smul.addr %s194, 4
        %s196 = scalar_lea.vmem %s1, %s195
        %p197 = pneg %p83
        %p198 = pneg %p80
        %p199 = scmp.lt.s32.totalorder %s24, 0
        %s200 = scalar_select %p199, %s24, 0
        %s201 = scalar_lea.vmem %s2, %s200
        %p202 = pneg %p109
        %p203 = pneg %p106
        %p204 = pneg %p139
        %p205 = pneg %p136
        %s206 = sand.u32 %s126, 1
        %s207 = scalar_lea.sflag [#allocation4], %s206
        %s208 = sand.u32 %s126, 1
        %s209 = smul.addr %s208, 128
        %s210 = scalar_lea.vmem [#allocation3], %s209
        %p211 = scmp.lt.s32.totalorder %s22, 1
        %s212 = scalar_select %p211, %s22, 1
        %s213 = smul.addr %s212, 54
        %s214 = smul.addr %s213, 4
        %s215 = scalar_lea.vmem %s0, %s214
        %p216 = scmp.lt.s32.totalorder %s24, 0
        %s217 = scalar_select %p216, %s24, 0
        %s218 = smul.addr %s217, 4
        %s219 = scalar_lea.vmem %s1, %s218
        %p220 = scmp.lt.s32.totalorder %s24, 0
        %s221 = scalar_select %p220, %s24, 0
        %s222 = scalar_lea.vmem %s2, %s221
        %s223 = smul.u32 32, %s23
        %s225 = smul.u32 %s23, 16
        %p226 = scmp.eq.s32.totalorder %s24, 0
        // Predicated region
        $region33: #{tpu_custom_call.1} parent=31 // pred_check
          %p227 = pneg %p226
        $region34: #{tpu_custom_call.1} parent=31 // pred_check_branch
          %229 = sbr.rel (%p227) target = $region36
        $region35: #{tpu_custom_call.1} parent=31 // pred_region
          %vm230 = vcmask 1043744
          %231 = vst.msk [vmem:[#allocation2] sm:$0xf] %vm230, 0
          %232 = vst.msk [vmem:[#allocation2 + $0x4] sm:$0xf] %vm230, 0
          %233 = vst.msk [vmem:[#allocation2 + $0x8] sm:$0xf] %vm230, 0
          %234 = vst.msk [vmem:[#allocation2 + $0xc] sm:$0xf] %vm230, 0
          %235 = vst.msk [vmem:[#allocation2 + $0x10] sm:$0xf] %vm230, 0
          %236 = vst.msk [vmem:[#allocation2 + $0x14] sm:$0xf] %vm230, 0
          %237 = vst.msk [vmem:[#allocation2 + $0x18] sm:$0xf] %vm230, 0
          %238 = vst.msk [vmem:[#allocation2 + $0x1c] sm:$0xf] %vm230, 0
          %239 = vst.msk [vmem:[#allocation2 + $0x20] sm:$0xf] %vm230, 0
          %240 = vst.msk [vmem:[#allocation2 + $0x24] sm:$0xf] %vm230, 0
          %241 = vst.msk [vmem:[#allocation2 + $0x28] sm:$0xf] %vm230, 0
          %242 = vst.msk [vmem:[#allocation2 + $0x2c] sm:$0xf] %vm230, 0
          %243 = vst.msk [vmem:[#allocation2 + $0x30] sm:$0xf] %vm230, 0
          %244 = vst.msk [vmem:[#allocation2 + $0x34] sm:$0xf] %vm230, 0
          %245 = vst.msk [vmem:[#allocation2 + $0x38] sm:$0xf] %vm230, 0
          %246 = vst.msk [vmem:[#allocation2 + $0x3c] sm:$0xf] %vm230, 0
          %247 = vst.msk [vmem:[#allocation2 + $0x40] sm:$0xf] %vm230, 0
          %248 = vst.msk [vmem:[#allocation2 + $0x44] sm:$0xf] %vm230, 0
          %249 = vst.msk [vmem:[#allocation2 + $0x48] sm:$0xf] %vm230, 0
          %250 = vst.msk [vmem:[#allocation2 + $0x4c] sm:$0xf] %vm230, 0
          %251 = vst.msk [vmem:[#allocation2 + $0x50] sm:$0xf] %vm230, 0
          %252 = vst.msk [vmem:[#allocation2 + $0x54] sm:$0xf] %vm230, 0
          %253 = vst.msk [vmem:[#allocation2 + $0x58] sm:$0xf] %vm230, 0
          %254 = vst.msk [vmem:[#allocation2 + $0x5c] sm:$0xf] %vm230, 0
          %255 = vst.msk [vmem:[#allocation2 + $0x60] sm:$0xf] %vm230, 0
          %256 = vst.msk [vmem:[#allocation2 + $0x64] sm:$0xf] %vm230, 0
          %257 = vst.msk [vmem:[#allocation2 + $0x68] sm:$0xf] %vm230, 0
          %258 = vst.msk [vmem:[#allocation2 + $0x6c] sm:$0xf] %vm230, 0
          %259 = vst.msk [vmem:[#allocation2 + $0x70] sm:$0xf] %vm230, 0
          %260 = vst.msk [vmem:[#allocation2 + $0x74] sm:$0xf] %vm230, 0
          %261 = vst.msk [vmem:[#allocation2 + $0x78] sm:$0xf] %vm230, 0
          %262 = vst.msk [vmem:[#allocation2 + $0x7c] sm:$0xf] %vm230, 0
          %s263 = smul.u32 %s225, 3
          %s264 = smul.addr %s263, 4
          %s265 = scalar_lea.vmem %s215, %s264
          %v266 = vld [vmem:[%s265] sm:$0xf]
          %v267 = vld [vmem:[%s265 + $0x4] sm:$0xf]
          %v268 = vld [vmem:[%s265 + $0xc] sm:$0xf]
          %v269 = vld [vmem:[%s265 + $0x10] sm:$0xf]
          %v270 = vld [vmem:[%s265 + $0x18] sm:$0xf]
          %v271 = vld [vmem:[%s265 + $0x1c] sm:$0xf]
          %v272 = vld [vmem:[%s265 + $0x24] sm:$0xf]
          %v273 = vld [vmem:[%s265 + $0x28] sm:$0xf]
          %v274 = vld [vmem:[%s265 + $0x30] sm:$0xf]
          %v275 = vld [vmem:[%s265 + $0x34] sm:$0xf]
          %v276 = vld [vmem:[%s265 + $0x3c] sm:$0xf]
          %v277 = vld [vmem:[%s265 + $0x40] sm:$0xf]
          %v278 = vld [vmem:[%s265 + $0x48] sm:$0xf]
          %v279 = vld [vmem:[%s265 + $0x4c] sm:$0xf]
          %v280 = vld [vmem:[%s265 + $0x54] sm:$0xf]
          %v281 = vld [vmem:[%s265 + $0x58] sm:$0xf]
          %v282 = vld [vmem:[%s265 + $0x60] sm:$0xf]
          %v283 = vld [vmem:[%s265 + $0x64] sm:$0xf]
          %v284 = vld [vmem:[%s265 + $0x6c] sm:$0xf]
          %v285 = vld [vmem:[%s265 + $0x70] sm:$0xf]
          %v286 = vld [vmem:[%s265 + $0x78] sm:$0xf]
          %v287 = vld [vmem:[%s265 + $0x7c] sm:$0xf]
          %v288 = vld [vmem:[%s265 + $0x84] sm:$0xf]
          %v289 = vld [vmem:[%s265 + $0x88] sm:$0xf]
          %v290 = vld [vmem:[%s265 + $0x90] sm:$0xf]
          %v291 = vld [vmem:[%s265 + $0x94] sm:$0xf]
          %v292 = vld [vmem:[%s265 + $0x9c] sm:$0xf]
          %v293 = vld [vmem:[%s265 + $0xa0] sm:$0xf]
          %v294 = vld [vmem:[%s265 + $0xa8] sm:$0xf]
          %v295 = vld [vmem:[%s265 + $0xac] sm:$0xf]
          %v296 = vld [vmem:[%s265 + $0xb4] sm:$0xf]
          %v297 = vld [vmem:[%s265 + $0xb8] sm:$0xf]
          %vm298 = vcmask 27648
          %299 = vst.msk [vmem:[#allocation2] sm:$0xf] %vm298, %v266
          %300 = vst.msk [vmem:[#allocation2 + $0x4] sm:$0xf] %vm298, %v267
          %301 = vst.msk [vmem:[#allocation2 + $0x8] sm:$0xf] %vm298, %v268
          %302 = vst.msk [vmem:[#allocation2 + $0xc] sm:$0xf] %vm298, %v269
          %303 = vst.msk [vmem:[#allocation2 + $0x10] sm:$0xf] %vm298, %v270
          %304 = vst.msk [vmem:[#allocation2 + $0x14] sm:$0xf] %vm298, %v271
          %305 = vst.msk [vmem:[#allocation2 + $0x18] sm:$0xf] %vm298, %v272
          %306 = vst.msk [vmem:[#allocation2 + $0x1c] sm:$0xf] %vm298, %v273
          %307 = vst.msk [vmem:[#allocation2 + $0x20] sm:$0xf] %vm298, %v274
          %308 = vst.msk [vmem:[#allocation2 + $0x24] sm:$0xf] %vm298, %v275
          %309 = vst.msk [vmem:[#allocation2 + $0x28] sm:$0xf] %vm298, %v276
          %310 = vst.msk [vmem:[#allocation2 + $0x2c] sm:$0xf] %vm298, %v277
          %311 = vst.msk [vmem:[#allocation2 + $0x30] sm:$0xf] %vm298, %v278
          %312 = vst.msk [vmem:[#allocation2 + $0x34] sm:$0xf] %vm298, %v279
          %313 = vst.msk [vmem:[#allocation2 + $0x38] sm:$0xf] %vm298, %v280
          %314 = vst.msk [vmem:[#allocation2 + $0x3c] sm:$0xf] %vm298, %v281
          %315 = vst.msk [vmem:[#allocation2 + $0x40] sm:$0xf] %vm298, %v282
          %316 = vst.msk [vmem:[#allocation2 + $0x44] sm:$0xf] %vm298, %v283
          %317 = vst.msk [vmem:[#allocation2 + $0x48] sm:$0xf] %vm298, %v284
          %318 = vst.msk [vmem:[#allocation2 + $0x4c] sm:$0xf] %vm298, %v285
          %319 = vst.msk [vmem:[#allocation2 + $0x50] sm:$0xf] %vm298, %v286
          %320 = vst.msk [vmem:[#allocation2 + $0x54] sm:$0xf] %vm298, %v287
          %321 = vst.msk [vmem:[#allocation2 + $0x58] sm:$0xf] %vm298, %v288
          %322 = vst.msk [vmem:[#allocation2 + $0x5c] sm:$0xf] %vm298, %v289
          %323 = vst.msk [vmem:[#allocation2 + $0x60] sm:$0xf] %vm298, %v290
          %324 = vst.msk [vmem:[#allocation2 + $0x64] sm:$0xf] %vm298, %v291
          %325 = vst.msk [vmem:[#allocation2 + $0x68] sm:$0xf] %vm298, %v292
          %326 = vst.msk [vmem:[#allocation2 + $0x6c] sm:$0xf] %vm298, %v293
          %327 = vst.msk [vmem:[#allocation2 + $0x70] sm:$0xf] %vm298, %v294
          %328 = vst.msk [vmem:[#allocation2 + $0x74] sm:$0xf] %vm298, %v295
          %329 = vst.msk [vmem:[#allocation2 + $0x78] sm:$0xf] %vm298, %v296
          %330 = vst.msk [vmem:[#allocation2 + $0x7c] sm:$0xf] %vm298, %v297
          %v331 = vld [vmem:[%s265] sm:$0xf]
          %v332 = vld [vmem:[%s265 + $0x4] sm:$0xf]
          %v333 = vld [vmem:[%s265 + $0x8] sm:$0x1]
          %v334 = vld [vmem:[%s265 + $0xc] sm:$0xf]
          %v335 = vld [vmem:[%s265 + $0x10] sm:$0xf]
          %v336 = vld [vmem:[%s265 + $0x14] sm:$0x1]
          %v337 = vld [vmem:[%s265 + $0x18] sm:$0xf]
          %v338 = vld [vmem:[%s265 + $0x1c] sm:$0xf]
          %v339 = vld [vmem:[%s265 + $0x20] sm:$0x1]
          %v340 = vld [vmem:[%s265 + $0x24] sm:$0xf]
          %v341 = vld [vmem:[%s265 + $0x28] sm:$0xf]
          %v342 = vld [vmem:[%s265 + $0x2c] sm:$0x1]
          %v343 = vld [vmem:[%s265 + $0x30] sm:$0xf]
          %v344 = vld [vmem:[%s265 + $0x34] sm:$0xf]
          %v345 = vld [vmem:[%s265 + $0x38] sm:$0x1]
          %v346 = vld [vmem:[%s265 + $0x3c] sm:$0xf]
          %v347 = vld [vmem:[%s265 + $0x40] sm:$0xf]
          %v348 = vld [vmem:[%s265 + $0x44] sm:$0x1]
          %v349 = vld [vmem:[%s265 + $0x48] sm:$0xf]
          %v350 = vld [vmem:[%s265 + $0x4c] sm:$0xf]
          %v351 = vld [vmem:[%s265 + $0x50] sm:$0x1]
          %v352 = vld [vmem:[%s265 + $0x54] sm:$0xf]
          %v353 = vld [vmem:[%s265 + $0x58] sm:$0xf]
          %v354 = vld [vmem:[%s265 + $0x5c] sm:$0x1]
          %v355 = vld [vmem:[%s265 + $0x60] sm:$0xf]
          %v356 = vld [vmem:[%s265 + $0x64] sm:$0xf]
          %v357 = vld [vmem:[%s265 + $0x68] sm:$0x1]
          %v358 = vld [vmem:[%s265 + $0x6c] sm:$0xf]
          %v359 = vld [vmem:[%s265 + $0x70] sm:$0xf]
          %v360 = vld [vmem:[%s265 + $0x74] sm:$0x1]
          %v361 = vld [vmem:[%s265 + $0x78] sm:$0xf]
          %v362 = vld [vmem:[%s265 + $0x7c] sm:$0xf]
          %v363 = vld [vmem:[%s265 + $0x80] sm:$0x1]
          %v364 = vld [vmem:[%s265 + $0x84] sm:$0xf]
          %v365 = vld [vmem:[%s265 + $0x88] sm:$0xf]
          %v366 = vld [vmem:[%s265 + $0x8c] sm:$0x1]
          %v367 = vld [vmem:[%s265 + $0x90] sm:$0xf]
          %v368 = vld [vmem:[%s265 + $0x94] sm:$0xf]
          %v369 = vld [vmem:[%s265 + $0x98] sm:$0x1]
          %v370 = vld [vmem:[%s265 + $0x9c] sm:$0xf]
          %v371 = vld [vmem:[%s265 + $0xa0] sm:$0xf]
          %v372 = vld [vmem:[%s265 + $0xa4] sm:$0x1]
          %v373 = vld [vmem:[%s265 + $0xa8] sm:$0xf]
          %v374 = vld [vmem:[%s265 + $0xac] sm:$0xf]
          %v375 = vld [vmem:[%s265 + $0xb0] sm:$0x1]
          %v376 = vld [vmem:[%s265 + $0xb4] sm:$0xf]
          %v377 = vld [vmem:[%s265 + $0xb8] sm:$0xf]
          %v378 = vld [vmem:[%s265 + $0xbc] sm:$0x1]
          %vm379 = vsmask.f32 3328
          %vm380 = vsmask.f32 7440
          %vm381 = vmor %vm379, %vm380
          %v383 = vshrl.u32 %v331, 16
          %v385 = vrot.slane %v383, 4
          %v386 = vshll.u32 %v331, 16
          %v388 = vrot.slane %v386, 5
          %v389 = vor.u32 %v385, %v388
          %v390 = vrot.slane %v389, 4
          %v392 = vshll.u32 %v332, 16
          %v394 = vrot.slane %v392, 5
          %v395 = vsel %vm381, %v390, %v394
          %v396 = vshrl.u32 %v332, 16
          %v398 = vrot.slane %v396, 4
          %v399 = vor.u32 %v398, %v394
          %v400 = vrot.slane %v399, 4
          %v402 = vshll.u32 %v333, 16
          %v404 = vrot.slane %v402, 5
          %v405 = vsel %vm381, %v400, %v404
          %v407 = vshrl.u32 %v334, 16
          %v409 = vrot.slane %v407, 4
          %v410 = vshll.u32 %v334, 16
          %v412 = vrot.slane %v410, 5
          %v413 = vor.u32 %v409, %v412
          %v414 = vrot.slane %v413, 4
          %v416 = vshll.u32 %v335, 16
          %v418 = vrot.slane %v416, 5
          %v419 = vsel %vm381, %v414, %v418
          %v420 = vshrl.u32 %v335, 16
          %v422 = vrot.slane %v420, 4
          %v423 = vor.u32 %v422, %v418
          %v424 = vrot.slane %v423, 4
          %v426 = vshll.u32 %v336, 16
          %v428 = vrot.slane %v426, 5
          %v429 = vsel %vm381, %v424, %v428
          %v431 = vshrl.u32 %v337, 16
          %v433 = vrot.slane %v431, 4
          %v434 = vshll.u32 %v337, 16
          %v436 = vrot.slane %v434, 5
          %v437 = vor.u32 %v433, %v436
          %v438 = vrot.slane %v437, 4
          %v440 = vshll.u32 %v338, 16
          %v442 = vrot.slane %v440, 5
          %v443 = vsel %vm381, %v438, %v442
          %v444 = vshrl.u32 %v338, 16
          %v446 = vrot.slane %v444, 4
          %v447 = vor.u32 %v446, %v442
          %v448 = vrot.slane %v447, 4
          %v450 = vshll.u32 %v339, 16
          %v452 = vrot.slane %v450, 5
          %v453 = vsel %vm381, %v448, %v452
          %v455 = vshrl.u32 %v340, 16
          %v457 = vrot.slane %v455, 4
          %v458 = vshll.u32 %v340, 16
          %v460 = vrot.slane %v458, 5
          %v461 = vor.u32 %v457, %v460
          %v462 = vrot.slane %v461, 4
          %v464 = vshll.u32 %v341, 16
          %v466 = vrot.slane %v464, 5
          %v467 = vsel %vm381, %v462, %v466
          %v468 = vshrl.u32 %v341, 16
          %v470 = vrot.slane %v468, 4
          %v471 = vor.u32 %v470, %v466
          %v472 = vrot.slane %v471, 4
          %v474 = vshll.u32 %v342, 16
          %v476 = vrot.slane %v474, 5
          %v477 = vsel %vm381, %v472, %v476
          %v479 = vshrl.u32 %v343, 16
          %v481 = vrot.slane %v479, 4
          %v482 = vshll.u32 %v343, 16
          %v484 = vrot.slane %v482, 5
          %v485 = vor.u32 %v481, %v484
          %v486 = vrot.slane %v485, 4
          %v488 = vshll.u32 %v344, 16
          %v490 = vrot.slane %v488, 5
          %v491 = vsel %vm381, %v486, %v490
          %v492 = vshrl.u32 %v344, 16
          %v494 = vrot.slane %v492, 4
          %v495 = vor.u32 %v494, %v490
          %v496 = vrot.slane %v495, 4
          %v498 = vshll.u32 %v345, 16
          %v500 = vrot.slane %v498, 5
          %v501 = vsel %vm381, %v496, %v500
          %v503 = vshrl.u32 %v346, 16
          %v505 = vrot.slane %v503, 4
          %v506 = vshll.u32 %v346, 16
          %v508 = vrot.slane %v506, 5
          %v509 = vor.u32 %v505, %v508
          %v510 = vrot.slane %v509, 4
          %v512 = vshll.u32 %v347, 16
          %v514 = vrot.slane %v512, 5
          %v515 = vsel %vm381, %v510, %v514
          %v516 = vshrl.u32 %v347, 16
          %v518 = vrot.slane %v516, 4
          %v519 = vor.u32 %v518, %v514
          %v520 = vrot.slane %v519, 4
          %v522 = vshll.u32 %v348, 16
          %v524 = vrot.slane %v522, 5
          %v525 = vsel %vm381, %v520, %v524
          %v527 = vshrl.u32 %v349, 16
          %v529 = vrot.slane %v527, 4
          %v530 = vshll.u32 %v349, 16
          %v532 = vrot.slane %v530, 5
          %v533 = vor.u32 %v529, %v532
          %v534 = vrot.slane %v533, 4
          %v536 = vshll.u32 %v350, 16
          %v538 = vrot.slane %v536, 5
          %v539 = vsel %vm381, %v534, %v538
          %v540 = vshrl.u32 %v350, 16
          %v542 = vrot.slane %v540, 4
          %v543 = vor.u32 %v542, %v538
          %v544 = vrot.slane %v543, 4
          %v546 = vshll.u32 %v351, 16
          %v548 = vrot.slane %v546, 5
          %v549 = vsel %vm381, %v544, %v548
          %v551 = vshrl.u32 %v352, 16
          %v553 = vrot.slane %v551, 4
          %v554 = vshll.u32 %v352, 16
          %v556 = vrot.slane %v554, 5
          %v557 = vor.u32 %v553, %v556
          %v558 = vrot.slane %v557, 4
          %v560 = vshll.u32 %v353, 16
          %v562 = vrot.slane %v560, 5
          %v563 = vsel %vm381, %v558, %v562
          %v564 = vshrl.u32 %v353, 16
          %v566 = vrot.slane %v564, 4
          %v567 = vor.u32 %v566, %v562
          %v568 = vrot.slane %v567, 4
          %v570 = vshll.u32 %v354, 16
          %v572 = vrot.slane %v570, 5
          %v573 = vsel %vm381, %v568, %v572
          %v575 = vshrl.u32 %v355, 16
          %v577 = vrot.slane %v575, 4
          %v578 = vshll.u32 %v355, 16
          %v580 = vrot.slane %v578, 5
          %v581 = vor.u32 %v577, %v580
          %v582 = vrot.slane %v581, 4
          %v584 = vshll.u32 %v356, 16
          %v586 = vrot.slane %v584, 5
          %v587 = vsel %vm381, %v582, %v586
          %v588 = vshrl.u32 %v356, 16
          %v590 = vrot.slane %v588, 4
          %v591 = vor.u32 %v590, %v586
          %v592 = vrot.slane %v591, 4
          %v594 = vshll.u32 %v357, 16
          %v596 = vrot.slane %v594, 5
          %v597 = vsel %vm381, %v592, %v596
          %v599 = vshrl.u32 %v358, 16
          %v601 = vrot.slane %v599, 4
          %v602 = vshll.u32 %v358, 16
          %v604 = vrot.slane %v602, 5
          %v605 = vor.u32 %v601, %v604
          %v606 = vrot.slane %v605, 4
          %v608 = vshll.u32 %v359, 16
          %v610 = vrot.slane %v608, 5
          %v611 = vsel %vm381, %v606, %v610
          %v612 = vshrl.u32 %v359, 16
          %v614 = vrot.slane %v612, 4
          %v615 = vor.u32 %v614, %v610
          %v616 = vrot.slane %v615, 4
          %v618 = vshll.u32 %v360, 16
          %v620 = vrot.slane %v618, 5
          %v621 = vsel %vm381, %v616, %v620
          %v623 = vshrl.u32 %v361, 16
          %v625 = vrot.slane %v623, 4
          %v626 = vshll.u32 %v361, 16
          %v628 = vrot.slane %v626, 5
          %v629 = vor.u32 %v625, %v628
          %v630 = vrot.slane %v629, 4
          %v632 = vshll.u32 %v362, 16
          %v634 = vrot.slane %v632, 5
          %v635 = vsel %vm381, %v630, %v634
          %v636 = vshrl.u32 %v362, 16
          %v638 = vrot.slane %v636, 4
          %v639 = vor.u32 %v638, %v634
          %v640 = vrot.slane %v639, 4
          %v642 = vshll.u32 %v363, 16
          %v644 = vrot.slane %v642, 5
          %v645 = vsel %vm381, %v640, %v644
          %v647 = vshrl.u32 %v364, 16
          %v649 = vrot.slane %v647, 4
          %v650 = vshll.u32 %v364, 16
          %v652 = vrot.slane %v650, 5
          %v653 = vor.u32 %v649, %v652
          %v654 = vrot.slane %v653, 4
          %v656 = vshll.u32 %v365, 16
          %v658 = vrot.slane %v656, 5
          %v659 = vsel %vm381, %v654, %v658
          %v660 = vshrl.u32 %v365, 16
          %v662 = vrot.slane %v660, 4
          %v663 = vor.u32 %v662, %v658
          %v664 = vrot.slane %v663, 4
          %v666 = vshll.u32 %v366, 16
          %v668 = vrot.slane %v666, 5
          %v669 = vsel %vm381, %v664, %v668
          %v671 = vshrl.u32 %v367, 16
          %v673 = vrot.slane %v671, 4
          %v674 = vshll.u32 %v367, 16
          %v676 = vrot.slane %v674, 5
          %v677 = vor.u32 %v673, %v676
          %v678 = vrot.slane %v677, 4
          %v680 = vshll.u32 %v368, 16
          %v682 = vrot.slane %v680, 5
          %v683 = vsel %vm381, %v678, %v682
          %v684 = vshrl.u32 %v368, 16
          %v686 = vrot.slane %v684, 4
          %v687 = vor.u32 %v686, %v682
          %v688 = vrot.slane %v687, 4
          %v690 = vshll.u32 %v369, 16
          %v692 = vrot.slane %v690, 5
          %v693 = vsel %vm381, %v688, %v692
          %v695 = vshrl.u32 %v370, 16
          %v697 = vrot.slane %v695, 4
          %v698 = vshll.u32 %v370, 16
          %v700 = vrot.slane %v698, 5
          %v701 = vor.u32 %v697, %v700
          %v702 = vrot.slane %v701, 4
          %v704 = vshll.u32 %v371, 16
          %v706 = vrot.slane %v704, 5
          %v707 = vsel %vm381, %v702, %v706
          %v708 = vshrl.u32 %v371, 16
          %v710 = vrot.slane %v708, 4
          %v711 = vor.u32 %v710, %v706
          %v712 = vrot.slane %v711, 4
          %v714 = vshll.u32 %v372, 16
          %v716 = vrot.slane %v714, 5
          %v717 = vsel %vm381, %v712, %v716
          %v719 = vshrl.u32 %v373, 16
          %v721 = vrot.slane %v719, 4
          %v722 = vshll.u32 %v373, 16
          %v724 = vrot.slane %v722, 5
          %v725 = vor.u32 %v721, %v724
          %v726 = vrot.slane %v725, 4
          %v728 = vshll.u32 %v374, 16
          %v730 = vrot.slane %v728, 5
          %v731 = vsel %vm381, %v726, %v730
          %v732 = vshrl.u32 %v374, 16
          %v734 = vrot.slane %v732, 4
          %v735 = vor.u32 %v734, %v730
          %v736 = vrot.slane %v735, 4
          %v738 = vshll.u32 %v375, 16
          %v740 = vrot.slane %v738, 5
          %v741 = vsel %vm381, %v736, %v740
          %v743 = vshrl.u32 %v376, 16
          %v745 = vrot.slane %v743, 4
          %v746 = vshll.u32 %v376, 16
          %v748 = vrot.slane %v746, 5
          %v749 = vor.u32 %v745, %v748
          %v750 = vrot.slane %v749, 4
          %v752 = vshll.u32 %v377, 16
          %v754 = vrot.slane %v752, 5
          %v755 = vsel %vm381, %v750, %v754
          %v756 = vshrl.u32 %v377, 16
          %v758 = vrot.slane %v756, 4
          %v759 = vor.u32 %v758, %v754
          %v760 = vrot.slane %v759, 4
          %v762 = vshll.u32 %v378, 16
          %v764 = vrot.slane %v762, 5
          %v765 = vsel %vm381, %v760, %v764
          %766 = vrot.lane.b32.xlu0 %v395, 4
          %v767 = vpop.permute.xlu0 %766
          %768 = vrot.lane.b32.xlu0 %v405, 4
          %v769 = vpop.permute.xlu0 %768
          %770 = vrot.lane.b32.xlu0 %v419, 4
          %v771 = vpop.permute.xlu0 %770
          %772 = vrot.lane.b32.xlu0 %v429, 4
          %v773 = vpop.permute.xlu0 %772
          %774 = vrot.lane.b32.xlu0 %v443, 4
          %v775 = vpop.permute.xlu0 %774
          %776 = vrot.lane.b32.xlu0 %v453, 4
          %v777 = vpop.permute.xlu0 %776
          %778 = vrot.lane.b32.xlu0 %v467, 4
          %v779 = vpop.permute.xlu0 %778
          %780 = vrot.lane.b32.xlu0 %v477, 4
          %v781 = vpop.permute.xlu0 %780
          %782 = vrot.lane.b32.xlu0 %v491, 4
          %v783 = vpop.permute.xlu0 %782
          %784 = vrot.lane.b32.xlu0 %v501, 4
          %v785 = vpop.permute.xlu0 %784
          %786 = vrot.lane.b32.xlu0 %v515, 4
          %v787 = vpop.permute.xlu0 %786
          %788 = vrot.lane.b32.xlu0 %v525, 4
          %v789 = vpop.permute.xlu0 %788
          %790 = vrot.lane.b32.xlu0 %v539, 4
          %v791 = vpop.permute.xlu0 %790
          %792 = vrot.lane.b32.xlu0 %v549, 4
          %v793 = vpop.permute.xlu0 %792
          %794 = vrot.lane.b32.xlu0 %v563, 4
          %v795 = vpop.permute.xlu0 %794
          %796 = vrot.lane.b32.xlu0 %v573, 4
          %v797 = vpop.permute.xlu0 %796
          %798 = vrot.lane.b32.xlu0 %v587, 4
          %v799 = vpop.permute.xlu0 %798
          %800 = vrot.lane.b32.xlu0 %v597, 4
          %v801 = vpop.permute.xlu0 %800
          %802 = vrot.lane.b32.xlu0 %v611, 4
          %v803 = vpop.permute.xlu0 %802
          %804 = vrot.lane.b32.xlu0 %v621, 4
          %v805 = vpop.permute.xlu0 %804
          %806 = vrot.lane.b32.xlu0 %v635, 4
          %v807 = vpop.permute.xlu0 %806
          %808 = vrot.lane.b32.xlu0 %v645, 4
          %v809 = vpop.permute.xlu0 %808
          %810 = vrot.lane.b32.xlu0 %v659, 4
          %v811 = vpop.permute.xlu0 %810
          %812 = vrot.lane.b32.xlu0 %v669, 4
          %v813 = vpop.permute.xlu0 %812
          %814 = vrot.lane.b32.xlu0 %v683, 4
          %v815 = vpop.permute.xlu0 %814
          %816 = vrot.lane.b32.xlu0 %v693, 4
          %v817 = vpop.permute.xlu0 %816
          %818 = vrot.lane.b32.xlu0 %v707, 4
          %v819 = vpop.permute.xlu0 %818
          %820 = vrot.lane.b32.xlu0 %v717, 4
          %v821 = vpop.permute.xlu0 %820
          %822 = vrot.lane.b32.xlu0 %v731, 4
          %v823 = vpop.permute.xlu0 %822
          %824 = vrot.lane.b32.xlu0 %v741, 4
          %v825 = vpop.permute.xlu0 %824
          %826 = vrot.lane.b32.xlu0 %v755, 4
          %v827 = vpop.permute.xlu0 %826
          %828 = vrot.lane.b32.xlu0 %v765, 4
          %v829 = vpop.permute.xlu0 %828
          %vm862 = vcmask 60448
          %863 = vst.msk [vmem:[#allocation2] sm:$0xf] %vm862, %v767
          %864 = vst.msk [vmem:[#allocation2 + $0x4] sm:$0xf] %vm862, %v769
          %865 = vst.msk [vmem:[#allocation2 + $0x8] sm:$0xf] %vm862, %v771
          %866 = vst.msk [vmem:[#allocation2 + $0xc] sm:$0xf] %vm862, %v773
          %867 = vst.msk [vmem:[#allocation2 + $0x10] sm:$0xf] %vm862, %v775
          %868 = vst.msk [vmem:[#allocation2 + $0x14] sm:$0xf] %vm862, %v777
          %869 = vst.msk [vmem:[#allocation2 + $0x18] sm:$0xf] %vm862, %v779
          %870 = vst.msk [vmem:[#allocation2 + $0x1c] sm:$0xf] %vm862, %v781
          %871 = vst.msk [vmem:[#allocation2 + $0x20] sm:$0xf] %vm862, %v783
          %872 = vst.msk [vmem:[#allocation2 + $0x24] sm:$0xf] %vm862, %v785
          %873 = vst.msk [vmem:[#allocation2 + $0x28] sm:$0xf] %vm862, %v787
          %874 = vst.msk [vmem:[#allocation2 + $0x2c] sm:$0xf] %vm862, %v789
          %875 = vst.msk [vmem:[#allocation2 + $0x30] sm:$0xf] %vm862, %v791
          %876 = vst.msk [vmem:[#allocation2 + $0x34] sm:$0xf] %vm862, %v793
          %877 = vst.msk [vmem:[#allocation2 + $0x38] sm:$0xf] %vm862, %v795
          %878 = vst.msk [vmem:[#allocation2 + $0x3c] sm:$0xf] %vm862, %v797
          %879 = vst.msk [vmem:[#allocation2 + $0x40] sm:$0xf] %vm862, %v799
          %880 = vst.msk [vmem:[#allocation2 + $0x44] sm:$0xf] %vm862, %v801
          %881 = vst.msk [vmem:[#allocation2 + $0x48] sm:$0xf] %vm862, %v803
          %882 = vst.msk [vmem:[#allocation2 + $0x4c] sm:$0xf] %vm862, %v805
          %883 = vst.msk [vmem:[#allocation2 + $0x50] sm:$0xf] %vm862, %v807
          %884 = vst.msk [vmem:[#allocation2 + $0x54] sm:$0xf] %vm862, %v809
          %885 = vst.msk [vmem:[#allocation2 + $0x58] sm:$0xf] %vm862, %v811
          %886 = vst.msk [vmem:[#allocation2 + $0x5c] sm:$0xf] %vm862, %v813
          %887 = vst.msk [vmem:[#allocation2 + $0x60] sm:$0xf] %vm862, %v815
          %888 = vst.msk [vmem:[#allocation2 + $0x64] sm:$0xf] %vm862, %v817
          %889 = vst.msk [vmem:[#allocation2 + $0x68] sm:$0xf] %vm862, %v819
          %890 = vst.msk [vmem:[#allocation2 + $0x6c] sm:$0xf] %vm862, %v821
          %891 = vst.msk [vmem:[#allocation2 + $0x70] sm:$0xf] %vm862, %v823
          %892 = vst.msk [vmem:[#allocation2 + $0x74] sm:$0xf] %vm862, %v825
          %893 = vst.msk [vmem:[#allocation2 + $0x78] sm:$0xf] %vm862, %v827
          %894 = vst.msk [vmem:[#allocation2 + $0x7c] sm:$0xf] %vm862, %v829
          %v895 = vld [vmem:[%s265] sm:$0xe]
          %v896 = vld [vmem:[%s265 + $0x4] sm:$0xf]
          %v897 = vld [vmem:[%s265 + $0x8] sm:$0x1]
          %v898 = vld [vmem:[%s265 + $0xc] sm:$0xe]
          %v899 = vld [vmem:[%s265 + $0x10] sm:$0xf]
          %v900 = vld [vmem:[%s265 + $0x14] sm:$0x1]
          %v901 = vld [vmem:[%s265 + $0x18] sm:$0xe]
          %v902 = vld [vmem:[%s265 + $0x1c] sm:$0xf]
          %v903 = vld [vmem:[%s265 + $0x20] sm:$0x1]
          %v904 = vld [vmem:[%s265 + $0x24] sm:$0xe]
          %v905 = vld [vmem:[%s265 + $0x28] sm:$0xf]
          %v906 = vld [vmem:[%s265 + $0x2c] sm:$0x1]
          %v907 = vld [vmem:[%s265 + $0x30] sm:$0xe]
          %v908 = vld [vmem:[%s265 + $0x34] sm:$0xf]
          %v909 = vld [vmem:[%s265 + $0x38] sm:$0x1]
          %v910 = vld [vmem:[%s265 + $0x3c] sm:$0xe]
          %v911 = vld [vmem:[%s265 + $0x40] sm:$0xf]
          %v912 = vld [vmem:[%s265 + $0x44] sm:$0x1]
          %v913 = vld [vmem:[%s265 + $0x48] sm:$0xe]
          %v914 = vld [vmem:[%s265 + $0x4c] sm:$0xf]
          %v915 = vld [vmem:[%s265 + $0x50] sm:$0x1]
          %v916 = vld [vmem:[%s265 + $0x54] sm:$0xe]
          %v917 = vld [vmem:[%s265 + $0x58] sm:$0xf]
          %v918 = vld [vmem:[%s265 + $0x5c] sm:$0x1]
          %v919 = vld [vmem:[%s265 + $0x60] sm:$0xe]
          %v920 = vld [vmem:[%s265 + $0x64] sm:$0xf]
          %v921 = vld [vmem:[%s265 + $0x68] sm:$0x1]
          %v922 = vld [vmem:[%s265 + $0x6c] sm:$0xe]
          %v923 = vld [vmem:[%s265 + $0x70] sm:$0xf]
          %v924 = vld [vmem:[%s265 + $0x74] sm:$0x1]
          %v925 = vld [vmem:[%s265 + $0x78] sm:$0xe]
          %v926 = vld [vmem:[%s265 + $0x7c] sm:$0xf]
          %v927 = vld [vmem:[%s265 + $0x80] sm:$0x1]
          %v928 = vld [vmem:[%s265 + $0x84] sm:$0xe]
          %v929 = vld [vmem:[%s265 + $0x88] sm:$0xf]
          %v930 = vld [vmem:[%s265 + $0x8c] sm:$0x1]
          %v931 = vld [vmem:[%s265 + $0x90] sm:$0xe]
          %v932 = vld [vmem:[%s265 + $0x94] sm:$0xf]
          %v933 = vld [vmem:[%s265 + $0x98] sm:$0x1]
          %v934 = vld [vmem:[%s265 + $0x9c] sm:$0xe]
          %v935 = vld [vmem:[%s265 + $0xa0] sm:$0xf]
          %v936 = vld [vmem:[%s265 + $0xa4] sm:$0x1]
          %v937 = vld [vmem:[%s265 + $0xa8] sm:$0xe]
          %v938 = vld [vmem:[%s265 + $0xac] sm:$0xf]
          %v939 = vld [vmem:[%s265 + $0xb0] sm:$0x1]
          %v940 = vld [vmem:[%s265 + $0xb4] sm:$0xe]
          %v941 = vld [vmem:[%s265 + $0xb8] sm:$0xf]
          %v942 = vld [vmem:[%s265 + $0xbc] sm:$0x1]
          %vm991 = vcmask 1042432
          %vm992 = vcmask 1046532
          %vm993 = vmor %vm991, %vm992
          %v994 = vrot.slane %v895, 5
          %v995 = vrot.slane %v994, 4
          %v996 = vrot.slane %v896, 5
          %v997 = vsel %vm993, %v995, %v996
          %v998 = vrot.slane %v996, 4
          %v999 = vrot.slane %v897, 5
          %v1000 = vsel %vm993, %v998, %v999
          %v1001 = vrot.slane %v898, 5
          %v1002 = vrot.slane %v1001, 4
          %v1003 = vrot.slane %v899, 5
          %v1004 = vsel %vm993, %v1002, %v1003
          %v1005 = vrot.slane %v1003, 4
          %v1006 = vrot.slane %v900, 5
          %v1007 = vsel %vm993, %v1005, %v1006
          %v1008 = vrot.slane %v901, 5
          %v1009 = vrot.slane %v1008, 4
          %v1010 = vrot.slane %v902, 5
          %v1011 = vsel %vm993, %v1009, %v1010
          %v1012 = vrot.slane %v1010, 4
          %v1013 = vrot.slane %v903, 5
          %v1014 = vsel %vm993, %v1012, %v1013
          %v1015 = vrot.slane %v904, 5
          %v1016 = vrot.slane %v1015, 4
          %v1017 = vrot.slane %v905, 5
          %v1018 = vsel %vm993, %v1016, %v1017
          %v1019 = vrot.slane %v1017, 4
          %v1020 = vrot.slane %v906, 5
          %v1021 = vsel %vm993, %v1019, %v1020
          %v1022 = vrot.slane %v907, 5
          %v1023 = vrot.slane %v1022, 4
          %v1024 = vrot.slane %v908, 5
          %v1025 = vsel %vm993, %v1023, %v1024
          %v1026 = vrot.slane %v1024, 4
          %v1027 = vrot.slane %v909, 5
          %v1028 = vsel %vm993, %v1026, %v1027
          %v1029 = vrot.slane %v910, 5
          %v1030 = vrot.slane %v1029, 4
          %v1031 = vrot.slane %v911, 5
          %v1032 = vsel %vm993, %v1030, %v1031
          %v1033 = vrot.slane %v1031, 4
          %v1034 = vrot.slane %v912, 5
          %v1035 = vsel %vm993, %v1033, %v1034
          %v1036 = vrot.slane %v913, 5
          %v1037 = vrot.slane %v1036, 4
          %v1038 = vrot.slane %v914, 5
          %v1039 = vsel %vm993, %v1037, %v1038
          %v1040 = vrot.slane %v1038, 4
          %v1041 = vrot.slane %v915, 5
          %v1042 = vsel %vm993, %v1040, %v1041
          %v1043 = vrot.slane %v916, 5
          %v1044 = vrot.slane %v1043, 4
          %v1045 = vrot.slane %v917, 5
          %v1046 = vsel %vm993, %v1044, %v1045
          %v1047 = vrot.slane %v1045, 4
          %v1048 = vrot.slane %v918, 5
          %v1049 = vsel %vm993, %v1047, %v1048
          %v1050 = vrot.slane %v919, 5
          %v1051 = vrot.slane %v1050, 4
          %v1052 = vrot.slane %v920, 5
          %v1053 = vsel %vm993, %v1051, %v1052
          %v1054 = vrot.slane %v1052, 4
          %v1055 = vrot.slane %v921, 5
          %v1056 = vsel %vm993, %v1054, %v1055
          %v1057 = vrot.slane %v922, 5
          %v1058 = vrot.slane %v1057, 4
          %v1059 = vrot.slane %v923, 5
          %v1060 = vsel %vm993, %v1058, %v1059
          %v1061 = vrot.slane %v1059, 4
          %v1062 = vrot.slane %v924, 5
          %v1063 = vsel %vm993, %v1061, %v1062
          %v1064 = vrot.slane %v925, 5
          %v1065 = vrot.slane %v1064, 4
          %v1066 = vrot.slane %v926, 5
          %v1067 = vsel %vm993, %v1065, %v1066
          %v1068 = vrot.slane %v1066, 4
          %v1069 = vrot.slane %v927, 5
          %v1070 = vsel %vm993, %v1068, %v1069
          %v1071 = vrot.slane %v928, 5
          %v1072 = vrot.slane %v1071, 4
          %v1073 = vrot.slane %v929, 5
          %v1074 = vsel %vm993, %v1072, %v1073
          %v1075 = vrot.slane %v1073, 4
          %v1076 = vrot.slane %v930, 5
          %v1077 = vsel %vm993, %v1075, %v1076
          %v1078 = vrot.slane %v931, 5
          %v1079 = vrot.slane %v1078, 4
          %v1080 = vrot.slane %v932, 5
          %v1081 = vsel %vm993, %v1079, %v1080
          %v1082 = vrot.slane %v1080, 4
          %v1083 = vrot.slane %v933, 5
          %v1084 = vsel %vm993, %v1082, %v1083
          %v1085 = vrot.slane %v934, 5
          %v1086 = vrot.slane %v1085, 4
          %v1087 = vrot.slane %v935, 5
          %v1088 = vsel %vm993, %v1086, %v1087
          %v1089 = vrot.slane %v1087, 4
          %v1090 = vrot.slane %v936, 5
          %v1091 = vsel %vm993, %v1089, %v1090
          %v1092 = vrot.slane %v937, 5
          %v1093 = vrot.slane %v1092, 4
          %v1094 = vrot.slane %v938, 5
          %v1095 = vsel %vm993, %v1093, %v1094
          %v1096 = vrot.slane %v1094, 4
          %v1097 = vrot.slane %v939, 5
          %v1098 = vsel %vm993, %v1096, %v1097
          %v1099 = vrot.slane %v940, 5
          %v1100 = vrot.slane %v1099, 4
          %v1101 = vrot.slane %v941, 5
          %v1102 = vsel %vm993, %v1100, %v1101
          %v1103 = vrot.slane %v1101, 4
          %v1104 = vrot.slane %v942, 5
          %v1105 = vsel %vm993, %v1103, %v1104
          %1106 = vrot.lane.b32.xlu0 %v997, 8
          %v1107 = vpop.permute.xlu0 %1106
          %1108 = vrot.lane.b32.xlu0 %v1000, 8
          %v1109 = vpop.permute.xlu0 %1108
          %1110 = vrot.lane.b32.xlu0 %v1004, 8
          %v1111 = vpop.permute.xlu0 %1110
          %1112 = vrot.lane.b32.xlu0 %v1007, 8
          %v1113 = vpop.permute.xlu0 %1112
          %1114 = vrot.lane.b32.xlu0 %v1011, 8
          %v1115 = vpop.permute.xlu0 %1114
          %1116 = vrot.lane.b32.xlu0 %v1014, 8
          %v1117 = vpop.permute.xlu0 %1116
          %1118 = vrot.lane.b32.xlu0 %v1018, 8
          %v1119 = vpop.permute.xlu0 %1118
          %1120 = vrot.lane.b32.xlu0 %v1021, 8
          %v1121 = vpop.permute.xlu0 %1120
          %1122 = vrot.lane.b32.xlu0 %v1025, 8
          %v1123 = vpop.permute.xlu0 %1122
          %1124 = vrot.lane.b32.xlu0 %v1028, 8
          %v1125 = vpop.permute.xlu0 %1124
          %1126 = vrot.lane.b32.xlu0 %v1032, 8
          %v1127 = vpop.permute.xlu0 %1126
          %1128 = vrot.lane.b32.xlu0 %v1035, 8
          %v1129 = vpop.permute.xlu0 %1128
          %1130 = vrot.lane.b32.xlu0 %v1039, 8
          %v1131 = vpop.permute.xlu0 %1130
          %1132 = vrot.lane.b32.xlu0 %v1042, 8
          %v1133 = vpop.permute.xlu0 %1132
          %1134 = vrot.lane.b32.xlu0 %v1046, 8
          %v1135 = vpop.permute.xlu0 %1134
          %1136 = vrot.lane.b32.xlu0 %v1049, 8
          %v1137 = vpop.permute.xlu0 %1136
          %1138 = vrot.lane.b32.xlu0 %v1053, 8
          %v1139 = vpop.permute.xlu0 %1138
          %1140 = vrot.lane.b32.xlu0 %v1056, 8
          %v1141 = vpop.permute.xlu0 %1140
          %1142 = vrot.lane.b32.xlu0 %v1060, 8
          %v1143 = vpop.permute.xlu0 %1142
          %1144 = vrot.lane.b32.xlu0 %v1063, 8
          %v1145 = vpop.permute.xlu0 %1144
          %1146 = vrot.lane.b32.xlu0 %v1067, 8
          %v1147 = vpop.permute.xlu0 %1146
          %1148 = vrot.lane.b32.xlu0 %v1070, 8
          %v1149 = vpop.permute.xlu0 %1148
          %1150 = vrot.lane.b32.xlu0 %v1074, 8
          %v1151 = vpop.permute.xlu0 %1150
          %1152 = vrot.lane.b32.xlu0 %v1077, 8
          %v1153 = vpop.permute.xlu0 %1152
          %1154 = vrot.lane.b32.xlu0 %v1081, 8
          %v1155 = vpop.permute.xlu0 %1154
          %1156 = vrot.lane.b32.xlu0 %v1084, 8
          %v1157 = vpop.permute.xlu0 %1156
          %1158 = vrot.lane.b32.xlu0 %v1088, 8
          %v1159 = vpop.permute.xlu0 %1158
          %1160 = vrot.lane.b32.xlu0 %v1091, 8
          %v1161 = vpop.permute.xlu0 %1160
          %1162 = vrot.lane.b32.xlu0 %v1095, 8
          %v1163 = vpop.permute.xlu0 %1162
          %1164 = vrot.lane.b32.xlu0 %v1098, 8
          %v1165 = vpop.permute.xlu0 %1164
          %1166 = vrot.lane.b32.xlu0 %v1102, 8
          %v1167 = vpop.permute.xlu0 %1166
          %1168 = vrot.lane.b32.xlu0 %v1105, 8
          %v1169 = vpop.permute.xlu0 %1168
          %vm1202 = vcmask 93248
          %1203 = vst.msk [vmem:[#allocation2] sm:$0xf] %vm1202, %v1107
          %1204 = vst.msk [vmem:[#allocation2 + $0x4] sm:$0xf] %vm1202, %v1109
          %1205 = vst.msk [vmem:[#allocation2 + $0x8] sm:$0xf] %vm1202, %v1111
          %1206 = vst.msk [vmem:[#allocation2 + $0xc] sm:$0xf] %vm1202, %v1113
          %1207 = vst.msk [vmem:[#allocation2 + $0x10] sm:$0xf] %vm1202, %v1115
          %1208 = vst.msk [vmem:[#allocation2 + $0x14] sm:$0xf] %vm1202, %v1117
          %1209 = vst.msk [vmem:[#allocation2 + $0x18] sm:$0xf] %vm1202, %v1119
          %1210 = vst.msk [vmem:[#allocation2 + $0x1c] sm:$0xf] %vm1202, %v1121
          %1211 = vst.msk [vmem:[#allocation2 + $0x20] sm:$0xf] %vm1202, %v1123
          %1212 = vst.msk [vmem:[#allocation2 + $0x24] sm:$0xf] %vm1202, %v1125
          %1213 = vst.msk [vmem:[#allocation2 + $0x28] sm:$0xf] %vm1202, %v1127
          %1214 = vst.msk [vmem:[#allocation2 + $0x2c] sm:$0xf] %vm1202, %v1129
          %1215 = vst.msk [vmem:[#allocation2 + $0x30] sm:$0xf] %vm1202, %v1131
          %1216 = vst.msk [vmem:[#allocation2 + $0x34] sm:$0xf] %vm1202, %v1133
          %1217 = vst.msk [vmem:[#allocation2 + $0x38] sm:$0xf] %vm1202, %v1135
          %1218 = vst.msk [vmem:[#allocation2 + $0x3c] sm:$0xf] %vm1202, %v1137
          %1219 = vst.msk [vmem:[#allocation2 + $0x40] sm:$0xf] %vm1202, %v1139
          %1220 = vst.msk [vmem:[#allocation2 + $0x44] sm:$0xf] %vm1202, %v1141
          %1221 = vst.msk [vmem:[#allocation2 + $0x48] sm:$0xf] %vm1202, %v1143
          %1222 = vst.msk [vmem:[#allocation2 + $0x4c] sm:$0xf] %vm1202, %v1145
          %1223 = vst.msk [vmem:[#allocation2 + $0x50] sm:$0xf] %vm1202, %v1147
          %1224 = vst.msk [vmem:[#allocation2 + $0x54] sm:$0xf] %vm1202, %v1149
          %1225 = vst.msk [vmem:[#allocation2 + $0x58] sm:$0xf] %vm1202, %v1151
          %1226 = vst.msk [vmem:[#allocation2 + $0x5c] sm:$0xf] %vm1202, %v1153
          %1227 = vst.msk [vmem:[#allocation2 + $0x60] sm:$0xf] %vm1202, %v1155
          %1228 = vst.msk [vmem:[#allocation2 + $0x64] sm:$0xf] %vm1202, %v1157
          %1229 = vst.msk [vmem:[#allocation2 + $0x68] sm:$0xf] %vm1202, %v1159
          %1230 = vst.msk [vmem:[#allocation2 + $0x6c] sm:$0xf] %vm1202, %v1161
          %1231 = vst.msk [vmem:[#allocation2 + $0x70] sm:$0xf] %vm1202, %v1163
          %1232 = vst.msk [vmem:[#allocation2 + $0x74] sm:$0xf] %vm1202, %v1165
          %1233 = vst.msk [vmem:[#allocation2 + $0x78] sm:$0xf] %vm1202, %v1167
          %1234 = vst.msk [vmem:[#allocation2 + $0x7c] sm:$0xf] %vm1202, %v1169
          %s1235 = sadd.s32 %s225, 1
          %s1236 = smul.u32 %s1235, 3
          %s1237 = smul.addr %s1236, 4
          %s1238 = scalar_lea.vmem %s215, %s1237
          %v1239 = vld [vmem:[%s1238] sm:$0xf]
          %v1240 = vld [vmem:[%s1238 + $0x4] sm:$0xf]
          %v1241 = vld [vmem:[%s1238 + $0xc] sm:$0xf]
          %v1242 = vld [vmem:[%s1238 + $0x10] sm:$0xf]
          %v1243 = vld [vmem:[%s1238 + $0x18] sm:$0xf]
          %v1244 = vld [vmem:[%s1238 + $0x1c] sm:$0xf]
          %v1245 = vld [vmem:[%s1238 + $0x24] sm:$0xf]
          %v1246 = vld [vmem:[%s1238 + $0x28] sm:$0xf]
          %v1247 = vld [vmem:[%s1238 + $0x30] sm:$0xf]
          %v1248 = vld [vmem:[%s1238 + $0x34] sm:$0xf]
          %v1249 = vld [vmem:[%s1238 + $0x3c] sm:$0xf]
          %v1250 = vld [vmem:[%s1238 + $0x40] sm:$0xf]
          %v1251 = vld [vmem:[%s1238 + $0x48] sm:$0xf]
          %v1252 = vld [vmem:[%s1238 + $0x4c] sm:$0xf]
          %v1253 = vld [vmem:[%s1238 + $0x54] sm:$0xf]
          %v1254 = vld [vmem:[%s1238 + $0x58] sm:$0xf]
          %v1255 = vld [vmem:[%s1238 + $0x60] sm:$0xf]
          %v1256 = vld [vmem:[%s1238 + $0x64] sm:$0xf]
          %v1257 = vld [vmem:[%s1238 + $0x6c] sm:$0xf]
          %v1258 = vld [vmem:[%s1238 + $0x70] sm:$0xf]
          %v1259 = vld [vmem:[%s1238 + $0x78] sm:$0xf]
          %v1260 = vld [vmem:[%s1238 + $0x7c] sm:$0xf]
          %v1261 = vld [vmem:[%s1238 + $0x84] sm:$0xf]
          %v1262 = vld [vmem:[%s1238 + $0x88] sm:$0xf]
          %v1263 = vld [vmem:[%s1238 + $0x90] sm:$0xf]
          %v1264 = vld [vmem:[%s1238 + $0x94] sm:$0xf]
          %v1265 = vld [vmem:[%s1238 + $0x9c] sm:$0xf]
          %v1266 = vld [vmem:[%s1238 + $0xa0] sm:$0xf]
          %v1267 = vld [vmem:[%s1238 + $0xa8] sm:$0xf]
          %v1268 = vld [vmem:[%s1238 + $0xac] sm:$0xf]
          %v1269 = vld [vmem:[%s1238 + $0xb4] sm:$0xf]
          %v1270 = vld [vmem:[%s1238 + $0xb8] sm:$0xf]
          %1303 = vrot.lane.b32.xlu0 %v1239, 12
          %v1304 = vpop.permute.xlu0 %1303
          %1305 = vrot.lane.b32.xlu0 %v1240, 12
          %v1306 = vpop.permute.xlu0 %1305
          %1307 = vrot.lane.b32.xlu0 %v1241, 12
          %v1308 = vpop.permute.xlu0 %1307
          %1309 = vrot.lane.b32.xlu0 %v1242, 12
          %v1310 = vpop.permute.xlu0 %1309
          %1311 = vrot.lane.b32.xlu0 %v1243, 12
          %v1312 = vpop.permute.xlu0 %1311
          %1313 = vrot.lane.b32.xlu0 %v1244, 12
          %v1314 = vpop.permute.xlu0 %1313
          %1315 = vrot.lane.b32.xlu0 %v1245, 12
          %v1316 = vpop.permute.xlu0 %1315
          %1317 = vrot.lane.b32.xlu0 %v1246, 12
          %v1318 = vpop.permute.xlu0 %1317
          %1319 = vrot.lane.b32.xlu0 %v1247, 12
          %v1320 = vpop.permute.xlu0 %1319
          %1321 = vrot.lane.b32.xlu0 %v1248, 12
          %v1322 = vpop.permute.xlu0 %1321
          %1323 = vrot.lane.b32.xlu0 %v1249, 12
          %v1324 = vpop.permute.xlu0 %1323
          %1325 = vrot.lane.b32.xlu0 %v1250, 12
          %v1326 = vpop.permute.xlu0 %1325
          %1327 = vrot.lane.b32.xlu0 %v1251, 12
          %v1328 = vpop.permute.xlu0 %1327
          %1329 = vrot.lane.b32.xlu0 %v1252, 12
          %v1330 = vpop.permute.xlu0 %1329
          %1331 = vrot.lane.b32.xlu0 %v1253, 12
          %v1332 = vpop.permute.xlu0 %1331
          %1333 = vrot.lane.b32.xlu0 %v1254, 12
          %v1334 = vpop.permute.xlu0 %1333
          %1335 = vrot.lane.b32.xlu0 %v1255, 12
          %v1336 = vpop.permute.xlu0 %1335
          %1337 = vrot.lane.b32.xlu0 %v1256, 12
          %v1338 = vpop.permute.xlu0 %1337
          %1339 = vrot.lane.b32.xlu0 %v1257, 12
          %v1340 = vpop.permute.xlu0 %1339
          %1341 = vrot.lane.b32.xlu0 %v1258, 12
          %v1342 = vpop.permute.xlu0 %1341
          %1343 = vrot.lane.b32.xlu0 %v1259, 12
          %v1344 = vpop.permute.xlu0 %1343
          %1345 = vrot.lane.b32.xlu0 %v1260, 12
          %v1346 = vpop.permute.xlu0 %1345
          %1347 = vrot.lane.b32.xlu0 %v1261, 12
          %v1348 = vpop.permute.xlu0 %1347
          %1349 = vrot.lane.b32.xlu0 %v1262, 12
          %v1350 = vpop.permute.xlu0 %1349
          %1351 = vrot.lane.b32.xlu0 %v1263, 12
          %v1352 = vpop.permute.xlu0 %1351
          %1353 = vrot.lane.b32.xlu0 %v1264, 12
          %v1354 = vpop.permute.xlu0 %1353
          %1355 = vrot.lane.b32.xlu0 %v1265, 12
          %v1356 = vpop.permute.xlu0 %1355
          %1357 = vrot.lane.b32.xlu0 %v1266, 12
          %v1358 = vpop.permute.xlu0 %1357
          %1359 = vrot.lane.b32.xlu0 %v1267, 12
          %v1360 = vpop.permute.xlu0 %1359
          %1361 = vrot.lane.b32.xlu0 %v1268, 12
          %v1362 = vpop.permute.xlu0 %1361
          %1363 = vrot.lane.b32.xlu0 %v1269, 12
          %v1364 = vpop.permute.xlu0 %1363
          %1365 = vrot.lane.b32.xlu0 %v1270, 12
          %v1366 = vpop.permute.xlu0 %1365
          %vm1399 = vcmask 126048
          %1400 = vst.msk [vmem:[#allocation2] sm:$0xf] %vm1399, %v1304
          %1401 = vst.msk [vmem:[#allocation2 + $0x4] sm:$0xf] %vm1399, %v1306
          %1402 = vst.msk [vmem:[#allocation2 + $0x8] sm:$0xf] %vm1399, %v1308
          %1403 = vst.msk [vmem:[#allocation2 + $0xc] sm:$0xf] %vm1399, %v1310
          %1404 = vst.msk [vmem:[#allocation2 + $0x10] sm:$0xf] %vm1399, %v1312
          %1405 = vst.msk [vmem:[#allocation2 + $0x14] sm:$0xf] %vm1399, %v1314
          %1406 = vst.msk [vmem:[#allocation2 + $0x18] sm:$0xf] %vm1399, %v1316
          %1407 = vst.msk [vmem:[#allocation2 + $0x1c] sm:$0xf] %vm1399, %v1318
          %1408 = vst.msk [vmem:[#allocation2 + $0x20] sm:$0xf] %vm1399, %v1320
          %1409 = vst.msk [vmem:[#allocation2 + $0x24] sm:$0xf] %vm1399, %v1322
          %1410 = vst.msk [vmem:[#allocation2 + $0x28] sm:$0xf] %vm1399, %v1324
          %1411 = vst.msk [vmem:[#allocation2 + $0x2c] sm:$0xf] %vm1399, %v1326
          %1412 = vst.msk [vmem:[#allocation2 + $0x30] sm:$0xf] %vm1399, %v1328
          %1413 = vst.msk [vmem:[#allocation2 + $0x34] sm:$0xf] %vm1399, %v1330
          %1414 = vst.msk [vmem:[#allocation2 + $0x38] sm:$0xf] %vm1399, %v1332
          %1415 = vst.msk [vmem:[#allocation2 + $0x3c] sm:$0xf] %vm1399, %v1334
          %1416 = vst.msk [vmem:[#allocation2 + $0x40] sm:$0xf] %vm1399, %v1336
          %1417 = vst.msk [vmem:[#allocation2 + $0x44] sm:$0xf] %vm1399, %v1338
          %1418 = vst.msk [vmem:[#allocation2 + $0x48] sm:$0xf] %vm1399, %v1340
          %1419 = vst.msk [vmem:[#allocation2 + $0x4c] sm:$0xf] %vm1399, %v1342
          %1420 = vst.msk [vmem:[#allocation2 + $0x50] sm:$0xf] %vm1399, %v1344
          %1421 = vst.msk [vmem:[#allocation2 + $0x54] sm:$0xf] %vm1399, %v1346
          %1422 = vst.msk [vmem:[#allocation2 + $0x58] sm:$0xf] %vm1399, %v1348
          %1423 = vst.msk [vmem:[#allocation2 + $0x5c] sm:$0xf] %vm1399, %v1350
          %1424 = vst.msk [vmem:[#allocation2 + $0x60] sm:$0xf] %vm1399, %v1352
          %1425 = vst.msk [vmem:[#allocation2 + $0x64] sm:$0xf] %vm1399, %v1354
          %1426 = vst.msk [vmem:[#allocation2 + $0x68] sm:$0xf] %vm1399, %v1356
          %1427 = vst.msk [vmem:[#allocation2 + $0x6c] sm:$0xf] %vm1399, %v1358
          %1428 = vst.msk [vmem:[#allocation2 + $0x70] sm:$0xf] %vm1399, %v1360
          %1429 = vst.msk [vmem:[#allocation2 + $0x74] sm:$0xf] %vm1399, %v1362
          %1430 = vst.msk [vmem:[#allocation2 + $0x78] sm:$0xf] %vm1399, %v1364
          %1431 = vst.msk [vmem:[#allocation2 + $0x7c] sm:$0xf] %vm1399, %v1366
          %v1432 = vld [vmem:[%s1238] sm:$0xf]
          %v1433 = vld [vmem:[%s1238 + $0x4] sm:$0xf]
          %v1434 = vld [vmem:[%s1238 + $0x8] sm:$0x1]
          %v1435 = vld [vmem:[%s1238 + $0xc] sm:$0xf]
          %v1436 = vld [vmem:[%s1238 + $0x10] sm:$0xf]
          %v1437 = vld [vmem:[%s1238 + $0x14] sm:$0x1]
          %v1438 = vld [vmem:[%s1238 + $0x18] sm:$0xf]
          %v1439 = vld [vmem:[%s1238 + $0x1c] sm:$0xf]
          %v1440 = vld [vmem:[%s1238 + $0x20] sm:$0x1]
          %v1441 = vld [vmem:[%s1238 + $0x24] sm:$0xf]
          %v1442 = vld [vmem:[%s1238 + $0x28] sm:$0xf]
          %v1443 = vld [vmem:[%s1238 + $0x2c] sm:$0x1]
          %v1444 = vld [vmem:[%s1238 + $0x30] sm:$0xf]
          %v1445 = vld [vmem:[%s1238 + $0x34] sm:$0xf]
          %v1446 = vld [vmem:[%s1238 + $0x38] sm:$0x1]
          %v1447 = vld [vmem:[%s1238 + $0x3c] sm:$0xf]
          %v1448 = vld [vmem:[%s1238 + $0x40] sm:$0xf]
          %v1449 = vld [vmem:[%s1238 + $0x44] sm:$0x1]
          %v1450 = vld [vmem:[%s1238 + $0x48] sm:$0xf]
          %v1451 = vld [vmem:[%s1238 + $0x4c] sm:$0xf]
          %v1452 = vld [vmem:[%s1238 + $0x50] sm:$0x1]
          %v1453 = vld [vmem:[%s1238 + $0x54] sm:$0xf]
          %v1454 = vld [vmem:[%s1238 + $0x58] sm:$0xf]
          %v1455 = vld [vmem:[%s1238 + $0x5c] sm:$0x1]
          %v1456 = vld [vmem:[%s1238 + $0x60] sm:$0xf]
          %v1457 = vld [vmem:[%s1238 + $0x64] sm:$0xf]
          %v1458 = vld [vmem:[%s1238 + $0x68] sm:$0x1]
          %v1459 = vld [vmem:[%s1238 + $0x6c] sm:$0xf]
          %v1460 = vld [vmem:[%s1238 + $0x70] sm:$0xf]
          %v1461 = vld [vmem:[%s1238 + $0x74] sm:$0x1]
          %v1462 = vld [vmem:[%s1238 + $0x78] sm:$0xf]
          %v1463 = vld [vmem:[%s1238 + $0x7c] sm:$0xf]
          %v1464 = vld [vmem:[%s1238 + $0x80] sm:$0x1]
          %v1465 = vld [vmem:[%s1238 + $0x84] sm:$0xf]
          %v1466 = vld [vmem:[%s1238 + $0x88] sm:$0xf]
          %v1467 = vld [vmem:[%s1238 + $0x8c] sm:$0x1]
          %v1468 = vld [vmem:[%s1238 + $0x90] sm:$0xf]
          %v1469 = vld [vmem:[%s1238 + $0x94] sm:$0xf]
          %v1470 = vld [vmem:[%s1238 + $0x98] sm:$0x1]
          %v1471 = vld [vmem:[%s1238 + $0x9c] sm:$0xf]
          %v1472 = vld [vmem:[%s1238 + $0xa0] sm:$0xf]
          %v1473 = vld [vmem:[%s1238 + $0xa4] sm:$0x1]
          %v1474 = vld [vmem:[%s1238 + $0xa8] sm:$0xf]
          %v1475 = vld [vmem:[%s1238 + $0xac] sm:$0xf]
          %v1476 = vld [vmem:[%s1238 + $0xb0] sm:$0x1]
          %v1477 = vld [vmem:[%s1238 + $0xb4] sm:$0xf]
          %v1478 = vld [vmem:[%s1238 + $0xb8] sm:$0xf]
          %v1479 = vld [vmem:[%s1238 + $0xbc] sm:$0x1]
          %v1481 = vshrl.u32 %v1432, 16
          %v1483 = vrot.slane %v1481, 4
          %v1484 = vshll.u32 %v1432, 16
          %v1486 = vrot.slane %v1484, 5
          %v1487 = vor.u32 %v1483, %v1486
          %v1488 = vrot.slane %v1487, 4
          %v1490 = vshll.u32 %v1433, 16
          %v1492 = vrot.slane %v1490, 5
          %v1493 = vsel %vm381, %v1488, %v1492
          %v1494 = vshrl.u32 %v1433, 16
          %v1496 = vrot.slane %v1494, 4
          %v1497 = vor.u32 %v1496, %v1492
          %v1498 = vrot.slane %v1497, 4
          %v1500 = vshll.u32 %v1434, 16
          %v1502 = vrot.slane %v1500, 5
          %v1503 = vsel %vm381, %v1498, %v1502
          %v1505 = vshrl.u32 %v1435, 16
          %v1507 = vrot.slane %v1505, 4
          %v1508 = vshll.u32 %v1435, 16
          %v1510 = vrot.slane %v1508, 5
          %v1511 = vor.u32 %v1507, %v1510
          %v1512 = vrot.slane %v1511, 4
          %v1514 = vshll.u32 %v1436, 16
          %v1516 = vrot.slane %v1514, 5
          %v1517 = vsel %vm381, %v1512, %v1516
          %v1518 = vshrl.u32 %v1436, 16
          %v1520 = vrot.slane %v1518, 4
          %v1521 = vor.u32 %v1520, %v1516
          %v1522 = vrot.slane %v1521, 4
          %v1524 = vshll.u32 %v1437, 16
          %v1526 = vrot.slane %v1524, 5
          %v1527 = vsel %vm381, %v1522, %v1526
          %v1529 = vshrl.u32 %v1438, 16
          %v1531 = vrot.slane %v1529, 4
          %v1532 = vshll.u32 %v1438, 16
          %v1534 = vrot.slane %v1532, 5
          %v1535 = vor.u32 %v1531, %v1534
          %v1536 = vrot.slane %v1535, 4
          %v1538 = vshll.u32 %v1439, 16
          %v1540 = vrot.slane %v1538, 5
          %v1541 = vsel %vm381, %v1536, %v1540
          %v1542 = vshrl.u32 %v1439, 16
          %v1544 = vrot.slane %v1542, 4
          %v1545 = vor.u32 %v1544, %v1540
          %v1546 = vrot.slane %v1545, 4
          %v1548 = vshll.u32 %v1440, 16
          %v1550 = vrot.slane %v1548, 5
          %v1551 = vsel %vm381, %v1546, %v1550
          %v1553 = vshrl.u32 %v1441, 16
          %v1555 = vrot.slane %v1553, 4
          %v1556 = vshll.u32 %v1441, 16
          %v1558 = vrot.slane %v1556, 5
          %v1559 = vor.u32 %v1555, %v1558
          %v1560 = vrot.slane %v1559, 4
          %v1562 = vshll.u32 %v1442, 16
          %v1564 = vrot.slane %v1562, 5
          %v1565 = vsel %vm381, %v1560, %v1564
          %v1566 = vshrl.u32 %v1442, 16
          %v1568 = vrot.slane %v1566, 4
          %v1569 = vor.u32 %v1568, %v1564
          %v1570 = vrot.slane %v1569, 4
          %v1572 = vshll.u32 %v1443, 16
          %v1574 = vrot.slane %v1572, 5
          %v1575 = vsel %vm381, %v1570, %v1574
          %v1577 = vshrl.u32 %v1444, 16
          %v1579 = vrot.slane %v1577, 4
          %v1580 = vshll.u32 %v1444, 16
          %v1582 = vrot.slane %v1580, 5
          %v1583 = vor.u32 %v1579, %v1582
          %v1584 = vrot.slane %v1583, 4
          %v1586 = vshll.u32 %v1445, 16
          %v1588 = vrot.slane %v1586, 5
          %v1589 = vsel %vm381, %v1584, %v1588
          %v1590 = vshrl.u32 %v1445, 16
          %v1592 = vrot.slane %v1590, 4
          %v1593 = vor.u32 %v1592, %v1588
          %v1594 = vrot.slane %v1593, 4
          %v1596 = vshll.u32 %v1446, 16
          %v1598 = vrot.slane %v1596, 5
          %v1599 = vsel %vm381, %v1594, %v1598
          %v1601 = vshrl.u32 %v1447, 16
          %v1603 = vrot.slane %v1601, 4
          %v1604 = vshll.u32 %v1447, 16
          %v1606 = vrot.slane %v1604, 5
          %v1607 = vor.u32 %v1603, %v1606
          %v1608 = vrot.slane %v1607, 4
          %v1610 = vshll.u32 %v1448, 16
          %v1612 = vrot.slane %v1610, 5
          %v1613 = vsel %vm381, %v1608, %v1612
          %v1614 = vshrl.u32 %v1448, 16
          %v1616 = vrot.slane %v1614, 4
          %v1617 = vor.u32 %v1616, %v1612
          %v1618 = vrot.slane %v1617, 4
          %v1620 = vshll.u32 %v1449, 16
          %v1622 = vrot.slane %v1620, 5
          %v1623 = vsel %vm381, %v1618, %v1622
          %v1625 = vshrl.u32 %v1450, 16
          %v1627 = vrot.slane %v1625, 4
          %v1628 = vshll.u32 %v1450, 16
          %v1630 = vrot.slane %v1628, 5
          %v1631 = vor.u32 %v1627, %v1630
          %v1632 = vrot.slane %v1631, 4
          %v1634 = vshll.u32 %v1451, 16
          %v1636 = vrot.slane %v1634, 5
          %v1637 = vsel %vm381, %v1632, %v1636
          %v1638 = vshrl.u32 %v1451, 16
          %v1640 = vrot.slane %v1638, 4
          %v1641 = vor.u32 %v1640, %v1636
          %v1642 = vrot.slane %v1641, 4
          %v1644 = vshll.u32 %v1452, 16
          %v1646 = vrot.slane %v1644, 5
          %v1647 = vsel %vm381, %v1642, %v1646
          %v1649 = vshrl.u32 %v1453, 16
          %v1651 = vrot.slane %v1649, 4
          %v1652 = vshll.u32 %v1453, 16
          %v1654 = vrot.slane %v1652, 5
          %v1655 = vor.u32 %v1651, %v1654
          %v1656 = vrot.slane %v1655, 4
          %v1658 = vshll.u32 %v1454, 16
          %v1660 = vrot.slane %v1658, 5
          %v1661 = vsel %vm381, %v1656, %v1660
          %v1662 = vshrl.u32 %v1454, 16
          %v1664 = vrot.slane %v1662, 4
          %v1665 = vor.u32 %v1664, %v1660
          %v1666 = vrot.slane %v1665, 4
          %v1668 = vshll.u32 %v1455, 16
          %v1670 = vrot.slane %v1668, 5
          %v1671 = vsel %vm381, %v1666, %v1670
          %v1673 = vshrl.u32 %v1456, 16
          %v1675 = vrot.slane %v1673, 4
          %v1676 = vshll.u32 %v1456, 16
          %v1678 = vrot.slane %v1676, 5
          %v1679 = vor.u32 %v1675, %v1678
          %v1680 = vrot.slane %v1679, 4
          %v1682 = vshll.u32 %v1457, 16
          %v1684 = vrot.slane %v1682, 5
          %v1685 = vsel %vm381, %v1680, %v1684
          %v1686 = vshrl.u32 %v1457, 16
          %v1688 = vrot.slane %v1686, 4
          %v1689 = vor.u32 %v1688, %v1684
          %v1690 = vrot.slane %v1689, 4
          %v1692 = vshll.u32 %v1458, 16
          %v1694 = vrot.slane %v1692, 5
          %v1695 = vsel %vm381, %v1690, %v1694
          %v1697 = vshrl.u32 %v1459, 16
          %v1699 = vrot.slane %v1697, 4
          %v1700 = vshll.u32 %v1459, 16
          %v1702 = vrot.slane %v1700, 5
          %v1703 = vor.u32 %v1699, %v1702
          %v1704 = vrot.slane %v1703, 4
          %v1706 = vshll.u32 %v1460, 16
          %v1708 = vrot.slane %v1706, 5
          %v1709 = vsel %vm381, %v1704, %v1708
          %v1710 = vshrl.u32 %v1460, 16
          %v1712 = vrot.slane %v1710, 4
          %v1713 = vor.u32 %v1712, %v1708
          %v1714 = vrot.slane %v1713, 4
          %v1716 = vshll.u32 %v1461, 16
          %v1718 = vrot.slane %v1716, 5
          %v1719 = vsel %vm381, %v1714, %v1718
          %v1721 = vshrl.u32 %v1462, 16
          %v1723 = vrot.slane %v1721, 4
          %v1724 = vshll.u32 %v1462, 16
          %v1726 = vrot.slane %v1724, 5
          %v1727 = vor.u32 %v1723, %v1726
          %v1728 = vrot.slane %v1727, 4
          %v1730 = vshll.u32 %v1463, 16
          %v1732 = vrot.slane %v1730, 5
          %v1733 = vsel %vm381, %v1728, %v1732
          %v1734 = vshrl.u32 %v1463, 16
          %v1736 = vrot.slane %v1734, 4
          %v1737 = vor.u32 %v1736, %v1732
          %v1738 = vrot.slane %v1737, 4
          %v1740 = vshll.u32 %v1464, 16
          %v1742 = vrot.slane %v1740, 5
          %v1743 = vsel %vm381, %v1738, %v1742
          %v1745 = vshrl.u32 %v1465, 16
          %v1747 = vrot.slane %v1745, 4
          %v1748 = vshll.u32 %v1465, 16
          %v1750 = vrot.slane %v1748, 5
          %v1751 = vor.u32 %v1747, %v1750
          %v1752 = vrot.slane %v1751, 4
          %v1754 = vshll.u32 %v1466, 16
          %v1756 = vrot.slane %v1754, 5
          %v1757 = vsel %vm381, %v1752, %v1756
          %v1758 = vshrl.u32 %v1466, 16
          %v1760 = vrot.slane %v1758, 4
          %v1761 = vor.u32 %v1760, %v1756
          %v1762 = vrot.slane %v1761, 4
          %v1764 = vshll.u32 %v1467, 16
          %v1766 = vrot.slane %v1764, 5
          %v1767 = vsel %vm381, %v1762, %v1766
          %v1769 = vshrl.u32 %v1468, 16
          %v1771 = vrot.slane %v1769, 4
          %v1772 = vshll.u32 %v1468, 16
          %v1774 = vrot.slane %v1772, 5
          %v1775 = vor.u32 %v1771, %v1774
          %v1776 = vrot.slane %v1775, 4
          %v1778 = vshll.u32 %v1469, 16
          %v1780 = vrot.slane %v1778, 5
          %v1781 = vsel %vm381, %v1776, %v1780
          %v1782 = vshrl.u32 %v1469, 16
          %v1784 = vrot.slane %v1782, 4
          %v1785 = vor.u32 %v1784, %v1780
          %v1786 = vrot.slane %v1785, 4
          %v1788 = vshll.u32 %v1470, 16
          %v1790 = vrot.slane %v1788, 5
          %v1791 = vsel %vm381, %v1786, %v1790
          %v1793 = vshrl.u32 %v1471, 16
          %v1795 = vrot.slane %v1793, 4
          %v1796 = vshll.u32 %v1471, 16
          %v1798 = vrot.slane %v1796, 5
          %v1799 = vor.u32 %v1795, %v1798
          %v1800 = vrot.slane %v1799, 4
          %v1802 = vshll.u32 %v1472, 16
          %v1804 = vrot.slane %v1802, 5
          %v1805 = vsel %vm381, %v1800, %v1804
          %v1806 = vshrl.u32 %v1472, 16
          %v1808 = vrot.slane %v1806, 4
          %v1809 = vor.u32 %v1808, %v1804
          %v1810 = vrot.slane %v1809, 4
          %v1812 = vshll.u32 %v1473, 16
          %v1814 = vrot.slane %v1812, 5
          %v1815 = vsel %vm381, %v1810, %v1814
          %v1817 = vshrl.u32 %v1474, 16
          %v1819 = vrot.slane %v1817, 4
          %v1820 = vshll.u32 %v1474, 16
          %v1822 = vrot.slane %v1820, 5
          %v1823 = vor.u32 %v1819, %v1822
          %v1824 = vrot.slane %v1823, 4
          %v1826 = vshll.u32 %v1475, 16
          %v1828 = vrot.slane %v1826, 5
          %v1829 = vsel %vm381, %v1824, %v1828
          %v1830 = vshrl.u32 %v1475, 16
          %v1832 = vrot.slane %v1830, 4
          %v1833 = vor.u32 %v1832, %v1828
          %v1834 = vrot.slane %v1833, 4
          %v1836 = vshll.u32 %v1476, 16
          %v1838 = vrot.slane %v1836, 5
          %v1839 = vsel %vm381, %v1834, %v1838
          %v1841 = vshrl.u32 %v1477, 16
          %v1843 = vrot.slane %v1841, 4
          %v1844 = vshll.u32 %v1477, 16
          %v1846 = vrot.slane %v1844, 5
          %v1847 = vor.u32 %v1843, %v1846
          %v1848 = vrot.slane %v1847, 4
          %v1850 = vshll.u32 %v1478, 16
          %v1852 = vrot.slane %v1850, 5
          %v1853 = vsel %vm381, %v1848, %v1852
          %v1854 = vshrl.u32 %v1478, 16
          %v1856 = vrot.slane %v1854, 4
          %v1857 = vor.u32 %v1856, %v1852
          %v1858 = vrot.slane %v1857, 4
          %v1860 = vshll.u32 %v1479, 16
          %v1862 = vrot.slane %v1860, 5
          %v1863 = vsel %vm381, %v1858, %v1862
          %1864 = vrot.lane.b32.xlu0 %v1493, 16
          %v1865 = vpop.permute.xlu0 %1864
          %1866 = vrot.lane.b32.xlu0 %v1503, 16
          %v1867 = vpop.permute.xlu0 %1866
          %1868 = vrot.lane.b32.xlu0 %v1517, 16
          %v1869 = vpop.permute.xlu0 %1868
          %1870 = vrot.lane.b32.xlu0 %v1527, 16
          %v1871 = vpop.permute.xlu0 %1870
          %1872 = vrot.lane.b32.xlu0 %v1541, 16
          %v1873 = vpop.permute.xlu0 %1872
          %1874 = vrot.lane.b32.xlu0 %v1551, 16
          %v1875 = vpop.permute.xlu0 %1874
          %1876 = vrot.lane.b32.xlu0 %v1565, 16
          %v1877 = vpop.permute.xlu0 %1876
          %1878 = vrot.lane.b32.xlu0 %v1575, 16
          %v1879 = vpop.permute.xlu0 %1878
          %1880 = vrot.lane.b32.xlu0 %v1589, 16
          %v1881 = vpop.permute.xlu0 %1880
          %1882 = vrot.lane.b32.xlu0 %v1599, 16
          %v1883 = vpop.permute.xlu0 %1882
          %1884 = vrot.lane.b32.xlu0 %v1613, 16
          %v1885 = vpop.permute.xlu0 %1884
          %1886 = vrot.lane.b32.xlu0 %v1623, 16
          %v1887 = vpop.permute.xlu0 %1886
          %1888 = vrot.lane.b32.xlu0 %v1637, 16
          %v1889 = vpop.permute.xlu0 %1888
          %1890 = vrot.lane.b32.xlu0 %v1647, 16
          %v1891 = vpop.permute.xlu0 %1890
          %1892 = vrot.lane.b32.xlu0 %v1661, 16
          %v1893 = vpop.permute.xlu0 %1892
          %1894 = vrot.lane.b32.xlu0 %v1671, 16
          %v1895 = vpop.permute.xlu0 %1894
          %1896 = vrot.lane.b32.xlu0 %v1685, 16
          %v1897 = vpop.permute.xlu0 %1896
          %1898 = vrot.lane.b32.xlu0 %v1695, 16
          %v1899 = vpop.permute.xlu0 %1898
          %1900 = vrot.lane.b32.xlu0 %v1709, 16
          %v1901 = vpop.permute.xlu0 %1900
          %1902 = vrot.lane.b32.xlu0 %v1719, 16
          %v1903 = vpop.permute.xlu0 %1902
          %1904 = vrot.lane.b32.xlu0 %v1733, 16
          %v1905 = vpop.permute.xlu0 %1904
          %1906 = vrot.lane.b32.xlu0 %v1743, 16
          %v1907 = vpop.permute.xlu0 %1906
          %1908 = vrot.lane.b32.xlu0 %v1757, 16
          %v1909 = vpop.permute.xlu0 %1908
          %1910 = vrot.lane.b32.xlu0 %v1767, 16
          %v1911 = vpop.permute.xlu0 %1910
          %1912 = vrot.lane.b32.xlu0 %v1781, 16
          %v1913 = vpop.permute.xlu0 %1912
          %1914 = vrot.lane.b32.xlu0 %v1791, 16
          %v1915 = vpop.permute.xlu0 %1914
          %1916 = vrot.lane.b32.xlu0 %v1805, 16
          %v1917 = vpop.permute.xlu0 %1916
          %1918 = vrot.lane.b32.xlu0 %v1815, 16
          %v1919 = vpop.permute.xlu0 %1918
          %1920 = vrot.lane.b32.xlu0 %v1829, 16
          %v1921 = vpop.permute.xlu0 %1920
          %1922 = vrot.lane.b32.xlu0 %v1839, 16
          %v1923 = vpop.permute.xlu0 %1922
          %1924 = vrot.lane.b32.xlu0 %v1853, 16
          %v1925 = vpop.permute.xlu0 %1924
          %1926 = vrot.lane.b32.xlu0 %v1863, 16
          %v1927 = vpop.permute.xlu0 %1926
          %vm1960 = vcmask 158848
          %1961 = vst.msk [vmem:[#allocation2] sm:$0xf] %vm1960, %v1865
          %1962 = vst.msk [vmem:[#allocation2 + $0x4] sm:$0xf] %vm1960, %v1867
          %1963 = vst.msk [vmem:[#allocation2 + $0x8] sm:$0xf] %vm1960, %v1869
          %1964 = vst.msk [vmem:[#allocation2 + $0xc] sm:$0xf] %vm1960, %v1871
          %1965 = vst.msk [vmem:[#allocation2 + $0x10] sm:$0xf] %vm1960, %v1873
          %1966 = vst.msk [vmem:[#allocation2 + $0x14] sm:$0xf] %vm1960, %v1875
          %1967 = vst.msk [vmem:[#allocation2 + $0x18] sm:$0xf] %vm1960, %v1877
          %1968 = vst.msk [vmem:[#allocation2 + $0x1c] sm:$0xf] %vm1960, %v1879
          %1969 = vst.msk [vmem:[#allocation2 + $0x20] sm:$0xf] %vm1960, %v1881
          %1970 = vst.msk [vmem:[#allocation2 + $0x24] sm:$0xf] %vm1960, %v1883
          %1971 = vst.msk [vmem:[#allocation2 + $0x28] sm:$0xf] %vm1960, %v1885
          %1972 = vst.msk [vmem:[#allocation2 + $0x2c] sm:$0xf] %vm1960, %v1887
          %1973 = vst.msk [vmem:[#allocation2 + $0x30] sm:$0xf] %vm1960, %v1889
          %1974 = vst.msk [vmem:[#allocation2 + $0x34] sm:$0xf] %vm1960, %v1891
          %1975 = vst.msk [vmem:[#allocation2 + $0x38] sm:$0xf] %vm1960, %v1893
          %1976 = vst.msk [vmem:[#allocation2 + $0x3c] sm:$0xf] %vm1960, %v1895
          %1977 = vst.msk [vmem:[#allocation2 + $0x40] sm:$0xf] %vm1960, %v1897
          %1978 = vst.msk [vmem:[#allocation2 + $0x44] sm:$0xf] %vm1960, %v1899
          %1979 = vst.msk [vmem:[#allocation2 + $0x48] sm:$0xf] %vm1960, %v1901
          %1980 = vst.msk [vmem:[#allocation2 + $0x4c] sm:$0xf] %vm1960, %v1903
          %1981 = vst.msk [vmem:[#allocation2 + $0x50] sm:$0xf] %vm1960, %v1905
          %1982 = vst.msk [vmem:[#allocation2 + $0x54] sm:$0xf] %vm1960, %v1907
          %1983 = vst.msk [vmem:[#allocation2 + $0x58] sm:$0xf] %vm1960, %v1909
          %1984 = vst.msk [vmem:[#allocation2 + $0x5c] sm:$0xf] %vm1960, %v1911
          %1985 = vst.msk [vmem:[#allocation2 + $0x60] sm:$0xf] %vm1960, %v1913
          %1986 = vst.msk [vmem:[#allocation2 + $0x64] sm:$0xf] %vm1960, %v1915
          %1987 = vst.msk [vmem:[#allocation2 + $0x68] sm:$0xf] %vm1960, %v1917
          %1988 = vst.msk [vmem:[#allocation2 + $0x6c] sm:$0xf] %vm1960, %v1919
          %1989 = vst.msk [vmem:[#allocation2 + $0x70] sm:$0xf] %vm1960, %v1921
          %1990 = vst.msk [vmem:[#allocation2 + $0x74] sm:$0xf] %vm1960, %v1923
          %1991 = vst.msk [vmem:[#allocation2 + $0x78] sm:$0xf] %vm1960, %v1925
          %1992 = vst.msk [vmem:[#allocation2 + $0x7c] sm:$0xf] %vm1960, %v1927
          %v1993 = vld [vmem:[%s1238] sm:$0xe]
          %v1994 = vld [vmem:[%s1238 + $0x4] sm:$0xf]
          %v1995 = vld [vmem:[%s1238 + $0x8] sm:$0x1]
          %v1996 = vld [vmem:[%s1238 + $0xc] sm:$0xe]
          %v1997 = vld [vmem:[%s1238 + $0x10] sm:$0xf]
          %v1998 = vld [vmem:[%s1238 + $0x14] sm:$0x1]
          %v1999 = vld [vmem:[%s1238 + $0x18] sm:$0xe]
          %v2000 = vld [vmem:[%s1238 + $0x1c] sm:$0xf]
          %v2001 = vld [vmem:[%s1238 + $0x20] sm:$0x1]
          %v2002 = vld [vmem:[%s1238 + $0x24] sm:$0xe]
          %v2003 = vld [vmem:[%s1238 + $0x28] sm:$0xf]
          %v2004 = vld [vmem:[%s1238 + $0x2c] sm:$0x1]
          %v2005 = vld [vmem:[%s1238 + $0x30] sm:$0xe]
          %v2006 = vld [vmem:[%s1238 + $0x34] sm:$0xf]
          %v2007 = vld [vmem:[%s1238 + $0x38] sm:$0x1]
          %v2008 = vld [vmem:[%s1238 + $0x3c] sm:$0xe]
          %v2009 = vld [vmem:[%s1238 + $0x40] sm:$0xf]
          %v2010 = vld [vmem:[%s1238 + $0x44] sm:$0x1]
          %v2011 = vld [vmem:[%s1238 + $0x48] sm:$0xe]
          %v2012 = vld [vmem:[%s1238 + $0x4c] sm:$0xf]
          %v2013 = vld [vmem:[%s1238 + $0x50] sm:$0x1]
          %v2014 = vld [vmem:[%s1238 + $0x54] sm:$0xe]
          %v2015 = vld [vmem:[%s1238 + $0x58] sm:$0xf]
          %v2016 = vld [vmem:[%s1238 + $0x5c] sm:$0x1]
          %v2017 = vld [vmem:[%s1238 + $0x60] sm:$0xe]
          %v2018 = vld [vmem:[%s1238 + $0x64] sm:$0xf]
          %v2019 = vld [vmem:[%s1238 + $0x68] sm:$0x1]
          %v2020 = vld [vmem:[%s1238 + $0x6c] sm:$0xe]
          %v2021 = vld [vmem:[%s1238 + $0x70] sm:$0xf]
          %v2022 = vld [vmem:[%s1238 + $0x74] sm:$0x1]
          %v2023 = vld [vmem:[%s1238 + $0x78] sm:$0xe]
          %v2024 = vld [vmem:[%s1238 + $0x7c] sm:$0xf]
          %v2025 = vld [vmem:[%s1238 + $0x80] sm:$0x1]
          %v2026 = vld [vmem:[%s1238 + $0x84] sm:$0xe]
          %v2027 = vld [vmem:[%s1238 + $0x88] sm:$0xf]
          %v2028 = vld [vmem:[%s1238 + $0x8c] sm:$0x1]
          %v2029 = vld [vmem:[%s1238 + $0x90] sm:$0xe]
          %v2030 = vld [vmem:[%s1238 + $0x94] sm:$0xf]
          %v2031 = vld [vmem:[%s1238 + $0x98] sm:$0x1]
          %v2032 = vld [vmem:[%s1238 + $0x9c] sm:$0xe]
          %v2033 = vld [vmem:[%s1238 + $0xa0] sm:$0xf]
          %v2034 = vld [vmem:[%s1238 + $0xa4] sm:$0x1]
          %v2035 = vld [vmem:[%s1238 + $0xa8] sm:$0xe]
          %v2036 = vld [vmem:[%s1238 + $0xac] sm:$0xf]
          %v2037 = vld [vmem:[%s1238 + $0xb0] sm:$0x1]
          %v2038 = vld [vmem:[%s1238 + $0xb4] sm:$0xe]
          %v2039 = vld [vmem:[%s1238 + $0xb8] sm:$0xf]
          %v2040 = vld [vmem:[%s1238 + $0xbc] sm:$0x1]
          %v2089 = vrot.slane %v1993, 5
          %v2090 = vrot.slane %v2089, 4
          %v2091 = vrot.slane %v1994, 5
          %v2092 = vsel %vm993, %v2090, %v2091
          %v2093 = vrot.slane %v2091, 4
          %v2094 = vrot.slane %v1995, 5
          %v2095 = vsel %vm993, %v2093, %v2094
          %v2096 = vrot.slane %v1996, 5
          %v2097 = vrot.slane %v2096, 4
          %v2098 = vrot.slane %v1997, 5
          %v2099 = vsel %vm993, %v2097, %v2098
          %v2100 = vrot.slane %v2098, 4
          %v2101 = vrot.slane %v1998, 5
          %v2102 = vsel %vm993, %v2100, %v2101
          %v2103 = vrot.slane %v1999, 5
          %v2104 = vrot.slane %v2103, 4
          %v2105 = vrot.slane %v2000, 5
          %v2106 = vsel %vm993, %v2104, %v2105
          %v2107 = vrot.slane %v2105, 4
          %v2108 = vrot.slane %v2001, 5
          %v2109 = vsel %vm993, %v2107, %v2108
          %v2110 = vrot.slane %v2002, 5
          %v2111 = vrot.slane %v2110, 4
          %v2112 = vrot.slane %v2003, 5
          %v2113 = vsel %vm993, %v2111, %v2112
          %v2114 = vrot.slane %v2112, 4
          %v2115 = vrot.slane %v2004, 5
          %v2116 = vsel %vm993, %v2114, %v2115
          %v2117 = vrot.slane %v2005, 5
          %v2118 = vrot.slane %v2117, 4
          %v2119 = vrot.slane %v2006, 5
          %v2120 = vsel %vm993, %v2118, %v2119
          %v2121 = vrot.slane %v2119, 4
          %v2122 = vrot.slane %v2007, 5
          %v2123 = vsel %vm993, %v2121, %v2122
          %v2124 = vrot.slane %v2008, 5
          %v2125 = vrot.slane %v2124, 4
          %v2126 = vrot.slane %v2009, 5
          %v2127 = vsel %vm993, %v2125, %v2126
          %v2128 = vrot.slane %v2126, 4
          %v2129 = vrot.slane %v2010, 5
          %v2130 = vsel %vm993, %v2128, %v2129
          %v2131 = vrot.slane %v2011, 5
          %v2132 = vrot.slane %v2131, 4
          %v2133 = vrot.slane %v2012, 5
          %v2134 = vsel %vm993, %v2132, %v2133
          %v2135 = vrot.slane %v2133, 4
          %v2136 = vrot.slane %v2013, 5
          %v2137 = vsel %vm993, %v2135, %v2136
          %v2138 = vrot.slane %v2014, 5
          %v2139 = vrot.slane %v2138, 4
          %v2140 = vrot.slane %v2015, 5
          %v2141 = vsel %vm993, %v2139, %v2140
          %v2142 = vrot.slane %v2140, 4
          %v2143 = vrot.slane %v2016, 5
          %v2144 = vsel %vm993, %v2142, %v2143
          %v2145 = vrot.slane %v2017, 5
          %v2146 = vrot.slane %v2145, 4
          %v2147 = vrot.slane %v2018, 5
          %v2148 = vsel %vm993, %v2146, %v2147
          %v2149 = vrot.slane %v2147, 4
          %v2150 = vrot.slane %v2019, 5
          %v2151 = vsel %vm993, %v2149, %v2150
          %v2152 = vrot.slane %v2020, 5
          %v2153 = vrot.slane %v2152, 4
          %v2154 = vrot.slane %v2021, 5
          %v2155 = vsel %vm993, %v2153, %v2154
          %v2156 = vrot.slane %v2154, 4
          %v2157 = vrot.slane %v2022, 5
          %v2158 = vsel %vm993, %v2156, %v2157
          %v2159 = vrot.slane %v2023, 5
          %v2160 = vrot.slane %v2159, 4
          %v2161 = vrot.slane %v2024, 5
          %v2162 = vsel %vm993, %v2160, %v2161
          %v2163 = vrot.slane %v2161, 4
          %v2164 = vrot.slane %v2025, 5
          %v2165 = vsel %vm993, %v2163, %v2164
          %v2166 = vrot.slane %v2026, 5
          %v2167 = vrot.slane %v2166, 4
          %v2168 = vrot.slane %v2027, 5
          %v2169 = vsel %vm993, %v2167, %v2168
          %v2170 = vrot.slane %v2168, 4
          %v2171 = vrot.slane %v2028, 5
          %v2172 = vsel %vm993, %v2170, %v2171
          %v2173 = vrot.slane %v2029, 5
          %v2174 = vrot.slane %v2173, 4
          %v2175 = vrot.slane %v2030, 5
          %v2176 = vsel %vm993, %v2174, %v2175
          %v2177 = vrot.slane %v2175, 4
          %v2178 = vrot.slane %v2031, 5
          %v2179 = vsel %vm993, %v2177, %v2178
          %v2180 = vrot.slane %v2032, 5
          %v2181 = vrot.slane %v2180, 4
          %v2182 = vrot.slane %v2033, 5
          %v2183 = vsel %vm993, %v2181, %v2182
          %v2184 = vrot.slane %v2182, 4
          %v2185 = vrot.slane %v2034, 5
          %v2186 = vsel %vm993, %v2184, %v2185
          %v2187 = vrot.slane %v2035, 5
          %v2188 = vrot.slane %v2187, 4
          %v2189 = vrot.slane %v2036, 5
          %v2190 = vsel %vm993, %v2188, %v2189
          %v2191 = vrot.slane %v2189, 4
          %v2192 = vrot.slane %v2037, 5
          %v2193 = vsel %vm993, %v2191, %v2192
          %v2194 = vrot.slane %v2038, 5
          %v2195 = vrot.slane %v2194, 4
          %v2196 = vrot.slane %v2039, 5
          %v2197 = vsel %vm993, %v2195, %v2196
          %v2198 = vrot.slane %v2196, 4
          %v2199 = vrot.slane %v2040, 5
          %v2200 = vsel %vm993, %v2198, %v2199
          %2201 = vrot.lane.b32.xlu0 %v2092, 20
          %v2202 = vpop.permute.xlu0 %2201
          %2203 = vrot.lane.b32.xlu0 %v2095, 20
          %v2204 = vpop.permute.xlu0 %2203
          %2205 = vrot.lane.b32.xlu0 %v2099, 20
          %v2206 = vpop.permute.xlu0 %2205
          %2207 = vrot.lane.b32.xlu0 %v2102, 20
          %v2208 = vpop.permute.xlu0 %2207
          %2209 = vrot.lane.b32.xlu0 %v2106, 20
          %v2210 = vpop.permute.xlu0 %2209
          %2211 = vrot.lane.b32.xlu0 %v2109, 20
          %v2212 = vpop.permute.xlu0 %2211
          %2213 = vrot.lane.b32.xlu0 %v2113, 20
          %v2214 = vpop.permute.xlu0 %2213
          %2215 = vrot.lane.b32.xlu0 %v2116, 20
          %v2216 = vpop.permute.xlu0 %2215
          %2217 = vrot.lane.b32.xlu0 %v2120, 20
          %v2218 = vpop.permute.xlu0 %2217
          %2219 = vrot.lane.b32.xlu0 %v2123, 20
          %v2220 = vpop.permute.xlu0 %2219
          %2221 = vrot.lane.b32.xlu0 %v2127, 20
          %v2222 = vpop.permute.xlu0 %2221
          %2223 = vrot.lane.b32.xlu0 %v2130, 20
          %v2224 = vpop.permute.xlu0 %2223
          %2225 = vrot.lane.b32.xlu0 %v2134, 20
          %v2226 = vpop.permute.xlu0 %2225
          %2227 = vrot.lane.b32.xlu0 %v2137, 20
          %v2228 = vpop.permute.xlu0 %2227
          %2229 = vrot.lane.b32.xlu0 %v2141, 20
          %v2230 = vpop.permute.xlu0 %2229
          %2231 = vrot.lane.b32.xlu0 %v2144, 20
          %v2232 = vpop.permute.xlu0 %2231
          %2233 = vrot.lane.b32.xlu0 %v2148, 20
          %v2234 = vpop.permute.xlu0 %2233
          %2235 = vrot.lane.b32.xlu0 %v2151, 20
          %v2236 = vpop.permute.xlu0 %2235
          %2237 = vrot.lane.b32.xlu0 %v2155, 20
          %v2238 = vpop.permute.xlu0 %2237
          %2239 = vrot.lane.b32.xlu0 %v2158, 20
          %v2240 = vpop.permute.xlu0 %2239
          %2241 = vrot.lane.b32.xlu0 %v2162, 20
          %v2242 = vpop.permute.xlu0 %2241
          %2243 = vrot.lane.b32.xlu0 %v2165, 20
          %v2244 = vpop.permute.xlu0 %2243
          %2245 = vrot.lane.b32.xlu0 %v2169, 20
          %v2246 = vpop.permute.xlu0 %2245
          %2247 = vrot.lane.b32.xlu0 %v2172, 20
          %v2248 = vpop.permute.xlu0 %2247
          %2249 = vrot.lane.b32.xlu0 %v2176, 20
          %v2250 = vpop.permute.xlu0 %2249
          %2251 = vrot.lane.b32.xlu0 %v2179, 20
          %v2252 = vpop.permute.xlu0 %2251
          %2253 = vrot.lane.b32.xlu0 %v2183, 20
          %v2254 = vpop.permute.xlu0 %2253
          %2255 = vrot.lane.b32.xlu0 %v2186, 20
          %v2256 = vpop.permute.xlu0 %2255
          %2257 = vrot.lane.b32.xlu0 %v2190, 20
          %v2258 = vpop.permute.xlu0 %2257
          %2259 = vrot.lane.b32.xlu0 %v2193, 20
          %v2260 = vpop.permute.xlu0 %2259
          %2261 = vrot.lane.b32.xlu0 %v2197, 20
          %v2262 = vpop.permute.xlu0 %2261
          %2263 = vrot.lane.b32.xlu0 %v2200, 20
          %v2264 = vpop.permute.xlu0 %2263
          %vm2297 = vcmask 191648
          %2298 = vst.msk [vmem:[#allocation2] sm:$0xf] %vm2297, %v2202
          %2299 = vst.msk [vmem:[#allocation2 + $0x4] sm:$0xf] %vm2297, %v2204
          %2300 = vst.msk [vmem:[#allocation2 + $0x8] sm:$0xf] %vm2297, %v2206
          %2301 = vst.msk [vmem:[#allocation2 + $0xc] sm:$0xf] %vm2297, %v2208
          %2302 = vst.msk [vmem:[#allocation2 + $0x10] sm:$0xf] %vm2297, %v2210
          %2303 = vst.msk [vmem:[#allocation2 + $0x14] sm:$0xf] %vm2297, %v2212
          %2304 = vst.msk [vmem:[#allocation2 + $0x18] sm:$0xf] %vm2297, %v2214
          %2305 = vst.msk [vmem:[#allocation2 + $0x1c] sm:$0xf] %vm2297, %v2216
          %2306 = vst.msk [vmem:[#allocation2 + $0x20] sm:$0xf] %vm2297, %v2218
          %2307 = vst.msk [vmem:[#allocation2 + $0x24] sm:$0xf] %vm2297, %v2220
          %2308 = vst.msk [vmem:[#allocation2 + $0x28] sm:$0xf] %vm2297, %v2222
          %2309 = vst.msk [vmem:[#allocation2 + $0x2c] sm:$0xf] %vm2297, %v2224
          %2310 = vst.msk [vmem:[#allocation2 + $0x30] sm:$0xf] %vm2297, %v2226
          %2311 = vst.msk [vmem:[#allocation2 + $0x34] sm:$0xf] %vm2297, %v2228
          %2312 = vst.msk [vmem:[#allocation2 + $0x38] sm:$0xf] %vm2297, %v2230
          %2313 = vst.msk [vmem:[#allocation2 + $0x3c] sm:$0xf] %vm2297, %v2232
          %2314 = vst.msk [vmem:[#allocation2 + $0x40] sm:$0xf] %vm2297, %v2234
          %2315 = vst.msk [vmem:[#allocation2 + $0x44] sm:$0xf] %vm2297, %v2236
          %2316 = vst.msk [vmem:[#allocation2 + $0x48] sm:$0xf] %vm2297, %v2238
          %2317 = vst.msk [vmem:[#allocation2 + $0x4c] sm:$0xf] %vm2297, %v2240
          %2318 = vst.msk [vmem:[#allocation2 + $0x50] sm:$0xf] %vm2297, %v2242
          %2319 = vst.msk [vmem:[#allocation2 + $0x54] sm:$0xf] %vm2297, %v2244
          %2320 = vst.msk [vmem:[#allocation2 + $0x58] sm:$0xf] %vm2297, %v2246
          %2321 = vst.msk [vmem:[#allocation2 + $0x5c] sm:$0xf] %vm2297, %v2248
          %2322 = vst.msk [vmem:[#allocation2 + $0x60] sm:$0xf] %vm2297, %v2250
          %2323 = vst.msk [vmem:[#allocation2 + $0x64] sm:$0xf] %vm2297, %v2252
          %2324 = vst.msk [vmem:[#allocation2 + $0x68] sm:$0xf] %vm2297, %v2254
          %2325 = vst.msk [vmem:[#allocation2 + $0x6c] sm:$0xf] %vm2297, %v2256
          %2326 = vst.msk [vmem:[#allocation2 + $0x70] sm:$0xf] %vm2297, %v2258
          %2327 = vst.msk [vmem:[#allocation2 + $0x74] sm:$0xf] %vm2297, %v2260
          %2328 = vst.msk [vmem:[#allocation2 + $0x78] sm:$0xf] %vm2297, %v2262
          %2329 = vst.msk [vmem:[#allocation2 + $0x7c] sm:$0xf] %vm2297, %v2264
          %s2330 = sadd.s32 %s225, 2
          %s2331 = smul.u32 %s2330, 3
          %s2332 = smul.addr %s2331, 4
          %s2333 = scalar_lea.vmem %s215, %s2332
          %v2334 = vld [vmem:[%s2333] sm:$0xf]
          %v2335 = vld [vmem:[%s2333 + $0x4] sm:$0xf]
          %v2336 = vld [vmem:[%s2333 + $0xc] sm:$0xf]
          %v2337 = vld [vmem:[%s2333 + $0x10] sm:$0xf]
          %v2338 = vld [vmem:[%s2333 + $0x18] sm:$0xf]
          %v2339 = vld [vmem:[%s2333 + $0x1c] sm:$0xf]
          %v2340 = vld [vmem:[%s2333 + $0x24] sm:$0xf]
          %v2341 = vld [vmem:[%s2333 + $0x28] sm:$0xf]
          %v2342 = vld [vmem:[%s2333 + $0x30] sm:$0xf]
          %v2343 = vld [vmem:[%s2333 + $0x34] sm:$0xf]
          %v2344 = vld [vmem:[%s2333 + $0x3c] sm:$0xf]
          %v2345 = vld [vmem:[%s2333 + $0x40] sm:$0xf]
          %v2346 = vld [vmem:[%s2333 + $0x48] sm:$0xf]
          %v2347 = vld [vmem:[%s2333 + $0x4c] sm:$0xf]
          %v2348 = vld [vmem:[%s2333 + $0x54] sm:$0xf]
          %v2349 = vld [vmem:[%s2333 + $0x58] sm:$0xf]
          %v2350 = vld [vmem:[%s2333 + $0x60] sm:$0xf]
          %v2351 = vld [vmem:[%s2333 + $0x64] sm:$0xf]
          %v2352 = vld [vmem:[%s2333 + $0x6c] sm:$0xf]
          %v2353 = vld [vmem:[%s2333 + $0x70] sm:$0xf]
          %v2354 = vld [vmem:[%s2333 + $0x78] sm:$0xf]
          %v2355 = vld [vmem:[%s2333 + $0x7c] sm:$0xf]
          %v2356 = vld [vmem:[%s2333 + $0x84] sm:$0xf]
          %v2357 = vld [vmem:[%s2333 + $0x88] sm:$0xf]
          %v2358 = vld [vmem:[%s2333 + $0x90] sm:$0xf]
          %v2359 = vld [vmem:[%s2333 + $0x94] sm:$0xf]
          %v2360 = vld [vmem:[%s2333 + $0x9c] sm:$0xf]
          %v2361 = vld [vmem:[%s2333 + $0xa0] sm:$0xf]
          %v2362 = vld [vmem:[%s2333 + $0xa8] sm:$0xf]
          %v2363 = vld [vmem:[%s2333 + $0xac] sm:$0xf]
          %v2364 = vld [vmem:[%s2333 + $0xb4] sm:$0xf]
          %v2365 = vld [vmem:[%s2333 + $0xb8] sm:$0xf]
          %2398 = vrot.lane.b32.xlu0 %v2334, 24
          %v2399 = vpop.permute.xlu0 %2398
          %2400 = vrot.lane.b32.xlu0 %v2335, 24
          %v2401 = vpop.permute.xlu0 %2400
          %2402 = vrot.lane.b32.xlu0 %v2336, 24
          %v2403 = vpop.permute.xlu0 %2402
          %2404 = vrot.lane.b32.xlu0 %v2337, 24
          %v2405 = vpop.permute.xlu0 %2404
          %2406 = vrot.lane.b32.xlu0 %v2338, 24
          %v2407 = vpop.permute.xlu0 %2406
          %2408 = vrot.lane.b32.xlu0 %v2339, 24
          %v2409 = vpop.permute.xlu0 %2408
          %2410 = vrot.lane.b32.xlu0 %v2340, 24
          %v2411 = vpop.permute.xlu0 %2410
          %2412 = vrot.lane.b32.xlu0 %v2341, 24
          %v2413 = vpop.permute.xlu0 %2412
          %2414 = vrot.lane.b32.xlu0 %v2342, 24
          %v2415 = vpop.permute.xlu0 %2414
          %2416 = vrot.lane.b32.xlu0 %v2343, 24
          %v2417 = vpop.permute.xlu0 %2416
          %2418 = vrot.lane.b32.xlu0 %v2344, 24
          %v2419 = vpop.permute.xlu0 %2418
          %2420 = vrot.lane.b32.xlu0 %v2345, 24
          %v2421 = vpop.permute.xlu0 %2420
          %2422 = vrot.lane.b32.xlu0 %v2346, 24
          %v2423 = vpop.permute.xlu0 %2422
          %2424 = vrot.lane.b32.xlu0 %v2347, 24
          %v2425 = vpop.permute.xlu0 %2424
          %2426 = vrot.lane.b32.xlu0 %v2348, 24
          %v2427 = vpop.permute.xlu0 %2426
          %2428 = vrot.lane.b32.xlu0 %v2349, 24
          %v2429 = vpop.permute.xlu0 %2428
          %2430 = vrot.lane.b32.xlu0 %v2350, 24
          %v2431 = vpop.permute.xlu0 %2430
          %2432 = vrot.lane.b32.xlu0 %v2351, 24
          %v2433 = vpop.permute.xlu0 %2432
          %2434 = vrot.lane.b32.xlu0 %v2352, 24
          %v2435 = vpop.permute.xlu0 %2434
          %2436 = vrot.lane.b32.xlu0 %v2353, 24
          %v2437 = vpop.permute.xlu0 %2436
          %2438 = vrot.lane.b32.xlu0 %v2354, 24
          %v2439 = vpop.permute.xlu0 %2438
          %2440 = vrot.lane.b32.xlu0 %v2355, 24
          %v2441 = vpop.permute.xlu0 %2440
          %2442 = vrot.lane.b32.xlu0 %v2356, 24
          %v2443 = vpop.permute.xlu0 %2442
          %2444 = vrot.lane.b32.xlu0 %v2357, 24
          %v2445 = vpop.permute.xlu0 %2444
          %2446 = vrot.lane.b32.xlu0 %v2358, 24
          %v2447 = vpop.permute.xlu0 %2446
          %2448 = vrot.lane.b32.xlu0 %v2359, 24
          %v2449 = vpop.permute.xlu0 %2448
          %2450 = vrot.lane.b32.xlu0 %v2360, 24
          %v2451 = vpop.permute.xlu0 %2450
          %2452 = vrot.lane.b32.xlu0 %v2361, 24
          %v2453 = vpop.permute.xlu0 %2452
          %2454 = vrot.lane.b32.xlu0 %v2362, 24
          %v2455 = vpop.permute.xlu0 %2454
          %2456 = vrot.lane.b32.xlu0 %v2363, 24
          %v2457 = vpop.permute.xlu0 %2456
          %2458 = vrot.lane.b32.xlu0 %v2364, 24
          %v2459 = vpop.permute.xlu0 %2458
          %2460 = vrot.lane.b32.xlu0 %v2365, 24
          %v2461 = vpop.permute.xlu0 %2460
          %vm2494 = vcmask 224448
          %2495 = vst.msk [vmem:[#allocation2] sm:$0xf] %vm2494, %v2399
          %2496 = vst.msk [vmem:[#allocation2 + $0x4] sm:$0xf] %vm2494, %v2401
          %2497 = vst.msk [vmem:[#allocation2 + $0x8] sm:$0xf] %vm2494, %v2403
          %2498 = vst.msk [vmem:[#allocation2 + $0xc] sm:$0xf] %vm2494, %v2405
          %2499 = vst.msk [vmem:[#allocation2 + $0x10] sm:$0xf] %vm2494, %v2407
          %2500 = vst.msk [vmem:[#allocation2 + $0x14] sm:$0xf] %vm2494, %v2409
          %2501 = vst.msk [vmem:[#allocation2 + $0x18] sm:$0xf] %vm2494, %v2411
          %2502 = vst.msk [vmem:[#allocation2 + $0x1c] sm:$0xf] %vm2494, %v2413
          %2503 = vst.msk [vmem:[#allocation2 + $0x20] sm:$0xf] %vm2494, %v2415
          %2504 = vst.msk [vmem:[#allocation2 + $0x24] sm:$0xf] %vm2494, %v2417
          %2505 = vst.msk [vmem:[#allocation2 + $0x28] sm:$0xf] %vm2494, %v2419
          %2506 = vst.msk [vmem:[#allocation2 + $0x2c] sm:$0xf] %vm2494, %v2421
          %2507 = vst.msk [vmem:[#allocation2 + $0x30] sm:$0xf] %vm2494, %v2423
          %2508 = vst.msk [vmem:[#allocation2 + $0x34] sm:$0xf] %vm2494, %v2425
          %2509 = vst.msk [vmem:[#allocation2 + $0x38] sm:$0xf] %vm2494, %v2427
          %2510 = vst.msk [vmem:[#allocation2 + $0x3c] sm:$0xf] %vm2494, %v2429
          %2511 = vst.msk [vmem:[#allocation2 + $0x40] sm:$0xf] %vm2494, %v2431
          %2512 = vst.msk [vmem:[#allocation2 + $0x44] sm:$0xf] %vm2494, %v2433
          %2513 = vst.msk [vmem:[#allocation2 + $0x48] sm:$0xf] %vm2494, %v2435
          %2514 = vst.msk [vmem:[#allocation2 + $0x4c] sm:$0xf] %vm2494, %v2437
          %2515 = vst.msk [vmem:[#allocation2 + $0x50] sm:$0xf] %vm2494, %v2439
          %2516 = vst.msk [vmem:[#allocation2 + $0x54] sm:$0xf] %vm2494, %v2441
          %2517 = vst.msk [vmem:[#allocation2 + $0x58] sm:$0xf] %vm2494, %v2443
          %2518 = vst.msk [vmem:[#allocation2 + $0x5c] sm:$0xf] %vm2494, %v2445
          %2519 = vst.msk [vmem:[#allocation2 + $0x60] sm:$0xf] %vm2494, %v2447
          %2520 = vst.msk [vmem:[#allocation2 + $0x64] sm:$0xf] %vm2494, %v2449
          %2521 = vst.msk [vmem:[#allocation2 + $0x68] sm:$0xf] %vm2494, %v2451
          %2522 = vst.msk [vmem:[#allocation2 + $0x6c] sm:$0xf] %vm2494, %v2453
          %2523 = vst.msk [vmem:[#allocation2 + $0x70] sm:$0xf] %vm2494, %v2455
          %2524 = vst.msk [vmem:[#allocation2 + $0x74] sm:$0xf] %vm2494, %v2457
          %2525 = vst.msk [vmem:[#allocation2 + $0x78] sm:$0xf] %vm2494, %v2459
          %2526 = vst.msk [vmem:[#allocation2 + $0x7c] sm:$0xf] %vm2494, %v2461
          %v2527 = vld [vmem:[%s2333] sm:$0xf]
          %v2528 = vld [vmem:[%s2333 + $0x4] sm:$0xf]
          %v2529 = vld [vmem:[%s2333 + $0x8] sm:$0x1]
          %v2530 = vld [vmem:[%s2333 + $0xc] sm:$0xf]
          %v2531 = vld [vmem:[%s2333 + $0x10] sm:$0xf]
          %v2532 = vld [vmem:[%s2333 + $0x14] sm:$0x1]
          %v2533 = vld [vmem:[%s2333 + $0x18] sm:$0xf]
          %v2534 = vld [vmem:[%s2333 + $0x1c] sm:$0xf]
          %v2535 = vld [vmem:[%s2333 + $0x20] sm:$0x1]
          %v2536 = vld [vmem:[%s2333 + $0x24] sm:$0xf]
          %v2537 = vld [vmem:[%s2333 + $0x28] sm:$0xf]
          %v2538 = vld [vmem:[%s2333 + $0x2c] sm:$0x1]
          %v2539 = vld [vmem:[%s2333 + $0x30] sm:$0xf]
          %v2540 = vld [vmem:[%s2333 + $0x34] sm:$0xf]
          %v2541 = vld [vmem:[%s2333 + $0x38] sm:$0x1]
          %v2542 = vld [vmem:[%s2333 + $0x3c] sm:$0xf]
          %v2543 = vld [vmem:[%s2333 + $0x40] sm:$0xf]
          %v2544 = vld [vmem:[%s2333 + $0x44] sm:$0x1]
          %v2545 = vld [vmem:[%s2333 + $0x48] sm:$0xf]
          %v2546 = vld [vmem:[%s2333 + $0x4c] sm:$0xf]
          %v2547 = vld [vmem:[%s2333 + $0x50] sm:$0x1]
          %v2548 = vld [vmem:[%s2333 + $0x54] sm:$0xf]
          %v2549 = vld [vmem:[%s2333 + $0x58] sm:$0xf]
          %v2550 = vld [vmem:[%s2333 + $0x5c] sm:$0x1]
          %v2551 = vld [vmem:[%s2333 + $0x60] sm:$0xf]
          %v2552 = vld [vmem:[%s2333 + $0x64] sm:$0xf]
          %v2553 = vld [vmem:[%s2333 + $0x68] sm:$0x1]
          %v2554 = vld [vmem:[%s2333 + $0x6c] sm:$0xf]
          %v2555 = vld [vmem:[%s2333 + $0x70] sm:$0xf]
          %v2556 = vld [vmem:[%s2333 + $0x74] sm:$0x1]
          %v2557 = vld [vmem:[%s2333 + $0x78] sm:$0xf]
          %v2558 = vld [vmem:[%s2333 + $0x7c] sm:$0xf]
          %v2559 = vld [vmem:[%s2333 + $0x80] sm:$0x1]
          %v2560 = vld [vmem:[%s2333 + $0x84] sm:$0xf]
          %v2561 = vld [vmem:[%s2333 + $0x88] sm:$0xf]
          %v2562 = vld [vmem:[%s2333 + $0x8c] sm:$0x1]
          %v2563 = vld [vmem:[%s2333 + $0x90] sm:$0xf]
          %v2564 = vld [vmem:[%s2333 + $0x94] sm:$0xf]
          %v2565 = vld [vmem:[%s2333 + $0x98] sm:$0x1]
          %v2566 = vld [vmem:[%s2333 + $0x9c] sm:$0xf]
          %v2567 = vld [vmem:[%s2333 + $0xa0] sm:$0xf]
          %v2568 = vld [vmem:[%s2333 + $0xa4] sm:$0x1]
          %v2569 = vld [vmem:[%s2333 + $0xa8] sm:$0xf]
          %v2570 = vld [vmem:[%s2333 + $0xac] sm:$0xf]
          %v2571 = vld [vmem:[%s2333 + $0xb0] sm:$0x1]
          %v2572 = vld [vmem:[%s2333 + $0xb4] sm:$0xf]
          %v2573 = vld [vmem:[%s2333 + $0xb8] sm:$0xf]
          %v2574 = vld [vmem:[%s2333 + $0xbc] sm:$0x1]
          %v2576 = vshrl.u32 %v2527, 16
          %v2578 = vrot.slane %v2576, 4
          %v2579 = vshll.u32 %v2527, 16
          %v2581 = vrot.slane %v2579, 5
          %v2582 = vor.u32 %v2578, %v2581
          %v2583 = vrot.slane %v2582, 4
          %v2585 = vshll.u32 %v2528, 16
          %v2587 = vrot.slane %v2585, 5
          %v2588 = vsel %vm381, %v2583, %v2587
          %v2589 = vshrl.u32 %v2528, 16
          %v2591 = vrot.slane %v2589, 4
          %v2592 = vor.u32 %v2591, %v2587
          %v2593 = vrot.slane %v2592, 4
          %v2595 = vshll.u32 %v2529, 16
          %v2597 = vrot.slane %v2595, 5
          %v2598 = vsel %vm381, %v2593, %v2597
          %v2600 = vshrl.u32 %v2530, 16
          %v2602 = vrot.slane %v2600, 4
          %v2603 = vshll.u32 %v2530, 16
          %v2605 = vrot.slane %v2603, 5
          %v2606 = vor.u32 %v2602, %v2605
          %v2607 = vrot.slane %v2606, 4
          %v2609 = vshll.u32 %v2531, 16
          %v2611 = vrot.slane %v2609, 5
          %v2612 = vsel %vm381, %v2607, %v2611
          %v2613 = vshrl.u32 %v2531, 16
          %v2615 = vrot.slane %v2613, 4
          %v2616 = vor.u32 %v2615, %v2611
          %v2617 = vrot.slane %v2616, 4
          %v2619 = vshll.u32 %v2532, 16
          %v2621 = vrot.slane %v2619, 5
          %v2622 = vsel %vm381, %v2617, %v2621
          %v2624 = vshrl.u32 %v2533, 16
          %v2626 = vrot.slane %v2624, 4
          %v2627 = vshll.u32 %v2533, 16
          %v2629 = vrot.slane %v2627, 5
          %v2630 = vor.u32 %v2626, %v2629
          %v2631 = vrot.slane %v2630, 4
          %v2633 = vshll.u32 %v2534, 16
          %v2635 = vrot.slane %v2633, 5
          %v2636 = vsel %vm381, %v2631, %v2635
          %v2637 = vshrl.u32 %v2534, 16
          %v2639 = vrot.slane %v2637, 4
          %v2640 = vor.u32 %v2639, %v2635
          %v2641 = vrot.slane %v2640, 4
          %v2643 = vshll.u32 %v2535, 16
          %v2645 = vrot.slane %v2643, 5
          %v2646 = vsel %vm381, %v2641, %v2645
          %v2648 = vshrl.u32 %v2536, 16
          %v2650 = vrot.slane %v2648, 4
          %v2651 = vshll.u32 %v2536, 16
          %v2653 = vrot.slane %v2651, 5
          %v2654 = vor.u32 %v2650, %v2653
          %v2655 = vrot.slane %v2654, 4
          %v2657 = vshll.u32 %v2537, 16
          %v2659 = vrot.slane %v2657, 5
          %v2660 = vsel %vm381, %v2655, %v2659
          %v2661 = vshrl.u32 %v2537, 16
          %v2663 = vrot.slane %v2661, 4
          %v2664 = vor.u32 %v2663, %v2659
          %v2665 = vrot.slane %v2664, 4
          %v2667 = vshll.u32 %v2538, 16
          %v2669 = vrot.slane %v2667, 5
          %v2670 = vsel %vm381, %v2665, %v2669
          %v2672 = vshrl.u32 %v2539, 16
          %v2674 = vrot.slane %v2672, 4
          %v2675 = vshll.u32 %v2539, 16
          %v2677 = vrot.slane %v2675, 5
          %v2678 = vor.u32 %v2674, %v2677
          %v2679 = vrot.slane %v2678, 4
          %v2681 = vshll.u32 %v2540, 16
          %v2683 = vrot.slane %v2681, 5
          %v2684 = vsel %vm381, %v2679, %v2683
          %v2685 = vshrl.u32 %v2540, 16
          %v2687 = vrot.slane %v2685, 4
          %v2688 = vor.u32 %v2687, %v2683
          %v2689 = vrot.slane %v2688, 4
          %v2691 = vshll.u32 %v2541, 16
          %v2693 = vrot.slane %v2691, 5
          %v2694 = vsel %vm381, %v2689, %v2693
          %v2696 = vshrl.u32 %v2542, 16
          %v2698 = vrot.slane %v2696, 4
          %v2699 = vshll.u32 %v2542, 16
          %v2701 = vrot.slane %v2699, 5
          %v2702 = vor.u32 %v2698, %v2701
          %v2703 = vrot.slane %v2702, 4
          %v2705 = vshll.u32 %v2543, 16
          %v2707 = vrot.slane %v2705, 5
          %v2708 = vsel %vm381, %v2703, %v2707
          %v2709 = vshrl.u32 %v2543, 16
          %v2711 = vrot.slane %v2709, 4
          %v2712 = vor.u32 %v2711, %v2707
          %v2713 = vrot.slane %v2712, 4
          %v2715 = vshll.u32 %v2544, 16
          %v2717 = vrot.slane %v2715, 5
          %v2718 = vsel %vm381, %v2713, %v2717
          %v2720 = vshrl.u32 %v2545, 16
          %v2722 = vrot.slane %v2720, 4
          %v2723 = vshll.u32 %v2545, 16
          %v2725 = vrot.slane %v2723, 5
          %v2726 = vor.u32 %v2722, %v2725
          %v2727 = vrot.slane %v2726, 4
          %v2729 = vshll.u32 %v2546, 16
          %v2731 = vrot.slane %v2729, 5
          %v2732 = vsel %vm381, %v2727, %v2731
          %v2733 = vshrl.u32 %v2546, 16
          %v2735 = vrot.slane %v2733, 4
          %v2736 = vor.u32 %v2735, %v2731
          %v2737 = vrot.slane %v2736, 4
          %v2739 = vshll.u32 %v2547, 16
          %v2741 = vrot.slane %v2739, 5
          %v2742 = vsel %vm381, %v2737, %v2741
          %v2744 = vshrl.u32 %v2548, 16
          %v2746 = vrot.slane %v2744, 4
          %v2747 = vshll.u32 %v2548, 16
          %v2749 = vrot.slane %v2747, 5
          %v2750 = vor.u32 %v2746, %v2749
          %v2751 = vrot.slane %v2750, 4
          %v2753 = vshll.u32 %v2549, 16
          %v2755 = vrot.slane %v2753, 5
          %v2756 = vsel %vm381, %v2751, %v2755
          %v2757 = vshrl.u32 %v2549, 16
          %v2759 = vrot.slane %v2757, 4
          %v2760 = vor.u32 %v2759, %v2755
          %v2761 = vrot.slane %v2760, 4
          %v2763 = vshll.u32 %v2550, 16
          %v2765 = vrot.slane %v2763, 5
          %v2766 = vsel %vm381, %v2761, %v2765
          %v2768 = vshrl.u32 %v2551, 16
          %v2770 = vrot.slane %v2768, 4
          %v2771 = vshll.u32 %v2551, 16
          %v2773 = vrot.slane %v2771, 5
          %v2774 = vor.u32 %v2770, %v2773
          %v2775 = vrot.slane %v2774, 4
          %v2777 = vshll.u32 %v2552, 16
          %v2779 = vrot.slane %v2777, 5
          %v2780 = vsel %vm381, %v2775, %v2779
          %v2781 = vshrl.u32 %v2552, 16
          %v2783 = vrot.slane %v2781, 4
          %v2784 = vor.u32 %v2783, %v2779
          %v2785 = vrot.slane %v2784, 4
          %v2787 = vshll.u32 %v2553, 16
          %v2789 = vrot.slane %v2787, 5
          %v2790 = vsel %vm381, %v2785, %v2789
          %v2792 = vshrl.u32 %v2554, 16
          %v2794 = vrot.slane %v2792, 4
          %v2795 = vshll.u32 %v2554, 16
          %v2797 = vrot.slane %v2795, 5
          %v2798 = vor.u32 %v2794, %v2797
          %v2799 = vrot.slane %v2798, 4
          %v2801 = vshll.u32 %v2555, 16
          %v2803 = vrot.slane %v2801, 5
          %v2804 = vsel %vm381, %v2799, %v2803
          %v2805 = vshrl.u32 %v2555, 16
          %v2807 = vrot.slane %v2805, 4
          %v2808 = vor.u32 %v2807, %v2803
          %v2809 = vrot.slane %v2808, 4
          %v2811 = vshll.u32 %v2556, 16
          %v2813 = vrot.slane %v2811, 5
          %v2814 = vsel %vm381, %v2809, %v2813
          %v2816 = vshrl.u32 %v2557, 16
          %v2818 = vrot.slane %v2816, 4
          %v2819 = vshll.u32 %v2557, 16
          %v2821 = vrot.slane %v2819, 5
          %v2822 = vor.u32 %v2818, %v2821
          %v2823 = vrot.slane %v2822, 4
          %v2825 = vshll.u32 %v2558, 16
          %v2827 = vrot.slane %v2825, 5
          %v2828 = vsel %vm381, %v2823, %v2827
          %v2829 = vshrl.u32 %v2558, 16
          %v2831 = vrot.slane %v2829, 4
          %v2832 = vor.u32 %v2831, %v2827
          %v2833 = vrot.slane %v2832, 4
          %v2835 = vshll.u32 %v2559, 16
          %v2837 = vrot.slane %v2835, 5
          %v2838 = vsel %vm381, %v2833, %v2837
          %v2840 = vshrl.u32 %v2560, 16
          %v2842 = vrot.slane %v2840, 4
          %v2843 = vshll.u32 %v2560, 16
          %v2845 = vrot.slane %v2843, 5
          %v2846 = vor.u32 %v2842, %v2845
          %v2847 = vrot.slane %v2846, 4
          %v2849 = vshll.u32 %v2561, 16
          %v2851 = vrot.slane %v2849, 5
          %v2852 = vsel %vm381, %v2847, %v2851
          %v2853 = vshrl.u32 %v2561, 16
          %v2855 = vrot.slane %v2853, 4
          %v2856 = vor.u32 %v2855, %v2851
          %v2857 = vrot.slane %v2856, 4
          %v2859 = vshll.u32 %v2562, 16
          %v2861 = vrot.slane %v2859, 5
          %v2862 = vsel %vm381, %v2857, %v2861
          %v2864 = vshrl.u32 %v2563, 16
          %v2866 = vrot.slane %v2864, 4
          %v2867 = vshll.u32 %v2563, 16
          %v2869 = vrot.slane %v2867, 5
          %v2870 = vor.u32 %v2866, %v2869
          %v2871 = vrot.slane %v2870, 4
          %v2873 = vshll.u32 %v2564, 16
          %v2875 = vrot.slane %v2873, 5
          %v2876 = vsel %vm381, %v2871, %v2875
          %v2877 = vshrl.u32 %v2564, 16
          %v2879 = vrot.slane %v2877, 4
          %v2880 = vor.u32 %v2879, %v2875
          %v2881 = vrot.slane %v2880, 4
          %v2883 = vshll.u32 %v2565, 16
          %v2885 = vrot.slane %v2883, 5
          %v2886 = vsel %vm381, %v2881, %v2885
          %v2888 = vshrl.u32 %v2566, 16
          %v2890 = vrot.slane %v2888, 4
          %v2891 = vshll.u32 %v2566, 16
          %v2893 = vrot.slane %v2891, 5
          %v2894 = vor.u32 %v2890, %v2893
          %v2895 = vrot.slane %v2894, 4
          %v2897 = vshll.u32 %v2567, 16
          %v2899 = vrot.slane %v2897, 5
          %v2900 = vsel %vm381, %v2895, %v2899
          %v2901 = vshrl.u32 %v2567, 16
          %v2903 = vrot.slane %v2901, 4
          %v2904 = vor.u32 %v2903, %v2899
          %v2905 = vrot.slane %v2904, 4
          %v2907 = vshll.u32 %v2568, 16
          %v2909 = vrot.slane %v2907, 5
          %v2910 = vsel %vm381, %v2905, %v2909
          %v2912 = vshrl.u32 %v2569, 16
          %v2914 = vrot.slane %v2912, 4
          %v2915 = vshll.u32 %v2569, 16
          %v2917 = vrot.slane %v2915, 5
          %v2918 = vor.u32 %v2914, %v2917
          %v2919 = vrot.slane %v2918, 4
          %v2921 = vshll.u32 %v2570, 16
          %v2923 = vrot.slane %v2921, 5
          %v2924 = vsel %vm381, %v2919, %v2923
          %v2925 = vshrl.u32 %v2570, 16
          %v2927 = vrot.slane %v2925, 4
          %v2928 = vor.u32 %v2927, %v2923
          %v2929 = vrot.slane %v2928, 4
          %v2931 = vshll.u32 %v2571, 16
          %v2933 = vrot.slane %v2931, 5
          %v2934 = vsel %vm381, %v2929, %v2933
          %v2936 = vshrl.u32 %v2572, 16
          %v2938 = vrot.slane %v2936, 4
          %v2939 = vshll.u32 %v2572, 16
          %v2941 = vrot.slane %v2939, 5
          %v2942 = vor.u32 %v2938, %v2941
          %v2943 = vrot.slane %v2942, 4
          %v2945 = vshll.u32 %v2573, 16
          %v2947 = vrot.slane %v2945, 5
          %v2948 = vsel %vm381, %v2943, %v2947
          %v2949 = vshrl.u32 %v2573, 16
          %v2951 = vrot.slane %v2949, 4
          %v2952 = vor.u32 %v2951, %v2947
          %v2953 = vrot.slane %v2952, 4
          %v2955 = vshll.u32 %v2574, 16
          %v2957 = vrot.slane %v2955, 5
          %v2958 = vsel %vm381, %v2953, %v2957
          %2959 = vrot.lane.b32.xlu0 %v2588, 28
          %v2960 = vpop.permute.xlu0 %2959
          %2961 = vrot.lane.b32.xlu0 %v2598, 28
          %v2962 = vpop.permute.xlu0 %2961
          %2963 = vrot.lane.b32.xlu0 %v2612, 28
          %v2964 = vpop.permute.xlu0 %2963
          %2965 = vrot.lane.b32.xlu0 %v2622, 28
          %v2966 = vpop.permute.xlu0 %2965
          %2967 = vrot.lane.b32.xlu0 %v2636, 28
          %v2968 = vpop.permute.xlu0 %2967
          %2969 = vrot.lane.b32.xlu0 %v2646, 28
          %v2970 = vpop.permute.xlu0 %2969
          %2971 = vrot.lane.b32.xlu0 %v2660, 28
          %v2972 = vpop.permute.xlu0 %2971
          %2973 = vrot.lane.b32.xlu0 %v2670, 28
          %v2974 = vpop.permute.xlu0 %2973
          %2975 = vrot.lane.b32.xlu0 %v2684, 28
          %v2976 = vpop.permute.xlu0 %2975
          %2977 = vrot.lane.b32.xlu0 %v2694, 28
          %v2978 = vpop.permute.xlu0 %2977
          %2979 = vrot.lane.b32.xlu0 %v2708, 28
          %v2980 = vpop.permute.xlu0 %2979
          %2981 = vrot.lane.b32.xlu0 %v2718, 28
          %v2982 = vpop.permute.xlu0 %2981
          %2983 = vrot.lane.b32.xlu0 %v2732, 28
          %v2984 = vpop.permute.xlu0 %2983
          %2985 = vrot.lane.b32.xlu0 %v2742, 28
          %v2986 = vpop.permute.xlu0 %2985
          %2987 = vrot.lane.b32.xlu0 %v2756, 28
          %v2988 = vpop.permute.xlu0 %2987
          %2989 = vrot.lane.b32.xlu0 %v2766, 28
          %v2990 = vpop.permute.xlu0 %2989
          %2991 = vrot.lane.b32.xlu0 %v2780, 28
          %v2992 = vpop.permute.xlu0 %2991
          %2993 = vrot.lane.b32.xlu0 %v2790, 28
          %v2994 = vpop.permute.xlu0 %2993
          %2995 = vrot.lane.b32.xlu0 %v2804, 28
          %v2996 = vpop.permute.xlu0 %2995
          %2997 = vrot.lane.b32.xlu0 %v2814, 28
          %v2998 = vpop.permute.xlu0 %2997
          %2999 = vrot.lane.b32.xlu0 %v2828, 28
          %v3000 = vpop.permute.xlu0 %2999
          %3001 = vrot.lane.b32.xlu0 %v2838, 28
          %v3002 = vpop.permute.xlu0 %3001
          %3003 = vrot.lane.b32.xlu0 %v2852, 28
          %v3004 = vpop.permute.xlu0 %3003
          %3005 = vrot.lane.b32.xlu0 %v2862, 28
          %v3006 = vpop.permute.xlu0 %3005
          %3007 = vrot.lane.b32.xlu0 %v2876, 28
          %v3008 = vpop.permute.xlu0 %3007
          %3009 = vrot.lane.b32.xlu0 %v2886, 28
          %v3010 = vpop.permute.xlu0 %3009
          %3011 = vrot.lane.b32.xlu0 %v2900, 28
          %v3012 = vpop.permute.xlu0 %3011
          %3013 = vrot.lane.b32.xlu0 %v2910, 28
          %v3014 = vpop.permute.xlu0 %3013
          %3015 = vrot.lane.b32.xlu0 %v2924, 28
          %v3016 = vpop.permute.xlu0 %3015
          %3017 = vrot.lane.b32.xlu0 %v2934, 28
          %v3018 = vpop.permute.xlu0 %3017
          %3019 = vrot.lane.b32.xlu0 %v2948, 28
          %v3020 = vpop.permute.xlu0 %3019
          %3021 = vrot.lane.b32.xlu0 %v2958, 28
          %v3022 = vpop.permute.xlu0 %3021
          %vm3055 = vcmask 257248
          %3056 = vst.msk [vmem:[#allocation2] sm:$0xf] %vm3055, %v2960
          %3057 = vst.msk [vmem:[#allocation2 + $0x4] sm:$0xf] %vm3055, %v2962
          %3058 = vst.msk [vmem:[#allocation2 + $0x8] sm:$0xf] %vm3055, %v2964
          %3059 = vst.msk [vmem:[#allocation2 + $0xc] sm:$0xf] %vm3055, %v2966
          %3060 = vst.msk [vmem:[#allocation2 + $0x10] sm:$0xf] %vm3055, %v2968
          %3061 = vst.msk [vmem:[#allocation2 + $0x14] sm:$0xf] %vm3055, %v2970
          %3062 = vst.msk [vmem:[#allocation2 + $0x18] sm:$0xf] %vm3055, %v2972
          %3063 = vst.msk [vmem:[#allocation2 + $0x1c] sm:$0xf] %vm3055, %v2974
          %3064 = vst.msk [vmem:[#allocation2 + $0x20] sm:$0xf] %vm3055, %v2976
          %3065 = vst.msk [vmem:[#allocation2 + $0x24] sm:$0xf] %vm3055, %v2978
          %3066 = vst.msk [vmem:[#allocation2 + $0x28] sm:$0xf] %vm3055, %v2980
          %3067 = vst.msk [vmem:[#allocation2 + $0x2c] sm:$0xf] %vm3055, %v2982
          %3068 = vst.msk [vmem:[#allocation2 + $0x30] sm:$0xf] %vm3055, %v2984
          %3069 = vst.msk [vmem:[#allocation2 + $0x34] sm:$0xf] %vm3055, %v2986
          %3070 = vst.msk [vmem:[#allocation2 + $0x38] sm:$0xf] %vm3055, %v2988
          %3071 = vst.msk [vmem:[#allocation2 + $0x3c] sm:$0xf] %vm3055, %v2990
          %3072 = vst.msk [vmem:[#allocation2 + $0x40] sm:$0xf] %vm3055, %v2992
          %3073 = vst.msk [vmem:[#allocation2 + $0x44] sm:$0xf] %vm3055, %v2994
          %3074 = vst.msk [vmem:[#allocation2 + $0x48] sm:$0xf] %vm3055, %v2996
          %3075 = vst.msk [vmem:[#allocation2 + $0x4c] sm:$0xf] %vm3055, %v2998
          %3076 = vst.msk [vmem:[#allocation2 + $0x50] sm:$0xf] %vm3055, %v3000
          %3077 = vst.msk [vmem:[#allocation2 + $0x54] sm:$0xf] %vm3055, %v3002
          %3078 = vst.msk [vmem:[#allocation2 + $0x58] sm:$0xf] %vm3055, %v3004
          %3079 = vst.msk [vmem:[#allocation2 + $0x5c] sm:$0xf] %vm3055, %v3006
          %3080 = vst.msk [vmem:[#allocation2 + $0x60] sm:$0xf] %vm3055, %v3008
          %3081 = vst.msk [vmem:[#allocation2 + $0x64] sm:$0xf] %vm3055, %v3010
          %3082 = vst.msk [vmem:[#allocation2 + $0x68] sm:$0xf] %vm3055, %v3012
          %3083 = vst.msk [vmem:[#allocation2 + $0x6c] sm:$0xf] %vm3055, %v3014
          %3084 = vst.msk [vmem:[#allocation2 + $0x70] sm:$0xf] %vm3055, %v3016
          %3085 = vst.msk [vmem:[#allocation2 + $0x74] sm:$0xf] %vm3055, %v3018
          %3086 = vst.msk [vmem:[#allocation2 + $0x78] sm:$0xf] %vm3055, %v3020
          %3087 = vst.msk [vmem:[#allocation2 + $0x7c] sm:$0xf] %vm3055, %v3022
          %v3088 = vld [vmem:[%s2333] sm:$0xe]
          %v3089 = vld [vmem:[%s2333 + $0x4] sm:$0xf]
          %v3090 = vld [vmem:[%s2333 + $0x8] sm:$0x1]
          %v3091 = vld [vmem:[%s2333 + $0xc] sm:$0xe]
          %v3092 = vld [vmem:[%s2333 + $0x10] sm:$0xf]
          %v3093 = vld [vmem:[%s2333 + $0x14] sm:$0x1]
          %v3094 = vld [vmem:[%s2333 + $0x18] sm:$0xe]
          %v3095 = vld [vmem:[%s2333 + $0x1c] sm:$0xf]
          %v3096 = vld [vmem:[%s2333 + $0x20] sm:$0x1]
          %v3097 = vld [vmem:[%s2333 + $0x24] sm:$0xe]
          %v3098 = vld [vmem:[%s2333 + $0x28] sm:$0xf]
          %v3099 = vld [vmem:[%s2333 + $0x2c] sm:$0x1]
          %v3100 = vld [vmem:[%s2333 + $0x30] sm:$0xe]
          %v3101 = vld [vmem:[%s2333 + $0x34] sm:$0xf]
          %v3102 = vld [vmem:[%s2333 + $0x38] sm:$0x1]
          %v3103 = vld [vmem:[%s2333 + $0x3c] sm:$0xe]
          %v3104 = vld [vmem:[%s2333 + $0x40] sm:$0xf]
          %v3105 = vld [vmem:[%s2333 + $0x44] sm:$0x1]
          %v3106 = vld [vmem:[%s2333 + $0x48] sm:$0xe]
          %v3107 = vld [vmem:[%s2333 + $0x4c] sm:$0xf]
          %v3108 = vld [vmem:[%s2333 + $0x50] sm:$0x1]
          %v3109 = vld [vmem:[%s2333 + $0x54] sm:$0xe]
          %v3110 = vld [vmem:[%s2333 + $0x58] sm:$0xf]
          %v3111 = vld [vmem:[%s2333 + $0x5c] sm:$0x1]
          %v3112 = vld [vmem:[%s2333 + $0x60] sm:$0xe]
          %v3113 = vld [vmem:[%s2333 + $0x64] sm:$0xf]
          %v3114 = vld [vmem:[%s2333 + $0x68] sm:$0x1]
          %v3115 = vld [vmem:[%s2333 + $0x6c] sm:$0xe]
          %v3116 = vld [vmem:[%s2333 + $0x70] sm:$0xf]
          %v3117 = vld [vmem:[%s2333 + $0x74] sm:$0x1]
          %v3118 = vld [vmem:[%s2333 + $0x78] sm:$0xe]
          %v3119 = vld [vmem:[%s2333 + $0x7c] sm:$0xf]
          %v3120 = vld [vmem:[%s2333 + $0x80] sm:$0x1]
          %v3121 = vld [vmem:[%s2333 + $0x84] sm:$0xe]
          %v3122 = vld [vmem:[%s2333 + $0x88] sm:$0xf]
          %v3123 = vld [vmem:[%s2333 + $0x8c] sm:$0x1]
          %v3124 = vld [vmem:[%s2333 + $0x90] sm:$0xe]
          %v3125 = vld [vmem:[%s2333 + $0x94] sm:$0xf]
          %v3126 = vld [vmem:[%s2333 + $0x98] sm:$0x1]
          %v3127 = vld [vmem:[%s2333 + $0x9c] sm:$0xe]
          %v3128 = vld [vmem:[%s2333 + $0xa0] sm:$0xf]
          %v3129 = vld [vmem:[%s2333 + $0xa4] sm:$0x1]
          %v3130 = vld [vmem:[%s2333 + $0xa8] sm:$0xe]
          %v3131 = vld [vmem:[%s2333 + $0xac] sm:$0xf]
          %v3132 = vld [vmem:[%s2333 + $0xb0] sm:$0x1]
          %v3133 = vld [vmem:[%s2333 + $0xb4] sm:$0xe]
          %v3134 = vld [vmem:[%s2333 + $0xb8] sm:$0xf]
          %v3135 = vld [vmem:[%s2333 + $0xbc] sm:$0x1]
          %v3184 = vrot.slane %v3088, 5
          %v3185 = vrot.slane %v3184, 4
          %v3186 = vrot.slane %v3089, 5
          %v3187 = vsel %vm993, %v3185, %v3186
          %v3188 = vrot.slane %v3186, 4
          %v3189 = vrot.slane %v3090, 5
          %v3190 = vsel %vm993, %v3188, %v3189
          %v3191 = vrot.slane %v3091, 5
          %v3192 = vrot.slane %v3191, 4
          %v3193 = vrot.slane %v3092, 5
          %v3194 = vsel %vm993, %v3192, %v3193
          %v3195 = vrot.slane %v3193, 4
          %v3196 = vrot.slane %v3093, 5
          %v3197 = vsel %vm993, %v3195, %v3196
          %v3198 = vrot.slane %v3094, 5
          %v3199 = vrot.slane %v3198, 4
          %v3200 = vrot.slane %v3095, 5
          %v3201 = vsel %vm993, %v3199, %v3200
          %v3202 = vrot.slane %v3200, 4
          %v3203 = vrot.slane %v3096, 5
          %v3204 = vsel %vm993, %v3202, %v3203
          %v3205 = vrot.slane %v3097, 5
          %v3206 = vrot.slane %v3205, 4
          %v3207 = vrot.slane %v3098, 5
          %v3208 = vsel %vm993, %v3206, %v3207
          %v3209 = vrot.slane %v3207, 4
          %v3210 = vrot.slane %v3099, 5
          %v3211 = vsel %vm993, %v3209, %v3210
          %v3212 = vrot.slane %v3100, 5
          %v3213 = vrot.slane %v3212, 4
          %v3214 = vrot.slane %v3101, 5
          %v3215 = vsel %vm993, %v3213, %v3214
          %v3216 = vrot.slane %v3214, 4
          %v3217 = vrot.slane %v3102, 5
          %v3218 = vsel %vm993, %v3216, %v3217
          %v3219 = vrot.slane %v3103, 5
          %v3220 = vrot.slane %v3219, 4
          %v3221 = vrot.slane %v3104, 5
          %v3222 = vsel %vm993, %v3220, %v3221
          %v3223 = vrot.slane %v3221, 4
          %v3224 = vrot.slane %v3105, 5
          %v3225 = vsel %vm993, %v3223, %v3224
          %v3226 = vrot.slane %v3106, 5
          %v3227 = vrot.slane %v3226, 4
          %v3228 = vrot.slane %v3107, 5
          %v3229 = vsel %vm993, %v3227, %v3228
          %v3230 = vrot.slane %v3228, 4
          %v3231 = vrot.slane %v3108, 5
          %v3232 = vsel %vm993, %v3230, %v3231
          %v3233 = vrot.slane %v3109, 5
          %v3234 = vrot.slane %v3233, 4
          %v3235 = vrot.slane %v3110, 5
          %v3236 = vsel %vm993, %v3234, %v3235
          %v3237 = vrot.slane %v3235, 4
          %v3238 = vrot.slane %v3111, 5
          %v3239 = vsel %vm993, %v3237, %v3238
          %v3240 = vrot.slane %v3112, 5
          %v3241 = vrot.slane %v3240, 4
          %v3242 = vrot.slane %v3113, 5
          %v3243 = vsel %vm993, %v3241, %v3242
          %v3244 = vrot.slane %v3242, 4
          %v3245 = vrot.slane %v3114, 5
          %v3246 = vsel %vm993, %v3244, %v3245
          %v3247 = vrot.slane %v3115, 5
          %v3248 = vrot.slane %v3247, 4
          %v3249 = vrot.slane %v3116, 5
          %v3250 = vsel %vm993, %v3248, %v3249
          %v3251 = vrot.slane %v3249, 4
          %v3252 = vrot.slane %v3117, 5
          %v3253 = vsel %vm993, %v3251, %v3252
          %v3254 = vrot.slane %v3118, 5
          %v3255 = vrot.slane %v3254, 4
          %v3256 = vrot.slane %v3119, 5
          %v3257 = vsel %vm993, %v3255, %v3256
          %v3258 = vrot.slane %v3256, 4
          %v3259 = vrot.slane %v3120, 5
          %v3260 = vsel %vm993, %v3258, %v3259
          %v3261 = vrot.slane %v3121, 5
          %v3262 = vrot.slane %v3261, 4
          %v3263 = vrot.slane %v3122, 5
          %v3264 = vsel %vm993, %v3262, %v3263
          %v3265 = vrot.slane %v3263, 4
          %v3266 = vrot.slane %v3123, 5
          %v3267 = vsel %vm993, %v3265, %v3266
          %v3268 = vrot.slane %v3124, 5
          %v3269 = vrot.slane %v3268, 4
          %v3270 = vrot.slane %v3125, 5
          %v3271 = vsel %vm993, %v3269, %v3270
          %v3272 = vrot.slane %v3270, 4
          %v3273 = vrot.slane %v3126, 5
          %v3274 = vsel %vm993, %v3272, %v3273
          %v3275 = vrot.slane %v3127, 5
          %v3276 = vrot.slane %v3275, 4
          %v3277 = vrot.slane %v3128, 5
          %v3278 = vsel %vm993, %v3276, %v3277
          %v3279 = vrot.slane %v3277, 4
          %v3280 = vrot.slane %v3129, 5
          %v3281 = vsel %vm993, %v3279, %v3280
          %v3282 = vrot.slane %v3130, 5
          %v3283 = vrot.slane %v3282, 4
          %v3284 = vrot.slane %v3131, 5
          %v3285 = vsel %vm993, %v3283, %v3284
          %v3286 = vrot.slane %v3284, 4
          %v3287 = vrot.slane %v3132, 5
          %v3288 = vsel %vm993, %v3286, %v3287
          %v3289 = vrot.slane %v3133, 5
          %v3290 = vrot.slane %v3289, 4
          %v3291 = vrot.slane %v3134, 5
          %v3292 = vsel %vm993, %v3290, %v3291
          %v3293 = vrot.slane %v3291, 4
          %v3294 = vrot.slane %v3135, 5
          %v3295 = vsel %vm993, %v3293, %v3294
          %3296 = vrot.lane.b32.xlu0 %v3187, 32
          %v3297 = vpop.permute.xlu0 %3296
          %3298 = vrot.lane.b32.xlu0 %v3190, 32
          %v3299 = vpop.permute.xlu0 %3298
          %3300 = vrot.lane.b32.xlu0 %v3194, 32
          %v3301 = vpop.permute.xlu0 %3300
          %3302 = vrot.lane.b32.xlu0 %v3197, 32
          %v3303 = vpop.permute.xlu0 %3302
          %3304 = vrot.lane.b32.xlu0 %v3201, 32
          %v3305 = vpop.permute.xlu0 %3304
          %3306 = vrot.lane.b32.xlu0 %v3204, 32
          %v3307 = vpop.permute.xlu0 %3306
          %3308 = vrot.lane.b32.xlu0 %v3208, 32
          %v3309 = vpop.permute.xlu0 %3308
          %3310 = vrot.lane.b32.xlu0 %v3211, 32
          %v3311 = vpop.permute.xlu0 %3310
          %3312 = vrot.lane.b32.xlu0 %v3215, 32
          %v3313 = vpop.permute.xlu0 %3312
          %3314 = vrot.lane.b32.xlu0 %v3218, 32
          %v3315 = vpop.permute.xlu0 %3314
          %3316 = vrot.lane.b32.xlu0 %v3222, 32
          %v3317 = vpop.permute.xlu0 %3316
          %3318 = vrot.lane.b32.xlu0 %v3225, 32
          %v3319 = vpop.permute.xlu0 %3318
          %3320 = vrot.lane.b32.xlu0 %v3229, 32
          %v3321 = vpop.permute.xlu0 %3320
          %3322 = vrot.lane.b32.xlu0 %v3232, 32
          %v3323 = vpop.permute.xlu0 %3322
          %3324 = vrot.lane.b32.xlu0 %v3236, 32
          %v3325 = vpop.permute.xlu0 %3324
          %3326 = vrot.lane.b32.xlu0 %v3239, 32
          %v3327 = vpop.permute.xlu0 %3326
          %3328 = vrot.lane.b32.xlu0 %v3243, 32
          %v3329 = vpop.permute.xlu0 %3328
          %3330 = vrot.lane.b32.xlu0 %v3246, 32
          %v3331 = vpop.permute.xlu0 %3330
          %3332 = vrot.lane.b32.xlu0 %v3250, 32
          %v3333 = vpop.permute.xlu0 %3332
          %3334 = vrot.lane.b32.xlu0 %v3253, 32
          %v3335 = vpop.permute.xlu0 %3334
          %3336 = vrot.lane.b32.xlu0 %v3257, 32
          %v3337 = vpop.permute.xlu0 %3336
          %3338 = vrot.lane.b32.xlu0 %v3260, 32
          %v3339 = vpop.permute.xlu0 %3338
          %3340 = vrot.lane.b32.xlu0 %v3264, 32
          %v3341 = vpop.permute.xlu0 %3340
          %3342 = vrot.lane.b32.xlu0 %v3267, 32
          %v3343 = vpop.permute.xlu0 %3342
          %3344 = vrot.lane.b32.xlu0 %v3271, 32
          %v3345 = vpop.permute.xlu0 %3344
          %3346 = vrot.lane.b32.xlu0 %v3274, 32
          %v3347 = vpop.permute.xlu0 %3346
          %3348 = vrot.lane.b32.xlu0 %v3278, 32
          %v3349 = vpop.permute.xlu0 %3348
          %3350 = vrot.lane.b32.xlu0 %v3281, 32
          %v3351 = vpop.permute.xlu0 %3350
          %3352 = vrot.lane.b32.xlu0 %v3285, 32
          %v3353 = vpop.permute.xlu0 %3352
          %3354 = vrot.lane.b32.xlu0 %v3288, 32
          %v3355 = vpop.permute.xlu0 %3354
          %3356 = vrot.lane.b32.xlu0 %v3292, 32
          %v3357 = vpop.permute.xlu0 %3356
          %3358 = vrot.lane.b32.xlu0 %v3295, 32
          %v3359 = vpop.permute.xlu0 %3358
          %vm3392 = vcmask 290048
          %3393 = vst.msk [vmem:[#allocation2] sm:$0xf] %vm3392, %v3297
          %3394 = vst.msk [vmem:[#allocation2 + $0x4] sm:$0xf] %vm3392, %v3299
          %3395 = vst.msk [vmem:[#allocation2 + $0x8] sm:$0xf] %vm3392, %v3301
          %3396 = vst.msk [vmem:[#allocation2 + $0xc] sm:$0xf] %vm3392, %v3303
          %3397 = vst.msk [vmem:[#allocation2 + $0x10] sm:$0xf] %vm3392, %v3305
          %3398 = vst.msk [vmem:[#allocation2 + $0x14] sm:$0xf] %vm3392, %v3307
          %3399 = vst.msk [vmem:[#allocation2 + $0x18] sm:$0xf] %vm3392, %v3309
          %3400 = vst.msk [vmem:[#allocation2 + $0x1c] sm:$0xf] %vm3392, %v3311
          %3401 = vst.msk [vmem:[#allocation2 + $0x20] sm:$0xf] %vm3392, %v3313
          %3402 = vst.msk [vmem:[#allocation2 + $0x24] sm:$0xf] %vm3392, %v3315
          %3403 = vst.msk [vmem:[#allocation2 + $0x28] sm:$0xf] %vm3392, %v3317
          %3404 = vst.msk [vmem:[#allocation2 + $0x2c] sm:$0xf] %vm3392, %v3319
          %3405 = vst.msk [vmem:[#allocation2 + $0x30] sm:$0xf] %vm3392, %v3321
          %3406 = vst.msk [vmem:[#allocation2 + $0x34] sm:$0xf] %vm3392, %v3323
          %3407 = vst.msk [vmem:[#allocation2 + $0x38] sm:$0xf] %vm3392, %v3325
          %3408 = vst.msk [vmem:[#allocation2 + $0x3c] sm:$0xf] %vm3392, %v3327
          %3409 = vst.msk [vmem:[#allocation2 + $0x40] sm:$0xf] %vm3392, %v3329
          %3410 = vst.msk [vmem:[#allocation2 + $0x44] sm:$0xf] %vm3392, %v3331
          %3411 = vst.msk [vmem:[#allocation2 + $0x48] sm:$0xf] %vm3392, %v3333
          %3412 = vst.msk [vmem:[#allocation2 + $0x4c] sm:$0xf] %vm3392, %v3335
          %3413 = vst.msk [vmem:[#allocation2 + $0x50] sm:$0xf] %vm3392, %v3337
          %3414 = vst.msk [vmem:[#allocation2 + $0x54] sm:$0xf] %vm3392, %v3339
          %3415 = vst.msk [vmem:[#allocation2 + $0x58] sm:$0xf] %vm3392, %v3341
          %3416 = vst.msk [vmem:[#allocation2 + $0x5c] sm:$0xf] %vm3392, %v3343
          %3417 = vst.msk [vmem:[#allocation2 + $0x60] sm:$0xf] %vm3392, %v3345
          %3418 = vst.msk [vmem:[#allocation2 + $0x64] sm:$0xf] %vm3392, %v3347
          %3419 = vst.msk [vmem:[#allocation2 + $0x68] sm:$0xf] %vm3392, %v3349
          %3420 = vst.msk [vmem:[#allocation2 + $0x6c] sm:$0xf] %vm3392, %v3351
          %3421 = vst.msk [vmem:[#allocation2 + $0x70] sm:$0xf] %vm3392, %v3353
          %3422 = vst.msk [vmem:[#allocation2 + $0x74] sm:$0xf] %vm3392, %v3355
          %3423 = vst.msk [vmem:[#allocation2 + $0x78] sm:$0xf] %vm3392, %v3357
          %3424 = vst.msk [vmem:[#allocation2 + $0x7c] sm:$0xf] %vm3392, %v3359
        $region36: #{tpu_custom_call.1} parent=31 // pred_fallthru
          _
        %v3425 = vld [vmem:[#allocation2] sm:$0xf]
        %v3426 = vld [vmem:[#allocation2 + $0x4] sm:$0xf]
        %v3427 = vld [vmem:[#allocation2 + $0x8] sm:$0xf]
        %v3428 = vld [vmem:[#allocation2 + $0xc] sm:$0xf]
        %v3429 = vld [vmem:[#allocation2 + $0x10] sm:$0xf]
        %v3430 = vld [vmem:[#allocation2 + $0x14] sm:$0xf]
        %v3431 = vld [vmem:[#allocation2 + $0x18] sm:$0xf]
        %v3432 = vld [vmem:[#allocation2 + $0x1c] sm:$0xf]
        %v3433 = vld [vmem:[#allocation2 + $0x20] sm:$0xf]
        %v3434 = vld [vmem:[#allocation2 + $0x24] sm:$0xf]
        %v3435 = vld [vmem:[#allocation2 + $0x28] sm:$0xf]
        %v3436 = vld [vmem:[#allocation2 + $0x2c] sm:$0xf]
        %v3437 = vld [vmem:[#allocation2 + $0x30] sm:$0xf]
        %v3438 = vld [vmem:[#allocation2 + $0x34] sm:$0xf]
        %v3439 = vld [vmem:[#allocation2 + $0x38] sm:$0xf]
        %v3440 = vld [vmem:[#allocation2 + $0x3c] sm:$0xf]
        %v3441 = vld [vmem:[#allocation2 + $0x40] sm:$0xf]
        %v3442 = vld [vmem:[#allocation2 + $0x44] sm:$0xf]
        %v3443 = vld [vmem:[#allocation2 + $0x48] sm:$0xf]
        %v3444 = vld [vmem:[#allocation2 + $0x4c] sm:$0xf]
        %v3445 = vld [vmem:[#allocation2 + $0x50] sm:$0xf]
        %v3446 = vld [vmem:[#allocation2 + $0x54] sm:$0xf]
        %v3447 = vld [vmem:[#allocation2 + $0x58] sm:$0xf]
        %v3448 = vld [vmem:[#allocation2 + $0x5c] sm:$0xf]
        %v3449 = vld [vmem:[#allocation2 + $0x60] sm:$0xf]
        %v3450 = vld [vmem:[#allocation2 + $0x64] sm:$0xf]
        %v3451 = vld [vmem:[#allocation2 + $0x68] sm:$0xf]
        %v3452 = vld [vmem:[#allocation2 + $0x6c] sm:$0xf]
        %v3453 = vld [vmem:[#allocation2 + $0x70] sm:$0xf]
        %v3454 = vld [vmem:[#allocation2 + $0x74] sm:$0xf]
        %v3455 = vld [vmem:[#allocation2 + $0x78] sm:$0xf]
        %v3456 = vld [vmem:[#allocation2 + $0x7c] sm:$0xf]
        %v3457 = vld [vmem:[%s219] sm:$0xf]
        %v3458 = vld [vmem:[%s219 + $0x4] sm:$0xf]
        %v3459 = vld [vmem:[%s219 + $0x8] sm:$0xf]
        %v3460 = vld [vmem:[%s219 + $0xc] sm:$0xf]
        %v3461 = vld [vmem:[%s219 + $0x10] sm:$0xf]
        %v3462 = vld [vmem:[%s219 + $0x14] sm:$0xf]
        %v3463 = vld [vmem:[%s219 + $0x18] sm:$0xf]
        %v3464 = vld [vmem:[%s219 + $0x1c] sm:$0xf]
        %v3465 = vld [vmem:[%s219 + $0x20] sm:$0xf]
        %v3466 = vld [vmem:[%s219 + $0x24] sm:$0xf]
        %v3467 = vld [vmem:[%s219 + $0x28] sm:$0xf]
        %v3468 = vld [vmem:[%s219 + $0x2c] sm:$0xf]
        %v3469 = vld [vmem:[%s219 + $0x30] sm:$0xf]
        %v3470 = vld [vmem:[%s219 + $0x34] sm:$0xf]
        %v3471 = vld [vmem:[%s219 + $0x38] sm:$0xf]
        %v3472 = vld [vmem:[%s219 + $0x3c] sm:$0xf]
        %v3473 = vld [vmem:[%s222] sm:$0x1]
        %v3475 = vperm.slane %v3473, 0
        %v3509 = vunpack.c.l.b16 %v3425
        %v3510 = vunpack.c.l.b16 %v3426
        %v3511 = vunpack.c.l.b16 %v3427
        %v3512 = vunpack.c.l.b16 %v3428
        %v3513 = vunpack.c.l.b16 %v3429
        %v3514 = vunpack.c.l.b16 %v3430
        %v3515 = vunpack.c.l.b16 %v3431
        %v3516 = vunpack.c.l.b16 %v3432
        %v3517 = vunpack.c.l.b16 %v3433
        %v3518 = vunpack.c.l.b16 %v3434
        %v3519 = vunpack.c.l.b16 %v3435
        %v3520 = vunpack.c.l.b16 %v3436
        %v3521 = vunpack.c.l.b16 %v3437
        %v3522 = vunpack.c.l.b16 %v3438
        %v3523 = vunpack.c.l.b16 %v3439
        %v3524 = vunpack.c.l.b16 %v3440
        %v3525 = vunpack.c.l.b16 %v3441
        %v3526 = vunpack.c.l.b16 %v3442
        %v3527 = vunpack.c.l.b16 %v3443
        %v3528 = vunpack.c.l.b16 %v3444
        %v3529 = vunpack.c.l.b16 %v3445
        %v3530 = vunpack.c.l.b16 %v3446
        %v3531 = vunpack.c.l.b16 %v3447
        %v3532 = vunpack.c.l.b16 %v3448
        %v3533 = vunpack.c.l.b16 %v3449
        %v3534 = vunpack.c.l.b16 %v3450
        %v3535 = vunpack.c.l.b16 %v3451
        %v3536 = vunpack.c.l.b16 %v3452
        %v3537 = vunpack.c.l.b16 %v3453
        %v3538 = vunpack.c.l.b16 %v3454
        %v3539 = vunpack.c.l.b16 %v3455
        %v3540 = vunpack.c.l.b16 %v3456
        %v3541 = vpack.c.b16 %v3510, %v3509
        %v3542 = vpack.c.b16 %v3512, %v3511
        %v3543 = vpack.c.b16 %v3514, %v3513
        %v3544 = vpack.c.b16 %v3516, %v3515
        %v3545 = vpack.c.b16 %v3518, %v3517
        %v3546 = vpack.c.b16 %v3520, %v3519
        %v3547 = vpack.c.b16 %v3522, %v3521
        %v3548 = vpack.c.b16 %v3524, %v3523
        %v3549 = vpack.c.b16 %v3526, %v3525
        %v3550 = vpack.c.b16 %v3528, %v3527
        %v3551 = vpack.c.b16 %v3530, %v3529
        %v3552 = vpack.c.b16 %v3532, %v3531
        %v3553 = vpack.c.b16 %v3534, %v3533
        %v3554 = vpack.c.b16 %v3536, %v3535
        %v3555 = vpack.c.b16 %v3538, %v3537
        %v3556 = vpack.c.b16 %v3540, %v3539
        %v3589 = vunpack.c.l.b16 %v3457
        %v3590 = vunpack.c.l.b16 %v3458
        %v3591 = vunpack.c.l.b16 %v3459
        %v3592 = vunpack.c.l.b16 %v3460
        %v3593 = vunpack.c.l.b16 %v3461
        %v3594 = vunpack.c.l.b16 %v3462
        %v3595 = vunpack.c.l.b16 %v3463
        %v3596 = vunpack.c.l.b16 %v3464
        %v3597 = vunpack.c.l.b16 %v3465
        %v3598 = vunpack.c.l.b16 %v3466
        %v3599 = vunpack.c.l.b16 %v3467
        %v3600 = vunpack.c.l.b16 %v3468
        %v3601 = vunpack.c.l.b16 %v3469
        %v3602 = vunpack.c.l.b16 %v3470
        %v3603 = vunpack.c.l.b16 %v3471
        %v3604 = vunpack.c.l.b16 %v3472
        %v3605 = vpack.c.b16 %v3590, %v3589
        %v3606 = vpack.c.b16 %v3592, %v3591
        %v3607 = vpack.c.b16 %v3594, %v3593
        %v3608 = vpack.c.b16 %v3596, %v3595
        %v3609 = vpack.c.b16 %v3598, %v3597
        %v3610 = vpack.c.b16 %v3600, %v3599
        %v3611 = vpack.c.b16 %v3602, %v3601
        %v3612 = vpack.c.b16 %v3604, %v3603
        %3621 = vmatpush.bf16.msra.mxu0 %v3612
        %3622 = vmatpush.bf16.msra.mxu0 %v3611
        %3623 = vmatpush.bf16.msra.mxu0 %v3610
        %3624 = vmatpush.bf16.msra.mxu0 %v3609
        %3625 = vmatpush.bf16.msra.mxu0 %v3608
        %3626 = vmatpush.bf16.msra.mxu0 %v3607
        %3627 = vmatpush.bf16.msra.mxu0 %v3606
        %3628 = vmatpush.bf16.msra.mxu0 %v3605
        %3629 = vmatmul.bf16.gmra.mxu0 %v3541
        %v3630 = vpop.f32.mrf.mxu0
        %v3631 = vadd.f32 %v3475, %v3630
        %v3632 = vpop.f32.mrf.mxu0
        %v3633 = vadd.f32 %v3475, %v3632
        %3634 = vmatmul.bf16.gmra.mxu0 %v3542
        %v3635 = vpop.f32.mrf.mxu0
        %v3636 = vadd.f32 %v3475, %v3635
        %v3637 = vpop.f32.mrf.mxu0
        %v3638 = vadd.f32 %v3475, %v3637
        %3639 = vmatmul.bf16.gmra.mxu0 %v3543
        %v3640 = vpop.f32.mrf.mxu0
        %v3641 = vadd.f32 %v3475, %v3640
        %v3642 = vpop.f32.mrf.mxu0
        %v3643 = vadd.f32 %v3475, %v3642
        %3644 = vmatmul.bf16.gmra.mxu0 %v3544
        %v3645 = vpop.f32.mrf.mxu0
        %v3646 = vadd.f32 %v3475, %v3645
        %v3647 = vpop.f32.mrf.mxu0
        %v3648 = vadd.f32 %v3475, %v3647
        %3649 = vmatmul.bf16.gmra.mxu0 %v3545
        %v3650 = vpop.f32.mrf.mxu0
        %v3651 = vadd.f32 %v3475, %v3650
        %v3652 = vpop.f32.mrf.mxu0
        %v3653 = vadd.f32 %v3475, %v3652
        %3654 = vmatmul.bf16.gmra.mxu0 %v3546
        %v3655 = vpop.f32.mrf.mxu0
        %v3656 = vadd.f32 %v3475, %v3655
        %v3657 = vpop.f32.mrf.mxu0
        %v3658 = vadd.f32 %v3475, %v3657
        %3659 = vmatmul.bf16.gmra.mxu0 %v3547
        %v3660 = vpop.f32.mrf.mxu0
        %v3661 = vadd.f32 %v3475, %v3660
        %v3662 = vpop.f32.mrf.mxu0
        %v3663 = vadd.f32 %v3475, %v3662
        %3664 = vmatmul.bf16.gmra.mxu0 %v3548
        %v3665 = vpop.f32.mrf.mxu0
        %v3666 = vadd.f32 %v3475, %v3665
        %v3667 = vpop.f32.mrf.mxu0
        %v3668 = vadd.f32 %v3475, %v3667
        %3669 = vmatmul.bf16.gmra.mxu0 %v3549
        %v3670 = vpop.f32.mrf.mxu0
        %v3671 = vadd.f32 %v3475, %v3670
        %v3672 = vpop.f32.mrf.mxu0
        %v3673 = vadd.f32 %v3475, %v3672
        %3674 = vmatmul.bf16.gmra.mxu0 %v3550
        %v3675 = vpop.f32.mrf.mxu0
        %v3676 = vadd.f32 %v3475, %v3675
        %v3677 = vpop.f32.mrf.mxu0
        %v3678 = vadd.f32 %v3475, %v3677
        %3679 = vmatmul.bf16.gmra.mxu0 %v3551
        %v3680 = vpop.f32.mrf.mxu0
        %v3681 = vadd.f32 %v3475, %v3680
        %v3682 = vpop.f32.mrf.mxu0
        %v3683 = vadd.f32 %v3475, %v3682
        %3684 = vmatmul.bf16.gmra.mxu0 %v3552
        %v3685 = vpop.f32.mrf.mxu0
        %v3686 = vadd.f32 %v3475, %v3685
        %v3687 = vpop.f32.mrf.mxu0
        %v3688 = vadd.f32 %v3475, %v3687
        %3689 = vmatmul.bf16.gmra.mxu0 %v3553
        %v3690 = vpop.f32.mrf.mxu0
        %v3691 = vadd.f32 %v3475, %v3690
        %v3692 = vpop.f32.mrf.mxu0
        %v3693 = vadd.f32 %v3475, %v3692
        %3694 = vmatmul.bf16.gmra.mxu0 %v3554
        %v3695 = vpop.f32.mrf.mxu0
        %v3696 = vadd.f32 %v3475, %v3695
        %v3697 = vpop.f32.mrf.mxu0
        %v3698 = vadd.f32 %v3475, %v3697
        %3699 = vmatmul.bf16.gmra.mxu0 %v3555
        %v3700 = vpop.f32.mrf.mxu0
        %v3701 = vadd.f32 %v3475, %v3700
        %v3702 = vpop.f32.mrf.mxu0
        %v3703 = vadd.f32 %v3475, %v3702
        %3704 = vmatmul.bf16.gmra.mxu0 %v3556
        %v3705 = vpop.f32.mrf.mxu0
        %v3706 = vadd.f32 %v3475, %v3705
        %v3707 = vpop.f32.mrf.mxu0
        %v3708 = vadd.f32 %v3475, %v3707
        %3709 = vdwg.mxu0
        %v3710 = vpack.c.bf16 %v3631, %v3631
        %v3711 = vpack.c.bf16 %v3633, %v3633
        %v3712 = vpack.c.bf16 %v3636, %v3636
        %v3713 = vpack.c.bf16 %v3638, %v3638
        %v3714 = vpack.c.bf16 %v3641, %v3641
        %v3715 = vpack.c.bf16 %v3643, %v3643
        %v3716 = vpack.c.bf16 %v3646, %v3646
        %v3717 = vpack.c.bf16 %v3648, %v3648
        %v3718 = vpack.c.bf16 %v3651, %v3651
        %v3719 = vpack.c.bf16 %v3653, %v3653
        %v3720 = vpack.c.bf16 %v3656, %v3656
        %v3721 = vpack.c.bf16 %v3658, %v3658
        %v3722 = vpack.c.bf16 %v3661, %v3661
        %v3723 = vpack.c.bf16 %v3663, %v3663
        %v3724 = vpack.c.bf16 %v3666, %v3666
        %v3725 = vpack.c.bf16 %v3668, %v3668
        %v3726 = vpack.c.bf16 %v3671, %v3671
        %v3727 = vpack.c.bf16 %v3673, %v3673
        %v3728 = vpack.c.bf16 %v3676, %v3676
        %v3729 = vpack.c.bf16 %v3678, %v3678
        %v3730 = vpack.c.bf16 %v3681, %v3681
        %v3731 = vpack.c.bf16 %v3683, %v3683
        %v3732 = vpack.c.bf16 %v3686, %v3686
        %v3733 = vpack.c.bf16 %v3688, %v3688
        %v3734 = vpack.c.bf16 %v3691, %v3691
        %v3735 = vpack.c.bf16 %v3693, %v3693
        %v3736 = vpack.c.bf16 %v3696, %v3696
        %v3737 = vpack.c.bf16 %v3698, %v3698
        %v3738 = vpack.c.bf16 %v3701, %v3701
        %v3739 = vpack.c.bf16 %v3703, %v3703
        %v3740 = vpack.c.bf16 %v3706, %v3706
        %v3741 = vpack.c.bf16 %v3708, %v3708
        %3742 = vst [vmem:[%s210] sm:$0xf] %v3710
        %3743 = vst [vmem:[%s210 + $0x4] sm:$0xf] %v3711
        %3744 = vst [vmem:[%s210 + $0x8] sm:$0xf] %v3712
        %3745 = vst [vmem:[%s210 + $0xc] sm:$0xf] %v3713
        %3746 = vst [vmem:[%s210 + $0x10] sm:$0xf] %v3714
        %3747 = vst [vmem:[%s210 + $0x14] sm:$0xf] %v3715
        %3748 = vst [vmem:[%s210 + $0x18] sm:$0xf] %v3716
        %3749 = vst [vmem:[%s210 + $0x1c] sm:$0xf] %v3717
        %3750 = vst [vmem:[%s210 + $0x20] sm:$0xf] %v3718
        %3751 = vst [vmem:[%s210 + $0x24] sm:$0xf] %v3719
        %3752 = vst [vmem:[%s210 + $0x28] sm:$0xf] %v3720
        %3753 = vst [vmem:[%s210 + $0x2c] sm:$0xf] %v3721
        %3754 = vst [vmem:[%s210 + $0x30] sm:$0xf] %v3722
        %3755 = vst [vmem:[%s210 + $0x34] sm:$0xf] %v3723
        %3756 = vst [vmem:[%s210 + $0x38] sm:$0xf] %v3724
        %3757 = vst [vmem:[%s210 + $0x3c] sm:$0xf] %v3725
        %3758 = vst [vmem:[%s210 + $0x40] sm:$0xf] %v3726
        %3759 = vst [vmem:[%s210 + $0x44] sm:$0xf] %v3727
        %3760 = vst [vmem:[%s210 + $0x48] sm:$0xf] %v3728
        %3761 = vst [vmem:[%s210 + $0x4c] sm:$0xf] %v3729
        %3762 = vst [vmem:[%s210 + $0x50] sm:$0xf] %v3730
        %3763 = vst [vmem:[%s210 + $0x54] sm:$0xf] %v3731
        %3764 = vst [vmem:[%s210 + $0x58] sm:$0xf] %v3732
        %3765 = vst [vmem:[%s210 + $0x5c] sm:$0xf] %v3733
        %3766 = vst [vmem:[%s210 + $0x60] sm:$0xf] %v3734
        %3767 = vst [vmem:[%s210 + $0x64] sm:$0xf] %v3735
        %3768 = vst [vmem:[%s210 + $0x68] sm:$0xf] %v3736
        %3769 = vst [vmem:[%s210 + $0x6c] sm:$0xf] %v3737
        %3770 = vst [vmem:[%s210 + $0x70] sm:$0xf] %v3738
        %3771 = vst [vmem:[%s210 + $0x74] sm:$0xf] %v3739
        %3772 = vst [vmem:[%s210 + $0x78] sm:$0xf] %v3740
        %3773 = vst [vmem:[%s210 + $0x7c] sm:$0xf] %v3741
        %s3774 = sand.u32 %s126, 1
        %s3775 = scalar_lea.sflag [#allocation4], %s3774
        %s3776 = sand.u32 %s126, 1
        %s3777 = smul.addr %s3776, 128
        %s3778 = scalar_lea.vmem [#allocation3], %s3777
        // Predicated region
        $region37: #{tpu_custom_call.1} parent=31 // pred_check
          %p3779 = pneg %p136
        $region38: #{tpu_custom_call.1} parent=31 // pred_check_branch
          %3781 = sbr.rel (%p3779) target = $region40
        $region39: #{tpu_custom_call.1} parent=31 // pred_region
          %s3782 = smul.u32 32, %s23
          %3784 = vsyncadd %s3775, 0
          %s3785 = sadd.s32 %s24, %s3782
          %s3786 = smul.addr %s22, 32
          %s3787 = sadd.s32 %s3785, %s3786
          %s3788 = smul.addr %s3787, 4
          %s3789 = scalar_lea.hbm %s3, %s3788
          %s3790 = sshll.u32 %s3778, 4
          %s3791 = int_to_ptr.vmem [resolvable:$true] %s3790
          %s3792 = sshll.u32 %s3789, 4
          %s3793 = int_to_ptr.hbm [resolvable:$true] %s3792
          %3798 = dma.vmem_to_hbm [thread:$0]  %s3791, 2048, %s3793, %s3775, 64, 64, 4
        $region40: #{tpu_custom_call.1} parent=31 // pred_fallthru
          _
      $region32: #{tpu_custom_call.1} parent=5 // pred_fallthru
        _
      %p3799 = scmp.le.s32.totalorder 2, %s12
      // Predicated region
      $region41: #{tpu_custom_call.1} parent=5 // pred_check
        %p3800 = pneg %p3799
      $region42: #{tpu_custom_call.1} parent=5 // pred_check_branch
        %3802 = sbr.rel (%p3800) target = $region44
      $region43: #{tpu_custom_call.1} parent=5 // pred_region
        %s3803 = ssub.s32 %s12, 2
        // Predicated region
        $region45: #{tpu_custom_call.1} parent=43 // pred_check
          %p3804 = pneg %p142
        $region46: #{tpu_custom_call.1} parent=43 // pred_check_branch
          %3806 = sbr.rel (%p3804) target = $region48
        $region47: #{tpu_custom_call.1} parent=43 // pred_region
          %s3807 = sand.u32 %s127, 1
          %s3808 = scalar_lea.sflag [#allocation4], %s3807
          %s3809 = sand.u32 %s127, 1
          %s3810 = smul.addr %s3809, 128
          %s3811 = scalar_lea.vmem [#allocation3], %s3810
          %3813 = dma.done %s3808, 2048
        $region48: #{tpu_custom_call.1} parent=43 // pred_fallthru
          _
      $region44: #{tpu_custom_call.1} parent=5 // pred_fallthru
        _
    $region6: #{tpu_custom_call.1} parent=1 // loop_footer
      %s16 = sadd.s32 1, %s12
    $region7: #{tpu_custom_call.1} parent=1 // loop_footer_branch
      %11 = sbr.rel target = $region3
    $region8: #{tpu_custom_call.1} parent=1 // loop_exit
      _
    %3814 = vsyncpa [#allocation4], 1
    %s3815 = scalar_lea.sflag [#allocation4], 1
    %3816 = vsyncpa %s3815, 1

</llo_original>
